<compile_context>
chip_gen: v7x
topology: tpu7x:2x2x1
jax: 0.10.0
libtpu: 0.0.40
codegen_flags: <defaults>
</compile_context>

<pallas_src>
import functools

import jax
import jax.numpy as jnp
import numpy as np
from jax.experimental import pallas as pl
from jax.experimental.pallas import tpu as pltpu


def _round_up(v, m):
    return ((v + m - 1) // m) * m


def _point_embed_kernel(x_ref, basis_ref, ws_ref, wc_ref, wxb_ref, o_ref):
    x = x_ref[...].astype(jnp.float32)                # (tm, 3)
    x0 = x[:, 0:1]
    x1 = x[:, 1:2]
    x2 = x[:, 2:3]

    # Block-diagonal frequency projection on the VPU (each basis row is zero
    # outside its own block, so the broadcasted sum equals x @ basis exactly).
    proj = (x0 * basis_ref[0:1, :]
            + x1 * basis_ref[1:2, :]
            + x2 * basis_ref[2:3, :])                 # (tm, H/2)
    s = jnp.sin(proj)                                 # EUP
    c = jnp.cos(proj)

    # Linear(H+3 -> dim), fused without any in-kernel lane concatenation:
    # sin/cos halves through the MXU, xyz part + bias as VPU broadcasts.
    acc = jnp.dot(s, ws_ref[...], preferred_element_type=jnp.float32)
    acc = acc + jnp.dot(c, wc_ref[...], preferred_element_type=jnp.float32)
    acc = acc + x0 * wxb_ref[0:1, :]
    acc = acc + x1 * wxb_ref[1:2, :]
    acc = acc + x2 * wxb_ref[2:3, :]
    acc = acc + wxb_ref[3:4, :]                       # bias row

    o_ref[...] = acc.astype(o_ref.dtype)


@functools.partial(jax.jit, static_argnames=("tm",))
def point_embed_forward(x, basis, w, b, *, tm=1024):
    """x: (B, N, 3); basis: (3, H/2); w: (dim, H+3) torch Linear layout; b: (dim,)."""
    B, N, _ = x.shape
    half = basis.shape[1]                             # H/2
    dim = w.shape[0]

    # Split the Linear weight once in the wrapper (column order of the torch
    # concat is [sin | cos | xyz]); fold the bias into a 4th "xyz" row.
    wt = w.astype(jnp.float32).T                      # (H+3, dim)
    w_sin = wt[:half]                                 # (H/2, dim)
    w_cos = wt[half:2 * half]                         # (H/2, dim)
    w_xb = jnp.concatenate(
        [wt[2 * half:], b.reshape(1, dim).astype(jnp.float32)], axis=0)  # (4, dim)

    # Flatten points to rows; pick the row tile and pad rows to a multiple of it.
    M = B * N
    xf = x.reshape(M, 3)
    tm_eff = min(tm, _round_up(M, 8))                 # sublane-aligned, never > rows
    Mp = _round_up(M, tm_eff)
    if Mp != M:
        xf = jnp.pad(xf, ((0, Mp - M), (0, 0)))       # zero rows; sliced off below

    grid = (Mp // tm_eff,)
    out = pl.pallas_call(
        _point_embed_kernel,
        out_shape=jax.ShapeDtypeStruct((Mp, dim), x.dtype),
        grid_spec=pltpu.PrefetchScalarGridSpec(
            num_scalar_prefetch=0,
            grid=grid,
            in_specs=[
                pl.BlockSpec((tm_eff, 3), lambda i: (i, 0)),     # points tile
                pl.BlockSpec((3, half), lambda i: (0, 0)),       # basis (resident)
                pl.BlockSpec((half, dim), lambda i: (0, 0)),     # W_sin (resident)
                pl.BlockSpec((half, dim), lambda i: (0, 0)),     # W_cos (resident)
                pl.BlockSpec((4, dim), lambda i: (0, 0)),        # xyz rows + bias
            ],
            out_specs=pl.BlockSpec((tm_eff, dim), lambda i: (i, 0)),
        ),
        compiler_params=pltpu.CompilerParams(
            dimension_semantics=("parallel",)),
    )(xf, basis.astype(jnp.float32), w_sin, w_cos, w_xb)

    return out[:M].reshape(B, N, dim)


def make_params(hidden_dim=48, dim=128, seed=0):
    assert hidden_dim % 6 == 0
    k = hidden_dim // 6
    # basis buffer exactly as in the torch __init__
    e = (2.0 ** np.arange(k)).astype(np.float32) * np.pi       # (k,)
    z = np.zeros(k, dtype=np.float32)
    basis = np.stack([
        np.concatenate([e, z, z]),
        np.concatenate([z, e, z]),
        np.concatenate([z, z, e]),
    ])                                                          # (3, H/2)

    # deterministic Linear(H+3, dim) params (synthetic; no checkpoint load)
    key = jax.random.PRNGKey(seed)
    kw, kb = jax.random.split(key)
    fan_in = hidden_dim + 3
    bound = 1.0 / np.sqrt(fan_in)
    w = jax.random.uniform(kw, (dim, fan_in), jnp.float32, -bound, bound)
    b = jax.random.uniform(kb, (dim,), jnp.float32, -bound, bound)
    return jnp.asarray(basis), w, b


def reference_forward(x, basis, w, b):
    proj = jnp.einsum("bnd,de->bne", x, basis)
    emb = jnp.concatenate([jnp.sin(proj), jnp.cos(proj)], axis=2)
    feat = jnp.concatenate([emb, x], axis=2)
    return feat @ w.T + b


if __name__ == "__main__":
    hidden_dim, dim = 48, 128
    B, N = 2, 64

    basis, w, b = make_params(hidden_dim=hidden_dim, dim=dim, seed=0)

    key = jax.random.PRNGKey(0)
    x = jax.random.normal(key, (B, N, 3), jnp.float32)

    out = point_embed_forward(x, basis, w, b, tm=1024)
    out = jax.block_until_ready(out)

    ref = reference_forward(x, basis, w, b)
    np.testing.assert_allclose(np.asarray(out), np.asarray(ref), rtol=1e-5, atol=1e-5)

    print("KERNEL_OK")
</pallas_src>

<mosaic_0001>
module attributes {stable_mosaic.version = 11 : i64} {
  func.func @_point_embed_kernel(%arg0: i32, %arg1: memref<128x3xf32, #tpu.memory_space<vmem>>, %arg2: memref<3x24xf32, #tpu.memory_space<vmem>>, %arg3: memref<24x128xf32, #tpu.memory_space<vmem>>, %arg4: memref<24x128xf32, #tpu.memory_space<vmem>>, %arg5: memref<4x128xf32, #tpu.memory_space<vmem>>, %arg6: memref<128x128xf32, #tpu.memory_space<vmem>>) attributes {dimension_semantics = [#tpu.dimension_semantics<parallel>], iteration_bounds = array<i64: 1>, scalar_prefetch = 0 : i64, scratch_operands = 0 : i64, tpu.core_type = #tpu.core_type<tc>, window_params = [{transform_indices = @transform_0, window_bounds = array<i64: 128, 3>}, {pipeline_mode = #tpu.pipeline_mode<synchronous>, transform_indices = @transform_1, window_bounds = array<i64: 3, 24>}, {pipeline_mode = #tpu.pipeline_mode<synchronous>, transform_indices = @transform_2, window_bounds = array<i64: 24, 128>}, {pipeline_mode = #tpu.pipeline_mode<synchronous>, transform_indices = @transform_3, window_bounds = array<i64: 24, 128>}, {pipeline_mode = #tpu.pipeline_mode<synchronous>, transform_indices = @transform_4, window_bounds = array<i64: 4, 128>}, {transform_indices = @transform_5, window_bounds = array<i64: 128, 128>}]} {
    %c0 = arith.constant 0 : index
    %c0_0 = arith.constant 0 : index
    %0 = vector.load %arg1[%c0, %c0_0] : memref<128x3xf32, #tpu.memory_space<vmem>>, vector<128x3xf32>
    %1 = vector.extract_strided_slice %0 {offsets = [0, 0], sizes = [128, 1], strides = [1, 1]} : vector<128x3xf32> to vector<128x1xf32>
    %2 = vector.extract_strided_slice %0 {offsets = [0, 1], sizes = [128, 1], strides = [1, 1]} : vector<128x3xf32> to vector<128x1xf32>
    %3 = vector.extract_strided_slice %0 {offsets = [0, 2], sizes = [128, 1], strides = [1, 1]} : vector<128x3xf32> to vector<128x1xf32>
    %c0_1 = arith.constant 0 : index
    %c0_2 = arith.constant 0 : index
    %4 = vector.load %arg2[%c0_1, %c0_2] : memref<3x24xf32, #tpu.memory_space<vmem>>, vector<1x24xf32>
    %5 = vector.broadcast %1 : vector<128x1xf32> to vector<128x24xf32>
    %6 = vector.broadcast %4 : vector<1x24xf32> to vector<128x24xf32>
    %7 = arith.mulf %5, %6 : vector<128x24xf32>
    %c1 = arith.constant 1 : index
    %c0_3 = arith.constant 0 : index
    %8 = vector.load %arg2[%c1, %c0_3] : memref<3x24xf32, #tpu.memory_space<vmem>>, vector<1x24xf32>
    %9 = vector.broadcast %2 : vector<128x1xf32> to vector<128x24xf32>
    %10 = vector.broadcast %8 : vector<1x24xf32> to vector<128x24xf32>
    %11 = arith.mulf %9, %10 : vector<128x24xf32>
    %12 = arith.addf %7, %11 : vector<128x24xf32>
    %c2 = arith.constant 2 : index
    %c0_4 = arith.constant 0 : index
    %13 = vector.load %arg2[%c2, %c0_4] : memref<3x24xf32, #tpu.memory_space<vmem>>, vector<1x24xf32>
    %14 = vector.broadcast %3 : vector<128x1xf32> to vector<128x24xf32>
    %15 = vector.broadcast %13 : vector<1x24xf32> to vector<128x24xf32>
    %16 = arith.mulf %14, %15 : vector<128x24xf32>
    %17 = arith.addf %12, %16 : vector<128x24xf32>
    %18 = math.sin %17 : vector<128x24xf32>
    %19 = math.cos %17 : vector<128x24xf32>
    %c0_5 = arith.constant 0 : index
    %c0_6 = arith.constant 0 : index
    %20 = vector.load %arg3[%c0_5, %c0_6] : memref<24x128xf32, #tpu.memory_space<vmem>>, vector<24x128xf32>
    %cst = arith.constant dense<0.000000e+00> : vector<128x128xf32>
    %21 = tpu.matmul %18, %20, %cst {dimension_numbers = #tpu.dot_dimension_numbers<[1], [0], [0], [1], [0, 0, 1, 1], [], []>} : vector<128x24xf32>, vector<24x128xf32>, vector<128x128xf32> -> vector<128x128xf32>
    %c0_7 = arith.constant 0 : index
    %c0_8 = arith.constant 0 : index
    %22 = vector.load %arg4[%c0_7, %c0_8] : memref<24x128xf32, #tpu.memory_space<vmem>>, vector<24x128xf32>
    %cst_9 = arith.constant dense<0.000000e+00> : vector<128x128xf32>
    %23 = tpu.matmul %19, %22, %cst_9 {dimension_numbers = #tpu.dot_dimension_numbers<[1], [0], [0], [1], [0, 0, 1, 1], [], []>} : vector<128x24xf32>, vector<24x128xf32>, vector<128x128xf32> -> vector<128x128xf32>
    %24 = arith.addf %21, %23 : vector<128x128xf32>
    %c0_10 = arith.constant 0 : index
    %c0_11 = arith.constant 0 : index
    %25 = vector.load %arg5[%c0_10, %c0_11] : memref<4x128xf32, #tpu.memory_space<vmem>>, vector<1x128xf32>
    %26 = vector.broadcast %1 : vector<128x1xf32> to vector<128x128xf32>
    %27 = vector.broadcast %25 : vector<1x128xf32> to vector<128x128xf32>
    %28 = arith.mulf %26, %27 : vector<128x128xf32>
    %29 = arith.addf %24, %28 : vector<128x128xf32>
    %c1_12 = arith.constant 1 : index
    %c0_13 = arith.constant 0 : index
    %30 = vector.load %arg5[%c1_12, %c0_13] : memref<4x128xf32, #tpu.memory_space<vmem>>, vector<1x128xf32>
    %31 = vector.broadcast %2 : vector<128x1xf32> to vector<128x128xf32>
    %32 = vector.broadcast %30 : vector<1x128xf32> to vector<128x128xf32>
    %33 = arith.mulf %31, %32 : vector<128x128xf32>
    %34 = arith.addf %29, %33 : vector<128x128xf32>
    %c2_14 = arith.constant 2 : index
    %c0_15 = arith.constant 0 : index
    %35 = vector.load %arg5[%c2_14, %c0_15] : memref<4x128xf32, #tpu.memory_space<vmem>>, vector<1x128xf32>
    %36 = vector.broadcast %3 : vector<128x1xf32> to vector<128x128xf32>
    %37 = vector.broadcast %35 : vector<1x128xf32> to vector<128x128xf32>
    %38 = arith.mulf %36, %37 : vector<128x128xf32>
    %39 = arith.addf %34, %38 : vector<128x128xf32>
    %c3 = arith.constant 3 : index
    %c0_16 = arith.constant 0 : index
    %40 = vector.load %arg5[%c3, %c0_16] : memref<4x128xf32, #tpu.memory_space<vmem>>, vector<1x128xf32>
    %41 = vector.broadcast %40 : vector<1x128xf32> to vector<128x128xf32>
    %42 = arith.addf %39, %41 : vector<128x128xf32>
    %c0_17 = arith.constant 0 : index
    %c0_18 = arith.constant 0 : index
    %43 = vector.load %arg6[%c0_17, %c0_18] : memref<128x128xf32, #tpu.memory_space<vmem>>, vector<128x128xf32>
    tpu.vector_store %arg6[%c0_17, %c0_18], %42 {strides = array<i32>} : memref<128x128xf32, #tpu.memory_space<vmem>>, vector<128x128xf32>,
    return
  }
  func.func @transform_0(%arg0: i32) -> (i32, i32) {
    %c0_i32 = arith.constant 0 : i32
    %c0_i32_0 = arith.constant 0 : i32
    return %arg0, %c0_i32 : i32, i32
  }
  func.func @transform_1(%arg0: i32) -> (i32, i32) {
    %c0_i32 = arith.constant 0 : i32
    %c0_i32_0 = arith.constant 0 : i32
    %c0_i32_1 = arith.constant 0 : i32
    return %c0_i32, %c0_i32_0 : i32, i32
  }
  func.func @transform_2(%arg0: i32) -> (i32, i32) {
    %c0_i32 = arith.constant 0 : i32
    %c0_i32_0 = arith.constant 0 : i32
    %c0_i32_1 = arith.constant 0 : i32
    return %c0_i32, %c0_i32_0 : i32, i32
  }
  func.func @transform_3(%arg0: i32) -> (i32, i32) {
    %c0_i32 = arith.constant 0 : i32
    %c0_i32_0 = arith.constant 0 : i32
    %c0_i32_1 = arith.constant 0 : i32
    return %c0_i32, %c0_i32_0 : i32, i32
  }
  func.func @transform_4(%arg0: i32) -> (i32, i32) {
    %c0_i32 = arith.constant 0 : i32
    %c0_i32_0 = arith.constant 0 : i32
    %c0_i32_1 = arith.constant 0 : i32
    return %c0_i32, %c0_i32_0 : i32, i32
  }
  func.func @transform_5(%arg0: i32) -> (i32, i32) {
    %c0_i32 = arith.constant 0 : i32
    %c0_i32_0 = arith.constant 0 : i32
    return %arg0, %c0_i32 : i32, i32
  }
}

</mosaic_0001>

<llo_original>
// kernel: point_embed_forward.1
$region0: #{point_embed_forward.1}
  #allocation0 [shape = 'u32[]', space=smem, size = 0x4, offset = 0x4, fixed_abs, tag = 'smem constant byte address 0x4 - core index']
  #allocation1 [shape = 'u32[144,128]{1,0:T(1,128)}', space=vmem, size = 0x12000, scoped, tag = 'internal scratch']
  %s0 = inlined_call_operand.vmem [shape: f32[128,3], index: 0, kind: input, shape index: {}]
  %s1 = inlined_call_operand.vmem [shape: f32[3,24], index: 1, kind: input, shape index: {}]
  %s2 = inlined_call_operand.vmem [shape: f32[24,128], index: 2, kind: input, shape index: {}]
  %s3 = inlined_call_operand.vmem [shape: f32[24,128], index: 3, kind: input, shape index: {}]
  %s4 = inlined_call_operand.vmem [shape: f32[4,128], index: 4, kind: input, shape index: {}]
  %s5 = inlined_call_operand.hbm [shape: f32[128,128], index: 5, kind: output, shape index: {}]
  %s6 = sld [smem:[#allocation0]]
  $region30: #{point_embed_forward.1} parent=0
    _
  %s8 = ssub.s32 1, %s6
  %s9 = scalar_select 0, %s8, %s6
  $region1: #{point_embed_forward.1} parent=0
    #allocation2 [shape = 'u8[65536]{0}', space=vmem, size = 0x10000, scoped, tag = 'output window, operand 0, single buffered']
    #allocation3 [shape = 's32[1]{0}', space=sflag, size = 0x4, scoped, tag = 'scoped memory for point_embed_forward.1']
    %10 = vsyncpa [#allocation3], 0
    // Predicated region
    $region2: #{point_embed_forward.1} parent=1 // pred_check
      _
    $region3: #{point_embed_forward.1} parent=1 // pred_check_branch
      %12 = sbr.rel (0) target = $region5
    $region4: #{point_embed_forward.1} parent=1 // pred_region
      _
    $region5: #{point_embed_forward.1} parent=1 // pred_fallthru
      _
    // Predicated region
    $region6: #{point_embed_forward.1} parent=1 // pred_check
      _
    $region7: #{point_embed_forward.1} parent=1 // pred_check_branch
      %14 = sbr.rel (0) target = $region9
    $region8: #{point_embed_forward.1} parent=1 // pred_region
      _
    $region9: #{point_embed_forward.1} parent=1 // pred_fallthru
      _
    // Predicated region
    $region10: #{point_embed_forward.1} parent=1 // pred_check
      _
    $region11: #{point_embed_forward.1} parent=1 // pred_check_branch
      %16 = sbr.rel (0) target = $region13
    $region12: #{point_embed_forward.1} parent=1 // pred_region
      _
    $region13: #{point_embed_forward.1} parent=1 // pred_fallthru
      _
    // Predicated region
    $region14: #{point_embed_forward.1} parent=1 // pred_check
      _
    $region15: #{point_embed_forward.1} parent=1 // pred_check_branch
      %18 = sbr.rel (0) target = $region17
    $region16: #{point_embed_forward.1} parent=1 // pred_region
      _
    $region17: #{point_embed_forward.1} parent=1 // pred_fallthru
      _
    // Predicated region
    $region18: #{point_embed_forward.1} parent=1 // pred_check
      _
    $region19: #{point_embed_forward.1} parent=1 // pred_check_branch
      %20 = sbr.rel (0) target = $region21
    $region20: #{point_embed_forward.1} parent=1 // pred_region
      _
    $region21: #{point_embed_forward.1} parent=1 // pred_fallthru
      _
    %v21 = vld [vmem:[%s0] sm:$0xff]
    %v22 = vld [vmem:[%s0 + $0x8] sm:$0xff]
    %v23 = vld [vmem:[%s0 + $0x10] sm:$0xff]
    %v24 = vld [vmem:[%s0 + $0x18] sm:$0xff]
    %v25 = vld [vmem:[%s0 + $0x20] sm:$0xff]
    %v26 = vld [vmem:[%s0 + $0x28] sm:$0xff]
    %v27 = vld [vmem:[%s0 + $0x30] sm:$0xff]
    %v28 = vld [vmem:[%s0 + $0x38] sm:$0xff]
    %v29 = vld [vmem:[%s0 + $0x40] sm:$0xff]
    %v30 = vld [vmem:[%s0 + $0x48] sm:$0xff]
    %v31 = vld [vmem:[%s0 + $0x50] sm:$0xff]
    %v32 = vld [vmem:[%s0 + $0x58] sm:$0xff]
    %v33 = vld [vmem:[%s0 + $0x60] sm:$0xff]
    %v34 = vld [vmem:[%s0 + $0x68] sm:$0xff]
    %v35 = vld [vmem:[%s0 + $0x70] sm:$0xff]
    %v36 = vld [vmem:[%s0 + $0x78] sm:$0xff]
    %v37 = vld [vmem:[%s1] sm:$0x1]
    %39 = vset.pattern.permute.xlu0 0
    %40 = vperm.xlu0 %39, %v21
    %v41 = vpop.permute.xlu0 %40
    %44 = vset.pattern.permute.xlu0 0
    %45 = vperm.xlu0 %44, %v22
    %v46 = vpop.permute.xlu0 %45
    %49 = vset.pattern.permute.xlu0 0
    %50 = vperm.xlu0 %49, %v23
    %v51 = vpop.permute.xlu0 %50
    %54 = vset.pattern.permute.xlu0 0
    %55 = vperm.xlu0 %54, %v24
    %v56 = vpop.permute.xlu0 %55
    %59 = vset.pattern.permute.xlu0 0
    %60 = vperm.xlu0 %59, %v25
    %v61 = vpop.permute.xlu0 %60
    %64 = vset.pattern.permute.xlu0 0
    %65 = vperm.xlu0 %64, %v26
    %v66 = vpop.permute.xlu0 %65
    %69 = vset.pattern.permute.xlu0 0
    %70 = vperm.xlu0 %69, %v27
    %v71 = vpop.permute.xlu0 %70
    %74 = vset.pattern.permute.xlu0 0
    %75 = vperm.xlu0 %74, %v28
    %v76 = vpop.permute.xlu0 %75
    %79 = vset.pattern.permute.xlu0 0
    %80 = vperm.xlu0 %79, %v29
    %v81 = vpop.permute.xlu0 %80
    %84 = vset.pattern.permute.xlu0 0
    %85 = vperm.xlu0 %84, %v30
    %v86 = vpop.permute.xlu0 %85
    %89 = vset.pattern.permute.xlu0 0
    %90 = vperm.xlu0 %89, %v31
    %v91 = vpop.permute.xlu0 %90
    %94 = vset.pattern.permute.xlu0 0
    %95 = vperm.xlu0 %94, %v32
    %v96 = vpop.permute.xlu0 %95
    %99 = vset.pattern.permute.xlu0 0
    %100 = vperm.xlu0 %99, %v33
    %v101 = vpop.permute.xlu0 %100
    %104 = vset.pattern.permute.xlu0 0
    %105 = vperm.xlu0 %104, %v34
    %v106 = vpop.permute.xlu0 %105
    %109 = vset.pattern.permute.xlu0 0
    %110 = vperm.xlu0 %109, %v35
    %v111 = vpop.permute.xlu0 %110
    %114 = vset.pattern.permute.xlu0 0
    %115 = vperm.xlu0 %114, %v36
    %v116 = vpop.permute.xlu0 %115
    %v118 = vlaneseq
    %v119 = vshrl.u32 %v118, 7
    %v120 = vsub.s32 0, %v119
    %v121 = vrot.slane %v37, %v120
    %v122 = vmul.f32 %v41, %v121
    %v123 = vmul.f32 %v46, %v121
    %v124 = vmul.f32 %v51, %v121
    %v125 = vmul.f32 %v56, %v121
    %v126 = vmul.f32 %v61, %v121
    %v127 = vmul.f32 %v66, %v121
    %v128 = vmul.f32 %v71, %v121
    %v129 = vmul.f32 %v76, %v121
    %v130 = vmul.f32 %v81, %v121
    %v131 = vmul.f32 %v86, %v121
    %v132 = vmul.f32 %v91, %v121
    %v133 = vmul.f32 %v96, %v121
    %v134 = vmul.f32 %v101, %v121
    %v135 = vmul.f32 %v106, %v121
    %v136 = vmul.f32 %v111, %v121
    %v137 = vmul.f32 %v116, %v121
    %v138 = vld [vmem:[%s1 + $0x1] sm:$0x1]
    %139 = vset.pattern.permute.xlu0 1
    %140 = vperm.xlu0 %139, %v21
    %v141 = vpop.permute.xlu0 %140
    %143 = vset.pattern.permute.xlu0 1
    %144 = vperm.xlu0 %143, %v22
    %v145 = vpop.permute.xlu0 %144
    %147 = vset.pattern.permute.xlu0 1
    %148 = vperm.xlu0 %147, %v23
    %v149 = vpop.permute.xlu0 %148
    %151 = vset.pattern.permute.xlu0 1
    %152 = vperm.xlu0 %151, %v24
    %v153 = vpop.permute.xlu0 %152
    %155 = vset.pattern.permute.xlu0 1
    %156 = vperm.xlu0 %155, %v25
    %v157 = vpop.permute.xlu0 %156
    %159 = vset.pattern.permute.xlu0 1
    %160 = vperm.xlu0 %159, %v26
    %v161 = vpop.permute.xlu0 %160
    %163 = vset.pattern.permute.xlu0 1
    %164 = vperm.xlu0 %163, %v27
    %v165 = vpop.permute.xlu0 %164
    %167 = vset.pattern.permute.xlu0 1
    %168 = vperm.xlu0 %167, %v28
    %v169 = vpop.permute.xlu0 %168
    %171 = vset.pattern.permute.xlu0 1
    %172 = vperm.xlu0 %171, %v29
    %v173 = vpop.permute.xlu0 %172
    %175 = vset.pattern.permute.xlu0 1
    %176 = vperm.xlu0 %175, %v30
    %v177 = vpop.permute.xlu0 %176
    %179 = vset.pattern.permute.xlu0 1
    %180 = vperm.xlu0 %179, %v31
    %v181 = vpop.permute.xlu0 %180
    %183 = vset.pattern.permute.xlu0 1
    %184 = vperm.xlu0 %183, %v32
    %v185 = vpop.permute.xlu0 %184
    %187 = vset.pattern.permute.xlu0 1
    %188 = vperm.xlu0 %187, %v33
    %v189 = vpop.permute.xlu0 %188
    %191 = vset.pattern.permute.xlu0 1
    %192 = vperm.xlu0 %191, %v34
    %v193 = vpop.permute.xlu0 %192
    %195 = vset.pattern.permute.xlu0 1
    %196 = vperm.xlu0 %195, %v35
    %v197 = vpop.permute.xlu0 %196
    %199 = vset.pattern.permute.xlu0 1
    %200 = vperm.xlu0 %199, %v36
    %v201 = vpop.permute.xlu0 %200
    %v203 = vlaneseq
    %v204 = vshrl.u32 %v203, 7
    %v205 = vsub.s32 0, %v204
    %v206 = vrot.slane %v138, %v205
    %v207 = vmul.f32 %v141, %v206
    %v208 = vmul.f32 %v145, %v206
    %v209 = vmul.f32 %v149, %v206
    %v210 = vmul.f32 %v153, %v206
    %v211 = vmul.f32 %v157, %v206
    %v212 = vmul.f32 %v161, %v206
    %v213 = vmul.f32 %v165, %v206
    %v214 = vmul.f32 %v169, %v206
    %v215 = vmul.f32 %v173, %v206
    %v216 = vmul.f32 %v177, %v206
    %v217 = vmul.f32 %v181, %v206
    %v218 = vmul.f32 %v185, %v206
    %v219 = vmul.f32 %v189, %v206
    %v220 = vmul.f32 %v193, %v206
    %v221 = vmul.f32 %v197, %v206
    %v222 = vmul.f32 %v201, %v206
    %v223 = vadd.f32 %v122, %v207
    %v224 = vadd.f32 %v123, %v208
    %v225 = vadd.f32 %v124, %v209
    %v226 = vadd.f32 %v125, %v210
    %v227 = vadd.f32 %v126, %v211
    %v228 = vadd.f32 %v127, %v212
    %v229 = vadd.f32 %v128, %v213
    %v230 = vadd.f32 %v129, %v214
    %v231 = vadd.f32 %v130, %v215
    %v232 = vadd.f32 %v131, %v216
    %v233 = vadd.f32 %v132, %v217
    %v234 = vadd.f32 %v133, %v218
    %v235 = vadd.f32 %v134, %v219
    %v236 = vadd.f32 %v135, %v220
    %v237 = vadd.f32 %v136, %v221
    %v238 = vadd.f32 %v137, %v222
    %v239 = vld [vmem:[%s1 + $0x2] sm:$0x1]
    %240 = vset.pattern.permute.xlu0 2
    %241 = vperm.xlu0 %240, %v21
    %v242 = vpop.permute.xlu0 %241
    %244 = vset.pattern.permute.xlu0 2
    %245 = vperm.xlu0 %244, %v22
    %v246 = vpop.permute.xlu0 %245
    %248 = vset.pattern.permute.xlu0 2
    %249 = vperm.xlu0 %248, %v23
    %v250 = vpop.permute.xlu0 %249
    %252 = vset.pattern.permute.xlu0 2
    %253 = vperm.xlu0 %252, %v24
    %v254 = vpop.permute.xlu0 %253
    %256 = vset.pattern.permute.xlu0 2
    %257 = vperm.xlu0 %256, %v25
    %v258 = vpop.permute.xlu0 %257
    %260 = vset.pattern.permute.xlu0 2
    %261 = vperm.xlu0 %260, %v26
    %v262 = vpop.permute.xlu0 %261
    %264 = vset.pattern.permute.xlu0 2
    %265 = vperm.xlu0 %264, %v27
    %v266 = vpop.permute.xlu0 %265
    %268 = vset.pattern.permute.xlu0 2
    %269 = vperm.xlu0 %268, %v28
    %v270 = vpop.permute.xlu0 %269
    %272 = vset.pattern.permute.xlu0 2
    %273 = vperm.xlu0 %272, %v29
    %v274 = vpop.permute.xlu0 %273
    %276 = vset.pattern.permute.xlu0 2
    %277 = vperm.xlu0 %276, %v30
    %v278 = vpop.permute.xlu0 %277
    %280 = vset.pattern.permute.xlu0 2
    %281 = vperm.xlu0 %280, %v31
    %v282 = vpop.permute.xlu0 %281
    %284 = vset.pattern.permute.xlu0 2
    %285 = vperm.xlu0 %284, %v32
    %v286 = vpop.permute.xlu0 %285
    %288 = vset.pattern.permute.xlu0 2
    %289 = vperm.xlu0 %288, %v33
    %v290 = vpop.permute.xlu0 %289
    %292 = vset.pattern.permute.xlu0 2
    %293 = vperm.xlu0 %292, %v34
    %v294 = vpop.permute.xlu0 %293
    %296 = vset.pattern.permute.xlu0 2
    %297 = vperm.xlu0 %296, %v35
    %v298 = vpop.permute.xlu0 %297
    %300 = vset.pattern.permute.xlu0 2
    %301 = vperm.xlu0 %300, %v36
    %v302 = vpop.permute.xlu0 %301
    %v304 = vlaneseq
    %v305 = vshrl.u32 %v304, 7
    %v306 = vsub.s32 0, %v305
    %v307 = vrot.slane %v239, %v306
    %v308 = vmul.f32 %v242, %v307
    %v309 = vmul.f32 %v246, %v307
    %v310 = vmul.f32 %v250, %v307
    %v311 = vmul.f32 %v254, %v307
    %v312 = vmul.f32 %v258, %v307
    %v313 = vmul.f32 %v262, %v307
    %v314 = vmul.f32 %v266, %v307
    %v315 = vmul.f32 %v270, %v307
    %v316 = vmul.f32 %v274, %v307
    %v317 = vmul.f32 %v278, %v307
    %v318 = vmul.f32 %v282, %v307
    %v319 = vmul.f32 %v286, %v307
    %v320 = vmul.f32 %v290, %v307
    %v321 = vmul.f32 %v294, %v307
    %v322 = vmul.f32 %v298, %v307
    %v323 = vmul.f32 %v302, %v307
    %v324 = vadd.f32 %v223, %v308
    %v325 = vadd.f32 %v224, %v309
    %v326 = vadd.f32 %v225, %v310
    %v327 = vadd.f32 %v226, %v311
    %v328 = vadd.f32 %v227, %v312
    %v329 = vadd.f32 %v228, %v313
    %v330 = vadd.f32 %v229, %v314
    %v331 = vadd.f32 %v230, %v315
    %v332 = vadd.f32 %v231, %v316
    %v333 = vadd.f32 %v232, %v317
    %v334 = vadd.f32 %v233, %v318
    %v335 = vadd.f32 %v234, %v319
    %v336 = vadd.f32 %v235, %v320
    %v337 = vadd.f32 %v236, %v321
    %v338 = vadd.f32 %v237, %v322
    %v339 = vadd.f32 %v238, %v323
    %v340 = vand.u32 2147483647, %v324
    %vm341 = vcmp.le.f32.partialorder %v340, 0.7853982
    %vm342 = vcmp.lt.s32.totalorder %v324, 0
    %v343 = vand.u32 %v324, 2139095040
    %v344 = vshrl.u32 %v343, 23
    %v345 = vsub.s32 %v344, 127
    %v346 = vand.u32 2147483647, %v324
    %v347 = vand.u32 %v346, 8388607
    %v348 = vor.u32 %v347, 8388608
    %v349 = vsub.s32 0, %v348
    %v350 = vadd.s32 %v345, 1
    %vm351 = vcmp.gt.s32.totalorder %v350, 0
    %v352 = vsel %vm351, %v350, 0
    %v353 = vshrl.u32 %v352, 5
    %v354 = vand.u32 %v352, 31
    %v355 = vsub.s32 32, %v354
    %v356 = vshrl.u32 683565275, %v355
    %v357 = vshll.u32 683565275, %v354
    %v358 = vshrl.u32 2475754826, %v355
    %v359 = vor.u32 %v357, %v358
    %v360 = vshll.u32 2475754826, %v354
    %v361 = vshrl.u32 2131351028, %v355
    %v362 = vor.u32 %v360, %v361
    %v363 = vshll.u32 2131351028, %v354
    %v364 = vshrl.u32 2102212464, %v355
    %v365 = vor.u32 %v363, %v364
    %v366 = vshll.u32 2102212464, %v354
    %v367 = vshrl.u32 920167782, %v355
    %v368 = vor.u32 %v366, %v367
    %v369 = vshll.u32 920167782, %v354
    %v370 = vshrl.u32 1326507024, %v355
    %v371 = vor.u32 %v369, %v370
    %vm372 = vcmp.lt.s32.totalorder %v353, 1
    %vm373 = vcmp.lt.s32.totalorder %v353, 2
    %vm374 = vcmp.lt.s32.totalorder %v353, 3
    %vm375 = vcmp.lt.s32.totalorder %v353, 4
    %v376 = vsel %vm372, %v356, %v359
    %v377 = vsel %vm375, %v365, 2102212464
    %v378 = vsel %vm374, %v362, %v377
    %v379 = vsel %vm373, %v376, %v378
    %v380 = vsel %vm372, %v359, %v362
    %v381 = vsel %vm375, %v368, 920167782
    %v382 = vsel %vm374, %v365, %v381
    %v383 = vsel %vm373, %v380, %v382
    %v384 = vsel %vm372, %v362, %v365
    %v385 = vsel %vm375, %v371, 1326507024
    %v386 = vsel %vm374, %v368, %v385
    %v387 = vsel %vm373, %v384, %v386
    %v388 = vshll.u32 %v348, 8
    %v389 = vmul.u32.u64.compose %v388, %v387
    %v390 = vextract.low.u32 %v389
    %v391 = vextract.high.u32 %v389
    %v392 = vmul.u32.u64.compose %v388, %v383
    %v393 = vextract.low.u32 %v392
    %v394 = vextract.high.u32 %v392
    %v395 = vmul.u32 %v388, %v379
    %v396 = vadd.s32 %v391, %v393
    %vm397 = vc.u32 %v391, %v393
    %v398 = vadd.s32 %v394, 1
    %v399 = vsel %vm397, %v398, %v394
    %v400 = vadd.s32 %v395, %v399
    %v401 = vadd.s32 %v400, 536870912
    %v402 = vshrl.u32 %v401, 30
    %v403 = vshll.u32 %v402, 30
    %v404 = vsub.s32 %v400, %v403
    %vm405 = vcmp.lt.s32.totalorder %v404, 0
    %v406 = vsub.s32 0, %v404
    %v407 = vsel %vm405, %v406, %v404
    %v408 = vclz %v407
    %v409 = vsub.s32 %v408, 2
    %vm410 = vcmp.gt.s32.totalorder 0, %v409
    %v411 = vsel %vm410, 0, %v409
    %v412 = vsub.s32 32, %v411
    %v413 = vshll.u32 %v404, %v411
    %v414 = vshrl.u32 %v396, %v412
    %v415 = vor.u32 %v413, %v414
    %v416 = vsub.s32 4294967266, %v411
    %v417 = vadd.s32 %v416, 127
    %v418 = vshll.u32 %v417, 23
    %v419 = vor.u32 4788187, %v418
    %v420 = vand.u32 2147483647, %v419
    %v422 = vcvt.s32.f32 %v415
    %v423 = vmul.f32 %v422, %v420
    %v424 = vxor.u32 %v423, 2147483648
    %v425 = vsel %vm342, %v424, %v423
    %v426 = vsub.s32 4, %v402
    %v427 = vsel %vm342, %v426, %v402
    %v428 = vsel %vm341, %v324, %v425
    %v429 = vsel %vm341, 0, %v427
    %v430 = vcosq.f32.pop %v428
    %v431 = vsinq.f32.pop %v428
    %vm432 = vweird.f32 %v324
    %v433 = vadd.s32 %v429, 3
    %v434 = vand.u32 %v433, 3
    %vm435 = vcmp.lt.s32.totalorder %v434, 2
    %vm436 = vcmp.eq.s32.totalorder %v434, 0
    %v437 = vxor.u32 %v431, 2147483648
    %v438 = vsel %vm436, %v430, %v437
    %vm439 = vcmp.eq.s32.totalorder %v434, 2
    %v440 = vxor.u32 %v430, 2147483648
    %v441 = vsel %vm439, %v440, %v431
    %v442 = vsel %vm435, %v438, %v441
    %v443 = vsel %vm432, nan, %v442
    %v444 = vand.u32 2147483647, %v325
    %vm445 = vcmp.le.f32.partialorder %v444, 0.7853982
    %vm446 = vcmp.lt.s32.totalorder %v325, 0
    %v447 = vand.u32 %v325, 2139095040
    %v448 = vshrl.u32 %v447, 23
    %v449 = vsub.s32 %v448, 127
    %v450 = vand.u32 2147483647, %v325
    %v451 = vand.u32 %v450, 8388607
    %v452 = vor.u32 %v451, 8388608
    %v453 = vsub.s32 0, %v452
    %v454 = vadd.s32 %v449, 1
    %vm455 = vcmp.gt.s32.totalorder %v454, 0
    %v456 = vsel %vm455, %v454, 0
    %v457 = vshrl.u32 %v456, 5
    %v458 = vand.u32 %v456, 31
    %v459 = vsub.s32 32, %v458
    %v460 = vshrl.u32 683565275, %v459
    %v461 = vshll.u32 683565275, %v458
    %v462 = vshrl.u32 2475754826, %v459
    %v463 = vor.u32 %v461, %v462
    %v464 = vshll.u32 2475754826, %v458
    %v465 = vshrl.u32 2131351028, %v459
    %v466 = vor.u32 %v464, %v465
    %v467 = vshll.u32 2131351028, %v458
    %v468 = vshrl.u32 2102212464, %v459
    %v469 = vor.u32 %v467, %v468
    %v470 = vshll.u32 2102212464, %v458
    %v471 = vshrl.u32 920167782, %v459
    %v472 = vor.u32 %v470, %v471
    %v473 = vshll.u32 920167782, %v458
    %v474 = vshrl.u32 1326507024, %v459
    %v475 = vor.u32 %v473, %v474
    %vm476 = vcmp.lt.s32.totalorder %v457, 1
    %vm477 = vcmp.lt.s32.totalorder %v457, 2
    %vm478 = vcmp.lt.s32.totalorder %v457, 3
    %vm479 = vcmp.lt.s32.totalorder %v457, 4
    %v480 = vsel %vm476, %v460, %v463
    %v481 = vsel %vm479, %v469, 2102212464
    %v482 = vsel %vm478, %v466, %v481
    %v483 = vsel %vm477, %v480, %v482
    %v484 = vsel %vm476, %v463, %v466
    %v485 = vsel %vm479, %v472, 920167782
    %v486 = vsel %vm478, %v469, %v485
    %v487 = vsel %vm477, %v484, %v486
    %v488 = vsel %vm476, %v466, %v469
    %v489 = vsel %vm479, %v475, 1326507024
    %v490 = vsel %vm478, %v472, %v489
    %v491 = vsel %vm477, %v488, %v490
    %v492 = vshll.u32 %v452, 8
    %v493 = vmul.u32.u64.compose %v492, %v491
    %v494 = vextract.low.u32 %v493
    %v495 = vextract.high.u32 %v493
    %v496 = vmul.u32.u64.compose %v492, %v487
    %v497 = vextract.low.u32 %v496
    %v498 = vextract.high.u32 %v496
    %v499 = vmul.u32 %v492, %v483
    %v500 = vadd.s32 %v495, %v497
    %vm501 = vc.u32 %v495, %v497
    %v502 = vadd.s32 %v498, 1
    %v503 = vsel %vm501, %v502, %v498
    %v504 = vadd.s32 %v499, %v503
    %v505 = vadd.s32 %v504, 536870912
    %v506 = vshrl.u32 %v505, 30
    %v507 = vshll.u32 %v506, 30
    %v508 = vsub.s32 %v504, %v507
    %vm509 = vcmp.lt.s32.totalorder %v508, 0
    %v510 = vsub.s32 0, %v508
    %v511 = vsel %vm509, %v510, %v508
    %v512 = vclz %v511
    %v513 = vsub.s32 %v512, 2
    %vm514 = vcmp.gt.s32.totalorder 0, %v513
    %v515 = vsel %vm514, 0, %v513
    %v516 = vsub.s32 32, %v515
    %v517 = vshll.u32 %v508, %v515
    %v518 = vshrl.u32 %v500, %v516
    %v519 = vor.u32 %v517, %v518
    %v520 = vsub.s32 4294967266, %v515
    %v521 = vadd.s32 %v520, 127
    %v522 = vshll.u32 %v521, 23
    %v523 = vor.u32 4788187, %v522
    %v524 = vand.u32 2147483647, %v523
    %v526 = vcvt.s32.f32 %v519
    %v527 = vmul.f32 %v526, %v524
    %v528 = vxor.u32 %v527, 2147483648
    %v529 = vsel %vm446, %v528, %v527
    %v530 = vsub.s32 4, %v506
    %v531 = vsel %vm446, %v530, %v506
    %v532 = vsel %vm445, %v325, %v529
    %v533 = vsel %vm445, 0, %v531
    %v534 = vcosq.f32.pop %v532
    %v535 = vsinq.f32.pop %v532
    %vm536 = vweird.f32 %v325
    %v537 = vadd.s32 %v533, 3
    %v538 = vand.u32 %v537, 3
    %vm539 = vcmp.lt.s32.totalorder %v538, 2
    %vm540 = vcmp.eq.s32.totalorder %v538, 0
    %v541 = vxor.u32 %v535, 2147483648
    %v542 = vsel %vm540, %v534, %v541
    %vm543 = vcmp.eq.s32.totalorder %v538, 2
    %v544 = vxor.u32 %v534, 2147483648
    %v545 = vsel %vm543, %v544, %v535
    %v546 = vsel %vm539, %v542, %v545
    %v547 = vsel %vm536, nan, %v546
    %v548 = vand.u32 2147483647, %v326
    %vm549 = vcmp.le.f32.partialorder %v548, 0.7853982
    %vm550 = vcmp.lt.s32.totalorder %v326, 0
    %v551 = vand.u32 %v326, 2139095040
    %v552 = vshrl.u32 %v551, 23
    %v553 = vsub.s32 %v552, 127
    %v554 = vand.u32 2147483647, %v326
    %v555 = vand.u32 %v554, 8388607
    %v556 = vor.u32 %v555, 8388608
    %v557 = vsub.s32 0, %v556
    %v558 = vadd.s32 %v553, 1
    %vm559 = vcmp.gt.s32.totalorder %v558, 0
    %v560 = vsel %vm559, %v558, 0
    %v561 = vshrl.u32 %v560, 5
    %v562 = vand.u32 %v560, 31
    %v563 = vsub.s32 32, %v562
    %v564 = vshrl.u32 683565275, %v563
    %v565 = vshll.u32 683565275, %v562
    %v566 = vshrl.u32 2475754826, %v563
    %v567 = vor.u32 %v565, %v566
    %v568 = vshll.u32 2475754826, %v562
    %v569 = vshrl.u32 2131351028, %v563
    %v570 = vor.u32 %v568, %v569
    %v571 = vshll.u32 2131351028, %v562
    %v572 = vshrl.u32 2102212464, %v563
    %v573 = vor.u32 %v571, %v572
    %v574 = vshll.u32 2102212464, %v562
    %v575 = vshrl.u32 920167782, %v563
    %v576 = vor.u32 %v574, %v575
    %v577 = vshll.u32 920167782, %v562
    %v578 = vshrl.u32 1326507024, %v563
    %v579 = vor.u32 %v577, %v578
    %vm580 = vcmp.lt.s32.totalorder %v561, 1
    %vm581 = vcmp.lt.s32.totalorder %v561, 2
    %vm582 = vcmp.lt.s32.totalorder %v561, 3
    %vm583 = vcmp.lt.s32.totalorder %v561, 4
    %v584 = vsel %vm580, %v564, %v567
    %v585 = vsel %vm583, %v573, 2102212464
    %v586 = vsel %vm582, %v570, %v585
    %v587 = vsel %vm581, %v584, %v586
    %v588 = vsel %vm580, %v567, %v570
    %v589 = vsel %vm583, %v576, 920167782
    %v590 = vsel %vm582, %v573, %v589
    %v591 = vsel %vm581, %v588, %v590
    %v592 = vsel %vm580, %v570, %v573
    %v593 = vsel %vm583, %v579, 1326507024
    %v594 = vsel %vm582, %v576, %v593
    %v595 = vsel %vm581, %v592, %v594
    %v596 = vshll.u32 %v556, 8
    %v597 = vmul.u32.u64.compose %v596, %v595
    %v598 = vextract.low.u32 %v597
    %v599 = vextract.high.u32 %v597
    %v600 = vmul.u32.u64.compose %v596, %v591
    %v601 = vextract.low.u32 %v600
    %v602 = vextract.high.u32 %v600
    %v603 = vmul.u32 %v596, %v587
    %v604 = vadd.s32 %v599, %v601
    %vm605 = vc.u32 %v599, %v601
    %v606 = vadd.s32 %v602, 1
    %v607 = vsel %vm605, %v606, %v602
    %v608 = vadd.s32 %v603, %v607
    %v609 = vadd.s32 %v608, 536870912
    %v610 = vshrl.u32 %v609, 30
    %v611 = vshll.u32 %v610, 30
    %v612 = vsub.s32 %v608, %v611
    %vm613 = vcmp.lt.s32.totalorder %v612, 0
    %v614 = vsub.s32 0, %v612
    %v615 = vsel %vm613, %v614, %v612
    %v616 = vclz %v615
    %v617 = vsub.s32 %v616, 2
    %vm618 = vcmp.gt.s32.totalorder 0, %v617
    %v619 = vsel %vm618, 0, %v617
    %v620 = vsub.s32 32, %v619
    %v621 = vshll.u32 %v612, %v619
    %v622 = vshrl.u32 %v604, %v620
    %v623 = vor.u32 %v621, %v622
    %v624 = vsub.s32 4294967266, %v619
    %v625 = vadd.s32 %v624, 127
    %v626 = vshll.u32 %v625, 23
    %v627 = vor.u32 4788187, %v626
    %v628 = vand.u32 2147483647, %v627
    %v630 = vcvt.s32.f32 %v623
    %v631 = vmul.f32 %v630, %v628
    %v632 = vxor.u32 %v631, 2147483648
    %v633 = vsel %vm550, %v632, %v631
    %v634 = vsub.s32 4, %v610
    %v635 = vsel %vm550, %v634, %v610
    %v636 = vsel %vm549, %v326, %v633
    %v637 = vsel %vm549, 0, %v635
    %v638 = vcosq.f32.pop %v636
    %v639 = vsinq.f32.pop %v636
    %vm640 = vweird.f32 %v326
    %v641 = vadd.s32 %v637, 3
    %v642 = vand.u32 %v641, 3
    %vm643 = vcmp.lt.s32.totalorder %v642, 2
    %vm644 = vcmp.eq.s32.totalorder %v642, 0
    %v645 = vxor.u32 %v639, 2147483648
    %v646 = vsel %vm644, %v638, %v645
    %vm647 = vcmp.eq.s32.totalorder %v642, 2
    %v648 = vxor.u32 %v638, 2147483648
    %v649 = vsel %vm647, %v648, %v639
    %v650 = vsel %vm643, %v646, %v649
    %v651 = vsel %vm640, nan, %v650
    %v652 = vand.u32 2147483647, %v327
    %vm653 = vcmp.le.f32.partialorder %v652, 0.7853982
    %vm654 = vcmp.lt.s32.totalorder %v327, 0
    %v655 = vand.u32 %v327, 2139095040
    %v656 = vshrl.u32 %v655, 23
    %v657 = vsub.s32 %v656, 127
    %v658 = vand.u32 2147483647, %v327
    %v659 = vand.u32 %v658, 8388607
    %v660 = vor.u32 %v659, 8388608
    %v661 = vsub.s32 0, %v660
    %v662 = vadd.s32 %v657, 1
    %vm663 = vcmp.gt.s32.totalorder %v662, 0
    %v664 = vsel %vm663, %v662, 0
    %v665 = vshrl.u32 %v664, 5
    %v666 = vand.u32 %v664, 31
    %v667 = vsub.s32 32, %v666
    %v668 = vshrl.u32 683565275, %v667
    %v669 = vshll.u32 683565275, %v666
    %v670 = vshrl.u32 2475754826, %v667
    %v671 = vor.u32 %v669, %v670
    %v672 = vshll.u32 2475754826, %v666
    %v673 = vshrl.u32 2131351028, %v667
    %v674 = vor.u32 %v672, %v673
    %v675 = vshll.u32 2131351028, %v666
    %v676 = vshrl.u32 2102212464, %v667
    %v677 = vor.u32 %v675, %v676
    %v678 = vshll.u32 2102212464, %v666
    %v679 = vshrl.u32 920167782, %v667
    %v680 = vor.u32 %v678, %v679
    %v681 = vshll.u32 920167782, %v666
    %v682 = vshrl.u32 1326507024, %v667
    %v683 = vor.u32 %v681, %v682
    %vm684 = vcmp.lt.s32.totalorder %v665, 1
    %vm685 = vcmp.lt.s32.totalorder %v665, 2
    %vm686 = vcmp.lt.s32.totalorder %v665, 3
    %vm687 = vcmp.lt.s32.totalorder %v665, 4
    %v688 = vsel %vm684, %v668, %v671
    %v689 = vsel %vm687, %v677, 2102212464
    %v690 = vsel %vm686, %v674, %v689
    %v691 = vsel %vm685, %v688, %v690
    %v692 = vsel %vm684, %v671, %v674
    %v693 = vsel %vm687, %v680, 920167782
    %v694 = vsel %vm686, %v677, %v693
    %v695 = vsel %vm685, %v692, %v694
    %v696 = vsel %vm684, %v674, %v677
    %v697 = vsel %vm687, %v683, 1326507024
    %v698 = vsel %vm686, %v680, %v697
    %v699 = vsel %vm685, %v696, %v698
    %v700 = vshll.u32 %v660, 8
    %v701 = vmul.u32.u64.compose %v700, %v699
    %v702 = vextract.low.u32 %v701
    %v703 = vextract.high.u32 %v701
    %v704 = vmul.u32.u64.compose %v700, %v695
    %v705 = vextract.low.u32 %v704
    %v706 = vextract.high.u32 %v704
    %v707 = vmul.u32 %v700, %v691
    %v708 = vadd.s32 %v703, %v705
    %vm709 = vc.u32 %v703, %v705
    %v710 = vadd.s32 %v706, 1
    %v711 = vsel %vm709, %v710, %v706
    %v712 = vadd.s32 %v707, %v711
    %v713 = vadd.s32 %v712, 536870912
    %v714 = vshrl.u32 %v713, 30
    %v715 = vshll.u32 %v714, 30
    %v716 = vsub.s32 %v712, %v715
    %vm717 = vcmp.lt.s32.totalorder %v716, 0
    %v718 = vsub.s32 0, %v716
    %v719 = vsel %vm717, %v718, %v716
    %v720 = vclz %v719
    %v721 = vsub.s32 %v720, 2
    %vm722 = vcmp.gt.s32.totalorder 0, %v721
    %v723 = vsel %vm722, 0, %v721
    %v724 = vsub.s32 32, %v723
    %v725 = vshll.u32 %v716, %v723
    %v726 = vshrl.u32 %v708, %v724
    %v727 = vor.u32 %v725, %v726
    %v728 = vsub.s32 4294967266, %v723
    %v729 = vadd.s32 %v728, 127
    %v730 = vshll.u32 %v729, 23
    %v731 = vor.u32 4788187, %v730
    %v732 = vand.u32 2147483647, %v731
    %v734 = vcvt.s32.f32 %v727
    %v735 = vmul.f32 %v734, %v732
    %v736 = vxor.u32 %v735, 2147483648
    %v737 = vsel %vm654, %v736, %v735
    %v738 = vsub.s32 4, %v714
    %v739 = vsel %vm654, %v738, %v714
    %v740 = vsel %vm653, %v327, %v737
    %v741 = vsel %vm653, 0, %v739
    %v742 = vcosq.f32.pop %v740
    %v743 = vsinq.f32.pop %v740
    %vm744 = vweird.f32 %v327
    %v745 = vadd.s32 %v741, 3
    %v746 = vand.u32 %v745, 3
    %vm747 = vcmp.lt.s32.totalorder %v746, 2
    %vm748 = vcmp.eq.s32.totalorder %v746, 0
    %v749 = vxor.u32 %v743, 2147483648
    %v750 = vsel %vm748, %v742, %v749
    %vm751 = vcmp.eq.s32.totalorder %v746, 2
    %v752 = vxor.u32 %v742, 2147483648
    %v753 = vsel %vm751, %v752, %v743
    %v754 = vsel %vm747, %v750, %v753
    %v755 = vsel %vm744, nan, %v754
    %v756 = vand.u32 2147483647, %v328
    %vm757 = vcmp.le.f32.partialorder %v756, 0.7853982
    %vm758 = vcmp.lt.s32.totalorder %v328, 0
    %v759 = vand.u32 %v328, 2139095040
    %v760 = vshrl.u32 %v759, 23
    %v761 = vsub.s32 %v760, 127
    %v762 = vand.u32 2147483647, %v328
    %v763 = vand.u32 %v762, 8388607
    %v764 = vor.u32 %v763, 8388608
    %v765 = vsub.s32 0, %v764
    %v766 = vadd.s32 %v761, 1
    %vm767 = vcmp.gt.s32.totalorder %v766, 0
    %v768 = vsel %vm767, %v766, 0
    %v769 = vshrl.u32 %v768, 5
    %v770 = vand.u32 %v768, 31
    %v771 = vsub.s32 32, %v770
    %v772 = vshrl.u32 683565275, %v771
    %v773 = vshll.u32 683565275, %v770
    %v774 = vshrl.u32 2475754826, %v771
    %v775 = vor.u32 %v773, %v774
    %v776 = vshll.u32 2475754826, %v770
    %v777 = vshrl.u32 2131351028, %v771
    %v778 = vor.u32 %v776, %v777
    %v779 = vshll.u32 2131351028, %v770
    %v780 = vshrl.u32 2102212464, %v771
    %v781 = vor.u32 %v779, %v780
    %v782 = vshll.u32 2102212464, %v770
    %v783 = vshrl.u32 920167782, %v771
    %v784 = vor.u32 %v782, %v783
    %v785 = vshll.u32 920167782, %v770
    %v786 = vshrl.u32 1326507024, %v771
    %v787 = vor.u32 %v785, %v786
    %vm788 = vcmp.lt.s32.totalorder %v769, 1
    %vm789 = vcmp.lt.s32.totalorder %v769, 2
    %vm790 = vcmp.lt.s32.totalorder %v769, 3
    %vm791 = vcmp.lt.s32.totalorder %v769, 4
    %v792 = vsel %vm788, %v772, %v775
    %v793 = vsel %vm791, %v781, 2102212464
    %v794 = vsel %vm790, %v778, %v793
    %v795 = vsel %vm789, %v792, %v794
    %v796 = vsel %vm788, %v775, %v778
    %v797 = vsel %vm791, %v784, 920167782
    %v798 = vsel %vm790, %v781, %v797
    %v799 = vsel %vm789, %v796, %v798
    %v800 = vsel %vm788, %v778, %v781
    %v801 = vsel %vm791, %v787, 1326507024
    %v802 = vsel %vm790, %v784, %v801
    %v803 = vsel %vm789, %v800, %v802
    %v804 = vshll.u32 %v764, 8
    %v805 = vmul.u32.u64.compose %v804, %v803
    %v806 = vextract.low.u32 %v805
    %v807 = vextract.high.u32 %v805
    %v808 = vmul.u32.u64.compose %v804, %v799
    %v809 = vextract.low.u32 %v808
    %v810 = vextract.high.u32 %v808
    %v811 = vmul.u32 %v804, %v795
    %v812 = vadd.s32 %v807, %v809
    %vm813 = vc.u32 %v807, %v809
    %v814 = vadd.s32 %v810, 1
    %v815 = vsel %vm813, %v814, %v810
    %v816 = vadd.s32 %v811, %v815
    %v817 = vadd.s32 %v816, 536870912
    %v818 = vshrl.u32 %v817, 30
    %v819 = vshll.u32 %v818, 30
    %v820 = vsub.s32 %v816, %v819
    %vm821 = vcmp.lt.s32.totalorder %v820, 0
    %v822 = vsub.s32 0, %v820
    %v823 = vsel %vm821, %v822, %v820
    %v824 = vclz %v823
    %v825 = vsub.s32 %v824, 2
    %vm826 = vcmp.gt.s32.totalorder 0, %v825
    %v827 = vsel %vm826, 0, %v825
    %v828 = vsub.s32 32, %v827
    %v829 = vshll.u32 %v820, %v827
    %v830 = vshrl.u32 %v812, %v828
    %v831 = vor.u32 %v829, %v830
    %v832 = vsub.s32 4294967266, %v827
    %v833 = vadd.s32 %v832, 127
    %v834 = vshll.u32 %v833, 23
    %v835 = vor.u32 4788187, %v834
    %v836 = vand.u32 2147483647, %v835
    %v838 = vcvt.s32.f32 %v831
    %v839 = vmul.f32 %v838, %v836
    %v840 = vxor.u32 %v839, 2147483648
    %v841 = vsel %vm758, %v840, %v839
    %v842 = vsub.s32 4, %v818
    %v843 = vsel %vm758, %v842, %v818
    %v844 = vsel %vm757, %v328, %v841
    %v845 = vsel %vm757, 0, %v843
    %v846 = vcosq.f32.pop %v844
    %v847 = vsinq.f32.pop %v844
    %vm848 = vweird.f32 %v328
    %v849 = vadd.s32 %v845, 3
    %v850 = vand.u32 %v849, 3
    %vm851 = vcmp.lt.s32.totalorder %v850, 2
    %vm852 = vcmp.eq.s32.totalorder %v850, 0
    %v853 = vxor.u32 %v847, 2147483648
    %v854 = vsel %vm852, %v846, %v853
    %vm855 = vcmp.eq.s32.totalorder %v850, 2
    %v856 = vxor.u32 %v846, 2147483648
    %v857 = vsel %vm855, %v856, %v847
    %v858 = vsel %vm851, %v854, %v857
    %v859 = vsel %vm848, nan, %v858
    %v860 = vand.u32 2147483647, %v329
    %vm861 = vcmp.le.f32.partialorder %v860, 0.7853982
    %vm862 = vcmp.lt.s32.totalorder %v329, 0
    %v863 = vand.u32 %v329, 2139095040
    %v864 = vshrl.u32 %v863, 23
    %v865 = vsub.s32 %v864, 127
    %v866 = vand.u32 2147483647, %v329
    %v867 = vand.u32 %v866, 8388607
    %v868 = vor.u32 %v867, 8388608
    %v869 = vsub.s32 0, %v868
    %v870 = vadd.s32 %v865, 1
    %vm871 = vcmp.gt.s32.totalorder %v870, 0
    %v872 = vsel %vm871, %v870, 0
    %v873 = vshrl.u32 %v872, 5
    %v874 = vand.u32 %v872, 31
    %v875 = vsub.s32 32, %v874
    %v876 = vshrl.u32 683565275, %v875
    %v877 = vshll.u32 683565275, %v874
    %v878 = vshrl.u32 2475754826, %v875
    %v879 = vor.u32 %v877, %v878
    %v880 = vshll.u32 2475754826, %v874
    %v881 = vshrl.u32 2131351028, %v875
    %v882 = vor.u32 %v880, %v881
    %v883 = vshll.u32 2131351028, %v874
    %v884 = vshrl.u32 2102212464, %v875
    %v885 = vor.u32 %v883, %v884
    %v886 = vshll.u32 2102212464, %v874
    %v887 = vshrl.u32 920167782, %v875
    %v888 = vor.u32 %v886, %v887
    %v889 = vshll.u32 920167782, %v874
    %v890 = vshrl.u32 1326507024, %v875
    %v891 = vor.u32 %v889, %v890
    %vm892 = vcmp.lt.s32.totalorder %v873, 1
    %vm893 = vcmp.lt.s32.totalorder %v873, 2
    %vm894 = vcmp.lt.s32.totalorder %v873, 3
    %vm895 = vcmp.lt.s32.totalorder %v873, 4
    %v896 = vsel %vm892, %v876, %v879
    %v897 = vsel %vm895, %v885, 2102212464
    %v898 = vsel %vm894, %v882, %v897
    %v899 = vsel %vm893, %v896, %v898
    %v900 = vsel %vm892, %v879, %v882
    %v901 = vsel %vm895, %v888, 920167782
    %v902 = vsel %vm894, %v885, %v901
    %v903 = vsel %vm893, %v900, %v902
    %v904 = vsel %vm892, %v882, %v885
    %v905 = vsel %vm895, %v891, 1326507024
    %v906 = vsel %vm894, %v888, %v905
    %v907 = vsel %vm893, %v904, %v906
    %v908 = vshll.u32 %v868, 8
    %v909 = vmul.u32.u64.compose %v908, %v907
    %v910 = vextract.low.u32 %v909
    %v911 = vextract.high.u32 %v909
    %v912 = vmul.u32.u64.compose %v908, %v903
    %v913 = vextract.low.u32 %v912
    %v914 = vextract.high.u32 %v912
    %v915 = vmul.u32 %v908, %v899
    %v916 = vadd.s32 %v911, %v913
    %vm917 = vc.u32 %v911, %v913
    %v918 = vadd.s32 %v914, 1
    %v919 = vsel %vm917, %v918, %v914
    %v920 = vadd.s32 %v915, %v919
    %v921 = vadd.s32 %v920, 536870912
    %v922 = vshrl.u32 %v921, 30
    %v923 = vshll.u32 %v922, 30
    %v924 = vsub.s32 %v920, %v923
    %vm925 = vcmp.lt.s32.totalorder %v924, 0
    %v926 = vsub.s32 0, %v924
    %v927 = vsel %vm925, %v926, %v924
    %v928 = vclz %v927
    %v929 = vsub.s32 %v928, 2
    %vm930 = vcmp.gt.s32.totalorder 0, %v929
    %v931 = vsel %vm930, 0, %v929
    %v932 = vsub.s32 32, %v931
    %v933 = vshll.u32 %v924, %v931
    %v934 = vshrl.u32 %v916, %v932
    %v935 = vor.u32 %v933, %v934
    %v936 = vsub.s32 4294967266, %v931
    %v937 = vadd.s32 %v936, 127
    %v938 = vshll.u32 %v937, 23
    %v939 = vor.u32 4788187, %v938
    %v940 = vand.u32 2147483647, %v939
    %v942 = vcvt.s32.f32 %v935
    %v943 = vmul.f32 %v942, %v940
    %v944 = vxor.u32 %v943, 2147483648
    %v945 = vsel %vm862, %v944, %v943
    %v946 = vsub.s32 4, %v922
    %v947 = vsel %vm862, %v946, %v922
    %v948 = vsel %vm861, %v329, %v945
    %v949 = vsel %vm861, 0, %v947
    %v950 = vcosq.f32.pop %v948
    %v951 = vsinq.f32.pop %v948
    %vm952 = vweird.f32 %v329
    %v953 = vadd.s32 %v949, 3
    %v954 = vand.u32 %v953, 3
    %vm955 = vcmp.lt.s32.totalorder %v954, 2
    %vm956 = vcmp.eq.s32.totalorder %v954, 0
    %v957 = vxor.u32 %v951, 2147483648
    %v958 = vsel %vm956, %v950, %v957
    %vm959 = vcmp.eq.s32.totalorder %v954, 2
    %v960 = vxor.u32 %v950, 2147483648
    %v961 = vsel %vm959, %v960, %v951
    %v962 = vsel %vm955, %v958, %v961
    %v963 = vsel %vm952, nan, %v962
    %v964 = vand.u32 2147483647, %v330
    %vm965 = vcmp.le.f32.partialorder %v964, 0.7853982
    %vm966 = vcmp.lt.s32.totalorder %v330, 0
    %v967 = vand.u32 %v330, 2139095040
    %v968 = vshrl.u32 %v967, 23
    %v969 = vsub.s32 %v968, 127
    %v970 = vand.u32 2147483647, %v330
    %v971 = vand.u32 %v970, 8388607
    %v972 = vor.u32 %v971, 8388608
    %v973 = vsub.s32 0, %v972
    %v974 = vadd.s32 %v969, 1
    %vm975 = vcmp.gt.s32.totalorder %v974, 0
    %v976 = vsel %vm975, %v974, 0
    %v977 = vshrl.u32 %v976, 5
    %v978 = vand.u32 %v976, 31
    %v979 = vsub.s32 32, %v978
    %v980 = vshrl.u32 683565275, %v979
    %v981 = vshll.u32 683565275, %v978
    %v982 = vshrl.u32 2475754826, %v979
    %v983 = vor.u32 %v981, %v982
    %v984 = vshll.u32 2475754826, %v978
    %v985 = vshrl.u32 2131351028, %v979
    %v986 = vor.u32 %v984, %v985
    %v987 = vshll.u32 2131351028, %v978
    %v988 = vshrl.u32 2102212464, %v979
    %v989 = vor.u32 %v987, %v988
    %v990 = vshll.u32 2102212464, %v978
    %v991 = vshrl.u32 920167782, %v979
    %v992 = vor.u32 %v990, %v991
    %v993 = vshll.u32 920167782, %v978
    %v994 = vshrl.u32 1326507024, %v979
    %v995 = vor.u32 %v993, %v994
    %vm996 = vcmp.lt.s32.totalorder %v977, 1
    %vm997 = vcmp.lt.s32.totalorder %v977, 2
    %vm998 = vcmp.lt.s32.totalorder %v977, 3
    %vm999 = vcmp.lt.s32.totalorder %v977, 4
    %v1000 = vsel %vm996, %v980, %v983
    %v1001 = vsel %vm999, %v989, 2102212464
    %v1002 = vsel %vm998, %v986, %v1001
    %v1003 = vsel %vm997, %v1000, %v1002
    %v1004 = vsel %vm996, %v983, %v986
    %v1005 = vsel %vm999, %v992, 920167782
    %v1006 = vsel %vm998, %v989, %v1005
    %v1007 = vsel %vm997, %v1004, %v1006
    %v1008 = vsel %vm996, %v986, %v989
    %v1009 = vsel %vm999, %v995, 1326507024
    %v1010 = vsel %vm998, %v992, %v1009
    %v1011 = vsel %vm997, %v1008, %v1010
    %v1012 = vshll.u32 %v972, 8
    %v1013 = vmul.u32.u64.compose %v1012, %v1011
    %v1014 = vextract.low.u32 %v1013
    %v1015 = vextract.high.u32 %v1013
    %v1016 = vmul.u32.u64.compose %v1012, %v1007
    %v1017 = vextract.low.u32 %v1016
    %v1018 = vextract.high.u32 %v1016
    %v1019 = vmul.u32 %v1012, %v1003
    %v1020 = vadd.s32 %v1015, %v1017
    %vm1021 = vc.u32 %v1015, %v1017
    %v1022 = vadd.s32 %v1018, 1
    %v1023 = vsel %vm1021, %v1022, %v1018
    %v1024 = vadd.s32 %v1019, %v1023
    %v1025 = vadd.s32 %v1024, 536870912
    %v1026 = vshrl.u32 %v1025, 30
    %v1027 = vshll.u32 %v1026, 30
    %v1028 = vsub.s32 %v1024, %v1027
    %vm1029 = vcmp.lt.s32.totalorder %v1028, 0
    %v1030 = vsub.s32 0, %v1028
    %v1031 = vsel %vm1029, %v1030, %v1028
    %v1032 = vclz %v1031
    %v1033 = vsub.s32 %v1032, 2
    %vm1034 = vcmp.gt.s32.totalorder 0, %v1033
    %v1035 = vsel %vm1034, 0, %v1033
    %v1036 = vsub.s32 32, %v1035
    %v1037 = vshll.u32 %v1028, %v1035
    %v1038 = vshrl.u32 %v1020, %v1036
    %v1039 = vor.u32 %v1037, %v1038
    %v1040 = vsub.s32 4294967266, %v1035
    %v1041 = vadd.s32 %v1040, 127
    %v1042 = vshll.u32 %v1041, 23
    %v1043 = vor.u32 4788187, %v1042
    %v1044 = vand.u32 2147483647, %v1043
    %v1046 = vcvt.s32.f32 %v1039
    %v1047 = vmul.f32 %v1046, %v1044
    %v1048 = vxor.u32 %v1047, 2147483648
    %v1049 = vsel %vm966, %v1048, %v1047
    %v1050 = vsub.s32 4, %v1026
    %v1051 = vsel %vm966, %v1050, %v1026
    %v1052 = vsel %vm965, %v330, %v1049
    %v1053 = vsel %vm965, 0, %v1051
    %v1054 = vcosq.f32.pop %v1052
    %v1055 = vsinq.f32.pop %v1052
    %vm1056 = vweird.f32 %v330
    %v1057 = vadd.s32 %v1053, 3
    %v1058 = vand.u32 %v1057, 3
    %vm1059 = vcmp.lt.s32.totalorder %v1058, 2
    %vm1060 = vcmp.eq.s32.totalorder %v1058, 0
    %v1061 = vxor.u32 %v1055, 2147483648
    %v1062 = vsel %vm1060, %v1054, %v1061
    %vm1063 = vcmp.eq.s32.totalorder %v1058, 2
    %v1064 = vxor.u32 %v1054, 2147483648
    %v1065 = vsel %vm1063, %v1064, %v1055
    %v1066 = vsel %vm1059, %v1062, %v1065
    %v1067 = vsel %vm1056, nan, %v1066
    %v1068 = vand.u32 2147483647, %v331
    %vm1069 = vcmp.le.f32.partialorder %v1068, 0.7853982
    %vm1070 = vcmp.lt.s32.totalorder %v331, 0
    %v1071 = vand.u32 %v331, 2139095040
    %v1072 = vshrl.u32 %v1071, 23
    %v1073 = vsub.s32 %v1072, 127
    %v1074 = vand.u32 2147483647, %v331
    %v1075 = vand.u32 %v1074, 8388607
    %v1076 = vor.u32 %v1075, 8388608
    %v1077 = vsub.s32 0, %v1076
    %v1078 = vadd.s32 %v1073, 1
    %vm1079 = vcmp.gt.s32.totalorder %v1078, 0
    %v1080 = vsel %vm1079, %v1078, 0
    %v1081 = vshrl.u32 %v1080, 5
    %v1082 = vand.u32 %v1080, 31
    %v1083 = vsub.s32 32, %v1082
    %v1084 = vshrl.u32 683565275, %v1083
    %v1085 = vshll.u32 683565275, %v1082
    %v1086 = vshrl.u32 2475754826, %v1083
    %v1087 = vor.u32 %v1085, %v1086
    %v1088 = vshll.u32 2475754826, %v1082
    %v1089 = vshrl.u32 2131351028, %v1083
    %v1090 = vor.u32 %v1088, %v1089
    %v1091 = vshll.u32 2131351028, %v1082
    %v1092 = vshrl.u32 2102212464, %v1083
    %v1093 = vor.u32 %v1091, %v1092
    %v1094 = vshll.u32 2102212464, %v1082
    %v1095 = vshrl.u32 920167782, %v1083
    %v1096 = vor.u32 %v1094, %v1095
    %v1097 = vshll.u32 920167782, %v1082
    %v1098 = vshrl.u32 1326507024, %v1083
    %v1099 = vor.u32 %v1097, %v1098
    %vm1100 = vcmp.lt.s32.totalorder %v1081, 1
    %vm1101 = vcmp.lt.s32.totalorder %v1081, 2
    %vm1102 = vcmp.lt.s32.totalorder %v1081, 3
    %vm1103 = vcmp.lt.s32.totalorder %v1081, 4
    %v1104 = vsel %vm1100, %v1084, %v1087
    %v1105 = vsel %vm1103, %v1093, 2102212464
    %v1106 = vsel %vm1102, %v1090, %v1105
    %v1107 = vsel %vm1101, %v1104, %v1106
    %v1108 = vsel %vm1100, %v1087, %v1090
    %v1109 = vsel %vm1103, %v1096, 920167782
    %v1110 = vsel %vm1102, %v1093, %v1109
    %v1111 = vsel %vm1101, %v1108, %v1110
    %v1112 = vsel %vm1100, %v1090, %v1093
    %v1113 = vsel %vm1103, %v1099, 1326507024
    %v1114 = vsel %vm1102, %v1096, %v1113
    %v1115 = vsel %vm1101, %v1112, %v1114
    %v1116 = vshll.u32 %v1076, 8
    %v1117 = vmul.u32.u64.compose %v1116, %v1115
    %v1118 = vextract.low.u32 %v1117
    %v1119 = vextract.high.u32 %v1117
    %v1120 = vmul.u32.u64.compose %v1116, %v1111
    %v1121 = vextract.low.u32 %v1120
    %v1122 = vextract.high.u32 %v1120
    %v1123 = vmul.u32 %v1116, %v1107
    %v1124 = vadd.s32 %v1119, %v1121
    %vm1125 = vc.u32 %v1119, %v1121
    %v1126 = vadd.s32 %v1122, 1
    %v1127 = vsel %vm1125, %v1126, %v1122
    %v1128 = vadd.s32 %v1123, %v1127
    %v1129 = vadd.s32 %v1128, 536870912
    %v1130 = vshrl.u32 %v1129, 30
    %v1131 = vshll.u32 %v1130, 30
    %v1132 = vsub.s32 %v1128, %v1131
    %vm1133 = vcmp.lt.s32.totalorder %v1132, 0
    %v1134 = vsub.s32 0, %v1132
    %v1135 = vsel %vm1133, %v1134, %v1132
    %v1136 = vclz %v1135
    %v1137 = vsub.s32 %v1136, 2
    %vm1138 = vcmp.gt.s32.totalorder 0, %v1137
    %v1139 = vsel %vm1138, 0, %v1137
    %v1140 = vsub.s32 32, %v1139
    %v1141 = vshll.u32 %v1132, %v1139
    %v1142 = vshrl.u32 %v1124, %v1140
    %v1143 = vor.u32 %v1141, %v1142
    %v1144 = vsub.s32 4294967266, %v1139
    %v1145 = vadd.s32 %v1144, 127
    %v1146 = vshll.u32 %v1145, 23
    %v1147 = vor.u32 4788187, %v1146
    %v1148 = vand.u32 2147483647, %v1147
    %v1150 = vcvt.s32.f32 %v1143
    %v1151 = vmul.f32 %v1150, %v1148
    %v1152 = vxor.u32 %v1151, 2147483648
    %v1153 = vsel %vm1070, %v1152, %v1151
    %v1154 = vsub.s32 4, %v1130
    %v1155 = vsel %vm1070, %v1154, %v1130
    %v1156 = vsel %vm1069, %v331, %v1153
    %v1157 = vsel %vm1069, 0, %v1155
    %v1158 = vcosq.f32.pop %v1156
    %v1159 = vsinq.f32.pop %v1156
    %vm1160 = vweird.f32 %v331
    %v1161 = vadd.s32 %v1157, 3
    %v1162 = vand.u32 %v1161, 3
    %vm1163 = vcmp.lt.s32.totalorder %v1162, 2
    %vm1164 = vcmp.eq.s32.totalorder %v1162, 0
    %v1165 = vxor.u32 %v1159, 2147483648
    %v1166 = vsel %vm1164, %v1158, %v1165
    %vm1167 = vcmp.eq.s32.totalorder %v1162, 2
    %v1168 = vxor.u32 %v1158, 2147483648
    %v1169 = vsel %vm1167, %v1168, %v1159
    %v1170 = vsel %vm1163, %v1166, %v1169
    %v1171 = vsel %vm1160, nan, %v1170
    %v1172 = vand.u32 2147483647, %v332
    %vm1173 = vcmp.le.f32.partialorder %v1172, 0.7853982
    %vm1174 = vcmp.lt.s32.totalorder %v332, 0
    %v1175 = vand.u32 %v332, 2139095040
    %v1176 = vshrl.u32 %v1175, 23
    %v1177 = vsub.s32 %v1176, 127
    %v1178 = vand.u32 2147483647, %v332
    %v1179 = vand.u32 %v1178, 8388607
    %v1180 = vor.u32 %v1179, 8388608
    %v1181 = vsub.s32 0, %v1180
    %v1182 = vadd.s32 %v1177, 1
    %vm1183 = vcmp.gt.s32.totalorder %v1182, 0
    %v1184 = vsel %vm1183, %v1182, 0
    %v1185 = vshrl.u32 %v1184, 5
    %v1186 = vand.u32 %v1184, 31
    %v1187 = vsub.s32 32, %v1186
    %v1188 = vshrl.u32 683565275, %v1187
    %v1189 = vshll.u32 683565275, %v1186
    %v1190 = vshrl.u32 2475754826, %v1187
    %v1191 = vor.u32 %v1189, %v1190
    %v1192 = vshll.u32 2475754826, %v1186
    %v1193 = vshrl.u32 2131351028, %v1187
    %v1194 = vor.u32 %v1192, %v1193
    %v1195 = vshll.u32 2131351028, %v1186
    %v1196 = vshrl.u32 2102212464, %v1187
    %v1197 = vor.u32 %v1195, %v1196
    %v1198 = vshll.u32 2102212464, %v1186
    %v1199 = vshrl.u32 920167782, %v1187
    %v1200 = vor.u32 %v1198, %v1199
    %v1201 = vshll.u32 920167782, %v1186
    %v1202 = vshrl.u32 1326507024, %v1187
    %v1203 = vor.u32 %v1201, %v1202
    %vm1204 = vcmp.lt.s32.totalorder %v1185, 1
    %vm1205 = vcmp.lt.s32.totalorder %v1185, 2
    %vm1206 = vcmp.lt.s32.totalorder %v1185, 3
    %vm1207 = vcmp.lt.s32.totalorder %v1185, 4
    %v1208 = vsel %vm1204, %v1188, %v1191
    %v1209 = vsel %vm1207, %v1197, 2102212464
    %v1210 = vsel %vm1206, %v1194, %v1209
    %v1211 = vsel %vm1205, %v1208, %v1210
    %v1212 = vsel %vm1204, %v1191, %v1194
    %v1213 = vsel %vm1207, %v1200, 920167782
    %v1214 = vsel %vm1206, %v1197, %v1213
    %v1215 = vsel %vm1205, %v1212, %v1214
    %v1216 = vsel %vm1204, %v1194, %v1197
    %v1217 = vsel %vm1207, %v1203, 1326507024
    %v1218 = vsel %vm1206, %v1200, %v1217
    %v1219 = vsel %vm1205, %v1216, %v1218
    %v1220 = vshll.u32 %v1180, 8
    %v1221 = vmul.u32.u64.compose %v1220, %v1219
    %v1222 = vextract.low.u32 %v1221
    %v1223 = vextract.high.u32 %v1221
    %v1224 = vmul.u32.u64.compose %v1220, %v1215
    %v1225 = vextract.low.u32 %v1224
    %v1226 = vextract.high.u32 %v1224
    %v1227 = vmul.u32 %v1220, %v1211
    %v1228 = vadd.s32 %v1223, %v1225
    %vm1229 = vc.u32 %v1223, %v1225
    %v1230 = vadd.s32 %v1226, 1
    %v1231 = vsel %vm1229, %v1230, %v1226
    %v1232 = vadd.s32 %v1227, %v1231
    %v1233 = vadd.s32 %v1232, 536870912
    %v1234 = vshrl.u32 %v1233, 30
    %v1235 = vshll.u32 %v1234, 30
    %v1236 = vsub.s32 %v1232, %v1235
    %vm1237 = vcmp.lt.s32.totalorder %v1236, 0
    %v1238 = vsub.s32 0, %v1236
    %v1239 = vsel %vm1237, %v1238, %v1236
    %v1240 = vclz %v1239
    %v1241 = vsub.s32 %v1240, 2
    %vm1242 = vcmp.gt.s32.totalorder 0, %v1241
    %v1243 = vsel %vm1242, 0, %v1241
    %v1244 = vsub.s32 32, %v1243
    %v1245 = vshll.u32 %v1236, %v1243
    %v1246 = vshrl.u32 %v1228, %v1244
    %v1247 = vor.u32 %v1245, %v1246
    %v1248 = vsub.s32 4294967266, %v1243
    %v1249 = vadd.s32 %v1248, 127
    %v1250 = vshll.u32 %v1249, 23
    %v1251 = vor.u32 4788187, %v1250
    %v1252 = vand.u32 2147483647, %v1251
    %v1254 = vcvt.s32.f32 %v1247
    %v1255 = vmul.f32 %v1254, %v1252
    %v1256 = vxor.u32 %v1255, 2147483648
    %v1257 = vsel %vm1174, %v1256, %v1255
    %v1258 = vsub.s32 4, %v1234
    %v1259 = vsel %vm1174, %v1258, %v1234
    %v1260 = vsel %vm1173, %v332, %v1257
    %v1261 = vsel %vm1173, 0, %v1259
    %v1262 = vcosq.f32.pop %v1260
    %v1263 = vsinq.f32.pop %v1260
    %vm1264 = vweird.f32 %v332
    %v1265 = vadd.s32 %v1261, 3
    %v1266 = vand.u32 %v1265, 3
    %vm1267 = vcmp.lt.s32.totalorder %v1266, 2
    %vm1268 = vcmp.eq.s32.totalorder %v1266, 0
    %v1269 = vxor.u32 %v1263, 2147483648
    %v1270 = vsel %vm1268, %v1262, %v1269
    %vm1271 = vcmp.eq.s32.totalorder %v1266, 2
    %v1272 = vxor.u32 %v1262, 2147483648
    %v1273 = vsel %vm1271, %v1272, %v1263
    %v1274 = vsel %vm1267, %v1270, %v1273
    %v1275 = vsel %vm1264, nan, %v1274
    %v1276 = vand.u32 2147483647, %v333
    %vm1277 = vcmp.le.f32.partialorder %v1276, 0.7853982
    %vm1278 = vcmp.lt.s32.totalorder %v333, 0
    %v1279 = vand.u32 %v333, 2139095040
    %v1280 = vshrl.u32 %v1279, 23
    %v1281 = vsub.s32 %v1280, 127
    %v1282 = vand.u32 2147483647, %v333
    %v1283 = vand.u32 %v1282, 8388607
    %v1284 = vor.u32 %v1283, 8388608
    %v1285 = vsub.s32 0, %v1284
    %v1286 = vadd.s32 %v1281, 1
    %vm1287 = vcmp.gt.s32.totalorder %v1286, 0
    %v1288 = vsel %vm1287, %v1286, 0
    %v1289 = vshrl.u32 %v1288, 5
    %v1290 = vand.u32 %v1288, 31
    %v1291 = vsub.s32 32, %v1290
    %v1292 = vshrl.u32 683565275, %v1291
    %v1293 = vshll.u32 683565275, %v1290
    %v1294 = vshrl.u32 2475754826, %v1291
    %v1295 = vor.u32 %v1293, %v1294
    %v1296 = vshll.u32 2475754826, %v1290
    %v1297 = vshrl.u32 2131351028, %v1291
    %v1298 = vor.u32 %v1296, %v1297
    %v1299 = vshll.u32 2131351028, %v1290
    %v1300 = vshrl.u32 2102212464, %v1291
    %v1301 = vor.u32 %v1299, %v1300
    %v1302 = vshll.u32 2102212464, %v1290
    %v1303 = vshrl.u32 920167782, %v1291
    %v1304 = vor.u32 %v1302, %v1303
    %v1305 = vshll.u32 920167782, %v1290
    %v1306 = vshrl.u32 1326507024, %v1291
    %v1307 = vor.u32 %v1305, %v1306
    %vm1308 = vcmp.lt.s32.totalorder %v1289, 1
    %vm1309 = vcmp.lt.s32.totalorder %v1289, 2
    %vm1310 = vcmp.lt.s32.totalorder %v1289, 3
    %vm1311 = vcmp.lt.s32.totalorder %v1289, 4
    %v1312 = vsel %vm1308, %v1292, %v1295
    %v1313 = vsel %vm1311, %v1301, 2102212464
    %v1314 = vsel %vm1310, %v1298, %v1313
    %v1315 = vsel %vm1309, %v1312, %v1314
    %v1316 = vsel %vm1308, %v1295, %v1298
    %v1317 = vsel %vm1311, %v1304, 920167782
    %v1318 = vsel %vm1310, %v1301, %v1317
    %v1319 = vsel %vm1309, %v1316, %v1318
    %v1320 = vsel %vm1308, %v1298, %v1301
    %v1321 = vsel %vm1311, %v1307, 1326507024
    %v1322 = vsel %vm1310, %v1304, %v1321
    %v1323 = vsel %vm1309, %v1320, %v1322
    %v1324 = vshll.u32 %v1284, 8
    %v1325 = vmul.u32.u64.compose %v1324, %v1323
    %v1326 = vextract.low.u32 %v1325
    %v1327 = vextract.high.u32 %v1325
    %v1328 = vmul.u32.u64.compose %v1324, %v1319
    %v1329 = vextract.low.u32 %v1328
    %v1330 = vextract.high.u32 %v1328
    %v1331 = vmul.u32 %v1324, %v1315
    %v1332 = vadd.s32 %v1327, %v1329
    %vm1333 = vc.u32 %v1327, %v1329
    %v1334 = vadd.s32 %v1330, 1
    %v1335 = vsel %vm1333, %v1334, %v1330
    %v1336 = vadd.s32 %v1331, %v1335
    %v1337 = vadd.s32 %v1336, 536870912
    %v1338 = vshrl.u32 %v1337, 30
    %v1339 = vshll.u32 %v1338, 30
    %v1340 = vsub.s32 %v1336, %v1339
    %vm1341 = vcmp.lt.s32.totalorder %v1340, 0
    %v1342 = vsub.s32 0, %v1340
    %v1343 = vsel %vm1341, %v1342, %v1340
    %v1344 = vclz %v1343
    %v1345 = vsub.s32 %v1344, 2
    %vm1346 = vcmp.gt.s32.totalorder 0, %v1345
    %v1347 = vsel %vm1346, 0, %v1345
    %v1348 = vsub.s32 32, %v1347
    %v1349 = vshll.u32 %v1340, %v1347
    %v1350 = vshrl.u32 %v1332, %v1348
    %v1351 = vor.u32 %v1349, %v1350
    %v1352 = vsub.s32 4294967266, %v1347
    %v1353 = vadd.s32 %v1352, 127
    %v1354 = vshll.u32 %v1353, 23
    %v1355 = vor.u32 4788187, %v1354
    %v1356 = vand.u32 2147483647, %v1355
    %v1358 = vcvt.s32.f32 %v1351
    %v1359 = vmul.f32 %v1358, %v1356
    %v1360 = vxor.u32 %v1359, 2147483648
    %v1361 = vsel %vm1278, %v1360, %v1359
    %v1362 = vsub.s32 4, %v1338
    %v1363 = vsel %vm1278, %v1362, %v1338
    %v1364 = vsel %vm1277, %v333, %v1361
    %v1365 = vsel %vm1277, 0, %v1363
    %v1366 = vcosq.f32.pop %v1364
    %v1367 = vsinq.f32.pop %v1364
    %vm1368 = vweird.f32 %v333
    %v1369 = vadd.s32 %v1365, 3
    %v1370 = vand.u32 %v1369, 3
    %vm1371 = vcmp.lt.s32.totalorder %v1370, 2
    %vm1372 = vcmp.eq.s32.totalorder %v1370, 0
    %v1373 = vxor.u32 %v1367, 2147483648
    %v1374 = vsel %vm1372, %v1366, %v1373
    %vm1375 = vcmp.eq.s32.totalorder %v1370, 2
    %v1376 = vxor.u32 %v1366, 2147483648
    %v1377 = vsel %vm1375, %v1376, %v1367
    %v1378 = vsel %vm1371, %v1374, %v1377
    %v1379 = vsel %vm1368, nan, %v1378
    %v1380 = vand.u32 2147483647, %v334
    %vm1381 = vcmp.le.f32.partialorder %v1380, 0.7853982
    %vm1382 = vcmp.lt.s32.totalorder %v334, 0
    %v1383 = vand.u32 %v334, 2139095040
    %v1384 = vshrl.u32 %v1383, 23
    %v1385 = vsub.s32 %v1384, 127
    %v1386 = vand.u32 2147483647, %v334
    %v1387 = vand.u32 %v1386, 8388607
    %v1388 = vor.u32 %v1387, 8388608
    %v1389 = vsub.s32 0, %v1388
    %v1390 = vadd.s32 %v1385, 1
    %vm1391 = vcmp.gt.s32.totalorder %v1390, 0
    %v1392 = vsel %vm1391, %v1390, 0
    %v1393 = vshrl.u32 %v1392, 5
    %v1394 = vand.u32 %v1392, 31
    %v1395 = vsub.s32 32, %v1394
    %v1396 = vshrl.u32 683565275, %v1395
    %v1397 = vshll.u32 683565275, %v1394
    %v1398 = vshrl.u32 2475754826, %v1395
    %v1399 = vor.u32 %v1397, %v1398
    %v1400 = vshll.u32 2475754826, %v1394
    %v1401 = vshrl.u32 2131351028, %v1395
    %v1402 = vor.u32 %v1400, %v1401
    %v1403 = vshll.u32 2131351028, %v1394
    %v1404 = vshrl.u32 2102212464, %v1395
    %v1405 = vor.u32 %v1403, %v1404
    %v1406 = vshll.u32 2102212464, %v1394
    %v1407 = vshrl.u32 920167782, %v1395
    %v1408 = vor.u32 %v1406, %v1407
    %v1409 = vshll.u32 920167782, %v1394
    %v1410 = vshrl.u32 1326507024, %v1395
    %v1411 = vor.u32 %v1409, %v1410
    %vm1412 = vcmp.lt.s32.totalorder %v1393, 1
    %vm1413 = vcmp.lt.s32.totalorder %v1393, 2
    %vm1414 = vcmp.lt.s32.totalorder %v1393, 3
    %vm1415 = vcmp.lt.s32.totalorder %v1393, 4
    %v1416 = vsel %vm1412, %v1396, %v1399
    %v1417 = vsel %vm1415, %v1405, 2102212464
    %v1418 = vsel %vm1414, %v1402, %v1417
    %v1419 = vsel %vm1413, %v1416, %v1418
    %v1420 = vsel %vm1412, %v1399, %v1402
    %v1421 = vsel %vm1415, %v1408, 920167782
    %v1422 = vsel %vm1414, %v1405, %v1421
    %v1423 = vsel %vm1413, %v1420, %v1422
    %v1424 = vsel %vm1412, %v1402, %v1405
    %v1425 = vsel %vm1415, %v1411, 1326507024
    %v1426 = vsel %vm1414, %v1408, %v1425
    %v1427 = vsel %vm1413, %v1424, %v1426
    %v1428 = vshll.u32 %v1388, 8
    %v1429 = vmul.u32.u64.compose %v1428, %v1427
    %v1430 = vextract.low.u32 %v1429
    %v1431 = vextract.high.u32 %v1429
    %v1432 = vmul.u32.u64.compose %v1428, %v1423
    %v1433 = vextract.low.u32 %v1432
    %v1434 = vextract.high.u32 %v1432
    %v1435 = vmul.u32 %v1428, %v1419
    %v1436 = vadd.s32 %v1431, %v1433
    %vm1437 = vc.u32 %v1431, %v1433
    %v1438 = vadd.s32 %v1434, 1
    %v1439 = vsel %vm1437, %v1438, %v1434
    %v1440 = vadd.s32 %v1435, %v1439
    %v1441 = vadd.s32 %v1440, 536870912
    %v1442 = vshrl.u32 %v1441, 30
    %v1443 = vshll.u32 %v1442, 30
    %v1444 = vsub.s32 %v1440, %v1443
    %vm1445 = vcmp.lt.s32.totalorder %v1444, 0
    %v1446 = vsub.s32 0, %v1444
    %v1447 = vsel %vm1445, %v1446, %v1444
    %v1448 = vclz %v1447
    %v1449 = vsub.s32 %v1448, 2
    %vm1450 = vcmp.gt.s32.totalorder 0, %v1449
    %v1451 = vsel %vm1450, 0, %v1449
    %v1452 = vsub.s32 32, %v1451
    %v1453 = vshll.u32 %v1444, %v1451
    %v1454 = vshrl.u32 %v1436, %v1452
    %v1455 = vor.u32 %v1453, %v1454
    %v1456 = vsub.s32 4294967266, %v1451
    %v1457 = vadd.s32 %v1456, 127
    %v1458 = vshll.u32 %v1457, 23
    %v1459 = vor.u32 4788187, %v1458
    %v1460 = vand.u32 2147483647, %v1459
    %v1462 = vcvt.s32.f32 %v1455
    %v1463 = vmul.f32 %v1462, %v1460
    %v1464 = vxor.u32 %v1463, 2147483648
    %v1465 = vsel %vm1382, %v1464, %v1463
    %v1466 = vsub.s32 4, %v1442
    %v1467 = vsel %vm1382, %v1466, %v1442
    %v1468 = vsel %vm1381, %v334, %v1465
    %v1469 = vsel %vm1381, 0, %v1467
    %v1470 = vcosq.f32.pop %v1468
    %v1471 = vsinq.f32.pop %v1468
    %vm1472 = vweird.f32 %v334
    %v1473 = vadd.s32 %v1469, 3
    %v1474 = vand.u32 %v1473, 3
    %vm1475 = vcmp.lt.s32.totalorder %v1474, 2
    %vm1476 = vcmp.eq.s32.totalorder %v1474, 0
    %v1477 = vxor.u32 %v1471, 2147483648
    %v1478 = vsel %vm1476, %v1470, %v1477
    %vm1479 = vcmp.eq.s32.totalorder %v1474, 2
    %v1480 = vxor.u32 %v1470, 2147483648
    %v1481 = vsel %vm1479, %v1480, %v1471
    %v1482 = vsel %vm1475, %v1478, %v1481
    %v1483 = vsel %vm1472, nan, %v1482
    %v1484 = vand.u32 2147483647, %v335
    %vm1485 = vcmp.le.f32.partialorder %v1484, 0.7853982
    %vm1486 = vcmp.lt.s32.totalorder %v335, 0
    %v1487 = vand.u32 %v335, 2139095040
    %v1488 = vshrl.u32 %v1487, 23
    %v1489 = vsub.s32 %v1488, 127
    %v1490 = vand.u32 2147483647, %v335
    %v1491 = vand.u32 %v1490, 8388607
    %v1492 = vor.u32 %v1491, 8388608
    %v1493 = vsub.s32 0, %v1492
    %v1494 = vadd.s32 %v1489, 1
    %vm1495 = vcmp.gt.s32.totalorder %v1494, 0
    %v1496 = vsel %vm1495, %v1494, 0
    %v1497 = vshrl.u32 %v1496, 5
    %v1498 = vand.u32 %v1496, 31
    %v1499 = vsub.s32 32, %v1498
    %v1500 = vshrl.u32 683565275, %v1499
    %v1501 = vshll.u32 683565275, %v1498
    %v1502 = vshrl.u32 2475754826, %v1499
    %v1503 = vor.u32 %v1501, %v1502
    %v1504 = vshll.u32 2475754826, %v1498
    %v1505 = vshrl.u32 2131351028, %v1499
    %v1506 = vor.u32 %v1504, %v1505
    %v1507 = vshll.u32 2131351028, %v1498
    %v1508 = vshrl.u32 2102212464, %v1499
    %v1509 = vor.u32 %v1507, %v1508
    %v1510 = vshll.u32 2102212464, %v1498
    %v1511 = vshrl.u32 920167782, %v1499
    %v1512 = vor.u32 %v1510, %v1511
    %v1513 = vshll.u32 920167782, %v1498
    %v1514 = vshrl.u32 1326507024, %v1499
    %v1515 = vor.u32 %v1513, %v1514
    %vm1516 = vcmp.lt.s32.totalorder %v1497, 1
    %vm1517 = vcmp.lt.s32.totalorder %v1497, 2
    %vm1518 = vcmp.lt.s32.totalorder %v1497, 3
    %vm1519 = vcmp.lt.s32.totalorder %v1497, 4
    %v1520 = vsel %vm1516, %v1500, %v1503
    %v1521 = vsel %vm1519, %v1509, 2102212464
    %v1522 = vsel %vm1518, %v1506, %v1521
    %v1523 = vsel %vm1517, %v1520, %v1522
    %v1524 = vsel %vm1516, %v1503, %v1506
    %v1525 = vsel %vm1519, %v1512, 920167782
    %v1526 = vsel %vm1518, %v1509, %v1525
    %v1527 = vsel %vm1517, %v1524, %v1526
    %v1528 = vsel %vm1516, %v1506, %v1509
    %v1529 = vsel %vm1519, %v1515, 1326507024
    %v1530 = vsel %vm1518, %v1512, %v1529
    %v1531 = vsel %vm1517, %v1528, %v1530
    %v1532 = vshll.u32 %v1492, 8
    %v1533 = vmul.u32.u64.compose %v1532, %v1531
    %v1534 = vextract.low.u32 %v1533
    %v1535 = vextract.high.u32 %v1533
    %v1536 = vmul.u32.u64.compose %v1532, %v1527
    %v1537 = vextract.low.u32 %v1536
    %v1538 = vextract.high.u32 %v1536
    %v1539 = vmul.u32 %v1532, %v1523
    %v1540 = vadd.s32 %v1535, %v1537
    %vm1541 = vc.u32 %v1535, %v1537
    %v1542 = vadd.s32 %v1538, 1
    %v1543 = vsel %vm1541, %v1542, %v1538
    %v1544 = vadd.s32 %v1539, %v1543
    %v1545 = vadd.s32 %v1544, 536870912
    %v1546 = vshrl.u32 %v1545, 30
    %v1547 = vshll.u32 %v1546, 30
    %v1548 = vsub.s32 %v1544, %v1547
    %vm1549 = vcmp.lt.s32.totalorder %v1548, 0
    %v1550 = vsub.s32 0, %v1548
    %v1551 = vsel %vm1549, %v1550, %v1548
    %v1552 = vclz %v1551
    %v1553 = vsub.s32 %v1552, 2
    %vm1554 = vcmp.gt.s32.totalorder 0, %v1553
    %v1555 = vsel %vm1554, 0, %v1553
    %v1556 = vsub.s32 32, %v1555
    %v1557 = vshll.u32 %v1548, %v1555
    %v1558 = vshrl.u32 %v1540, %v1556
    %v1559 = vor.u32 %v1557, %v1558
    %v1560 = vsub.s32 4294967266, %v1555
    %v1561 = vadd.s32 %v1560, 127
    %v1562 = vshll.u32 %v1561, 23
    %v1563 = vor.u32 4788187, %v1562
    %v1564 = vand.u32 2147483647, %v1563
    %v1566 = vcvt.s32.f32 %v1559
    %v1567 = vmul.f32 %v1566, %v1564
    %v1568 = vxor.u32 %v1567, 2147483648
    %v1569 = vsel %vm1486, %v1568, %v1567
    %v1570 = vsub.s32 4, %v1546
    %v1571 = vsel %vm1486, %v1570, %v1546
    %v1572 = vsel %vm1485, %v335, %v1569
    %v1573 = vsel %vm1485, 0, %v1571
    %v1574 = vcosq.f32.pop %v1572
    %v1575 = vsinq.f32.pop %v1572
    %vm1576 = vweird.f32 %v335
    %v1577 = vadd.s32 %v1573, 3
    %v1578 = vand.u32 %v1577, 3
    %vm1579 = vcmp.lt.s32.totalorder %v1578, 2
    %vm1580 = vcmp.eq.s32.totalorder %v1578, 0
    %v1581 = vxor.u32 %v1575, 2147483648
    %v1582 = vsel %vm1580, %v1574, %v1581
    %vm1583 = vcmp.eq.s32.totalorder %v1578, 2
    %v1584 = vxor.u32 %v1574, 2147483648
    %v1585 = vsel %vm1583, %v1584, %v1575
    %v1586 = vsel %vm1579, %v1582, %v1585
    %v1587 = vsel %vm1576, nan, %v1586
    %v1588 = vand.u32 2147483647, %v336
    %vm1589 = vcmp.le.f32.partialorder %v1588, 0.7853982
    %vm1590 = vcmp.lt.s32.totalorder %v336, 0
    %v1591 = vand.u32 %v336, 2139095040
    %v1592 = vshrl.u32 %v1591, 23
    %v1593 = vsub.s32 %v1592, 127
    %v1594 = vand.u32 2147483647, %v336
    %v1595 = vand.u32 %v1594, 8388607
    %v1596 = vor.u32 %v1595, 8388608
    %v1597 = vsub.s32 0, %v1596
    %v1598 = vadd.s32 %v1593, 1
    %vm1599 = vcmp.gt.s32.totalorder %v1598, 0
    %v1600 = vsel %vm1599, %v1598, 0
    %v1601 = vshrl.u32 %v1600, 5
    %v1602 = vand.u32 %v1600, 31
    %v1603 = vsub.s32 32, %v1602
    %v1604 = vshrl.u32 683565275, %v1603
    %v1605 = vshll.u32 683565275, %v1602
    %v1606 = vshrl.u32 2475754826, %v1603
    %v1607 = vor.u32 %v1605, %v1606
    %v1608 = vshll.u32 2475754826, %v1602
    %v1609 = vshrl.u32 2131351028, %v1603
    %v1610 = vor.u32 %v1608, %v1609
    %v1611 = vshll.u32 2131351028, %v1602
    %v1612 = vshrl.u32 2102212464, %v1603
    %v1613 = vor.u32 %v1611, %v1612
    %v1614 = vshll.u32 2102212464, %v1602
    %v1615 = vshrl.u32 920167782, %v1603
    %v1616 = vor.u32 %v1614, %v1615
    %v1617 = vshll.u32 920167782, %v1602
    %v1618 = vshrl.u32 1326507024, %v1603
    %v1619 = vor.u32 %v1617, %v1618
    %vm1620 = vcmp.lt.s32.totalorder %v1601, 1
    %vm1621 = vcmp.lt.s32.totalorder %v1601, 2
    %vm1622 = vcmp.lt.s32.totalorder %v1601, 3
    %vm1623 = vcmp.lt.s32.totalorder %v1601, 4
    %v1624 = vsel %vm1620, %v1604, %v1607
    %v1625 = vsel %vm1623, %v1613, 2102212464
    %v1626 = vsel %vm1622, %v1610, %v1625
    %v1627 = vsel %vm1621, %v1624, %v1626
    %v1628 = vsel %vm1620, %v1607, %v1610
    %v1629 = vsel %vm1623, %v1616, 920167782
    %v1630 = vsel %vm1622, %v1613, %v1629
    %v1631 = vsel %vm1621, %v1628, %v1630
    %v1632 = vsel %vm1620, %v1610, %v1613
    %v1633 = vsel %vm1623, %v1619, 1326507024
    %v1634 = vsel %vm1622, %v1616, %v1633
    %v1635 = vsel %vm1621, %v1632, %v1634
    %v1636 = vshll.u32 %v1596, 8
    %v1637 = vmul.u32.u64.compose %v1636, %v1635
    %v1638 = vextract.low.u32 %v1637
    %v1639 = vextract.high.u32 %v1637
    %v1640 = vmul.u32.u64.compose %v1636, %v1631
    %v1641 = vextract.low.u32 %v1640
    %v1642 = vextract.high.u32 %v1640
    %v1643 = vmul.u32 %v1636, %v1627
    %v1644 = vadd.s32 %v1639, %v1641
    %vm1645 = vc.u32 %v1639, %v1641
    %v1646 = vadd.s32 %v1642, 1
    %v1647 = vsel %vm1645, %v1646, %v1642
    %v1648 = vadd.s32 %v1643, %v1647
    %v1649 = vadd.s32 %v1648, 536870912
    %v1650 = vshrl.u32 %v1649, 30
    %v1651 = vshll.u32 %v1650, 30
    %v1652 = vsub.s32 %v1648, %v1651
    %vm1653 = vcmp.lt.s32.totalorder %v1652, 0
    %v1654 = vsub.s32 0, %v1652
    %v1655 = vsel %vm1653, %v1654, %v1652
    %v1656 = vclz %v1655
    %v1657 = vsub.s32 %v1656, 2
    %vm1658 = vcmp.gt.s32.totalorder 0, %v1657
    %v1659 = vsel %vm1658, 0, %v1657
    %v1660 = vsub.s32 32, %v1659
    %v1661 = vshll.u32 %v1652, %v1659
    %v1662 = vshrl.u32 %v1644, %v1660
    %v1663 = vor.u32 %v1661, %v1662
    %v1664 = vsub.s32 4294967266, %v1659
    %v1665 = vadd.s32 %v1664, 127
    %v1666 = vshll.u32 %v1665, 23
    %v1667 = vor.u32 4788187, %v1666
    %v1668 = vand.u32 2147483647, %v1667
    %v1670 = vcvt.s32.f32 %v1663
    %v1671 = vmul.f32 %v1670, %v1668
    %v1672 = vxor.u32 %v1671, 2147483648
    %v1673 = vsel %vm1590, %v1672, %v1671
    %v1674 = vsub.s32 4, %v1650
    %v1675 = vsel %vm1590, %v1674, %v1650
    %v1676 = vsel %vm1589, %v336, %v1673
    %v1677 = vsel %vm1589, 0, %v1675
    %v1678 = vcosq.f32.pop %v1676
    %v1679 = vsinq.f32.pop %v1676
    %vm1680 = vweird.f32 %v336
    %v1681 = vadd.s32 %v1677, 3
    %v1682 = vand.u32 %v1681, 3
    %vm1683 = vcmp.lt.s32.totalorder %v1682, 2
    %vm1684 = vcmp.eq.s32.totalorder %v1682, 0
    %v1685 = vxor.u32 %v1679, 2147483648
    %v1686 = vsel %vm1684, %v1678, %v1685
    %vm1687 = vcmp.eq.s32.totalorder %v1682, 2
    %v1688 = vxor.u32 %v1678, 2147483648
    %v1689 = vsel %vm1687, %v1688, %v1679
    %v1690 = vsel %vm1683, %v1686, %v1689
    %v1691 = vsel %vm1680, nan, %v1690
    %v1692 = vand.u32 2147483647, %v337
    %vm1693 = vcmp.le.f32.partialorder %v1692, 0.7853982
    %vm1694 = vcmp.lt.s32.totalorder %v337, 0
    %v1695 = vand.u32 %v337, 2139095040
    %v1696 = vshrl.u32 %v1695, 23
    %v1697 = vsub.s32 %v1696, 127
    %v1698 = vand.u32 2147483647, %v337
    %v1699 = vand.u32 %v1698, 8388607
    %v1700 = vor.u32 %v1699, 8388608
    %v1701 = vsub.s32 0, %v1700
    %v1702 = vadd.s32 %v1697, 1
    %vm1703 = vcmp.gt.s32.totalorder %v1702, 0
    %v1704 = vsel %vm1703, %v1702, 0
    %v1705 = vshrl.u32 %v1704, 5
    %v1706 = vand.u32 %v1704, 31
    %v1707 = vsub.s32 32, %v1706
    %v1708 = vshrl.u32 683565275, %v1707
    %v1709 = vshll.u32 683565275, %v1706
    %v1710 = vshrl.u32 2475754826, %v1707
    %v1711 = vor.u32 %v1709, %v1710
    %v1712 = vshll.u32 2475754826, %v1706
    %v1713 = vshrl.u32 2131351028, %v1707
    %v1714 = vor.u32 %v1712, %v1713
    %v1715 = vshll.u32 2131351028, %v1706
    %v1716 = vshrl.u32 2102212464, %v1707
    %v1717 = vor.u32 %v1715, %v1716
    %v1718 = vshll.u32 2102212464, %v1706
    %v1719 = vshrl.u32 920167782, %v1707
    %v1720 = vor.u32 %v1718, %v1719
    %v1721 = vshll.u32 920167782, %v1706
    %v1722 = vshrl.u32 1326507024, %v1707
    %v1723 = vor.u32 %v1721, %v1722
    %vm1724 = vcmp.lt.s32.totalorder %v1705, 1
    %vm1725 = vcmp.lt.s32.totalorder %v1705, 2
    %vm1726 = vcmp.lt.s32.totalorder %v1705, 3
    %vm1727 = vcmp.lt.s32.totalorder %v1705, 4
    %v1728 = vsel %vm1724, %v1708, %v1711
    %v1729 = vsel %vm1727, %v1717, 2102212464
    %v1730 = vsel %vm1726, %v1714, %v1729
    %v1731 = vsel %vm1725, %v1728, %v1730
    %v1732 = vsel %vm1724, %v1711, %v1714
    %v1733 = vsel %vm1727, %v1720, 920167782
    %v1734 = vsel %vm1726, %v1717, %v1733
    %v1735 = vsel %vm1725, %v1732, %v1734
    %v1736 = vsel %vm1724, %v1714, %v1717
    %v1737 = vsel %vm1727, %v1723, 1326507024
    %v1738 = vsel %vm1726, %v1720, %v1737
    %v1739 = vsel %vm1725, %v1736, %v1738
    %v1740 = vshll.u32 %v1700, 8
    %v1741 = vmul.u32.u64.compose %v1740, %v1739
    %v1742 = vextract.low.u32 %v1741
    %v1743 = vextract.high.u32 %v1741
    %v1744 = vmul.u32.u64.compose %v1740, %v1735
    %v1745 = vextract.low.u32 %v1744
    %v1746 = vextract.high.u32 %v1744
    %v1747 = vmul.u32 %v1740, %v1731
    %v1748 = vadd.s32 %v1743, %v1745
    %vm1749 = vc.u32 %v1743, %v1745
    %v1750 = vadd.s32 %v1746, 1
    %v1751 = vsel %vm1749, %v1750, %v1746
    %v1752 = vadd.s32 %v1747, %v1751
    %v1753 = vadd.s32 %v1752, 536870912
    %v1754 = vshrl.u32 %v1753, 30
    %v1755 = vshll.u32 %v1754, 30
    %v1756 = vsub.s32 %v1752, %v1755
    %vm1757 = vcmp.lt.s32.totalorder %v1756, 0
    %v1758 = vsub.s32 0, %v1756
    %v1759 = vsel %vm1757, %v1758, %v1756
    %v1760 = vclz %v1759
    %v1761 = vsub.s32 %v1760, 2
    %vm1762 = vcmp.gt.s32.totalorder 0, %v1761
    %v1763 = vsel %vm1762, 0, %v1761
    %v1764 = vsub.s32 32, %v1763
    %v1765 = vshll.u32 %v1756, %v1763
    %v1766 = vshrl.u32 %v1748, %v1764
    %v1767 = vor.u32 %v1765, %v1766
    %v1768 = vsub.s32 4294967266, %v1763
    %v1769 = vadd.s32 %v1768, 127
    %v1770 = vshll.u32 %v1769, 23
    %v1771 = vor.u32 4788187, %v1770
    %v1772 = vand.u32 2147483647, %v1771
    %v1774 = vcvt.s32.f32 %v1767
    %v1775 = vmul.f32 %v1774, %v1772
    %v1776 = vxor.u32 %v1775, 2147483648
    %v1777 = vsel %vm1694, %v1776, %v1775
    %v1778 = vsub.s32 4, %v1754
    %v1779 = vsel %vm1694, %v1778, %v1754
    %v1780 = vsel %vm1693, %v337, %v1777
    %v1781 = vsel %vm1693, 0, %v1779
    %v1782 = vcosq.f32.pop %v1780
    %v1783 = vsinq.f32.pop %v1780
    %vm1784 = vweird.f32 %v337
    %v1785 = vadd.s32 %v1781, 3
    %v1786 = vand.u32 %v1785, 3
    %vm1787 = vcmp.lt.s32.totalorder %v1786, 2
    %vm1788 = vcmp.eq.s32.totalorder %v1786, 0
    %v1789 = vxor.u32 %v1783, 2147483648
    %v1790 = vsel %vm1788, %v1782, %v1789
    %vm1791 = vcmp.eq.s32.totalorder %v1786, 2
    %v1792 = vxor.u32 %v1782, 2147483648
    %v1793 = vsel %vm1791, %v1792, %v1783
    %v1794 = vsel %vm1787, %v1790, %v1793
    %v1795 = vsel %vm1784, nan, %v1794
    %v1796 = vand.u32 2147483647, %v338
    %vm1797 = vcmp.le.f32.partialorder %v1796, 0.7853982
    %vm1798 = vcmp.lt.s32.totalorder %v338, 0
    %v1799 = vand.u32 %v338, 2139095040
    %v1800 = vshrl.u32 %v1799, 23
    %v1801 = vsub.s32 %v1800, 127
    %v1802 = vand.u32 2147483647, %v338
    %v1803 = vand.u32 %v1802, 8388607
    %v1804 = vor.u32 %v1803, 8388608
    %v1805 = vsub.s32 0, %v1804
    %v1806 = vadd.s32 %v1801, 1
    %vm1807 = vcmp.gt.s32.totalorder %v1806, 0
    %v1808 = vsel %vm1807, %v1806, 0
    %v1809 = vshrl.u32 %v1808, 5
    %v1810 = vand.u32 %v1808, 31
    %v1811 = vsub.s32 32, %v1810
    %v1812 = vshrl.u32 683565275, %v1811
    %v1813 = vshll.u32 683565275, %v1810
    %v1814 = vshrl.u32 2475754826, %v1811
    %v1815 = vor.u32 %v1813, %v1814
    %v1816 = vshll.u32 2475754826, %v1810
    %v1817 = vshrl.u32 2131351028, %v1811
    %v1818 = vor.u32 %v1816, %v1817
    %v1819 = vshll.u32 2131351028, %v1810
    %v1820 = vshrl.u32 2102212464, %v1811
    %v1821 = vor.u32 %v1819, %v1820
    %v1822 = vshll.u32 2102212464, %v1810
    %v1823 = vshrl.u32 920167782, %v1811
    %v1824 = vor.u32 %v1822, %v1823
    %v1825 = vshll.u32 920167782, %v1810
    %v1826 = vshrl.u32 1326507024, %v1811
    %v1827 = vor.u32 %v1825, %v1826
    %vm1828 = vcmp.lt.s32.totalorder %v1809, 1
    %vm1829 = vcmp.lt.s32.totalorder %v1809, 2
    %vm1830 = vcmp.lt.s32.totalorder %v1809, 3
    %vm1831 = vcmp.lt.s32.totalorder %v1809, 4
    %v1832 = vsel %vm1828, %v1812, %v1815
    %v1833 = vsel %vm1831, %v1821, 2102212464
    %v1834 = vsel %vm1830, %v1818, %v1833
    %v1835 = vsel %vm1829, %v1832, %v1834
    %v1836 = vsel %vm1828, %v1815, %v1818
    %v1837 = vsel %vm1831, %v1824, 920167782
    %v1838 = vsel %vm1830, %v1821, %v1837
    %v1839 = vsel %vm1829, %v1836, %v1838
    %v1840 = vsel %vm1828, %v1818, %v1821
    %v1841 = vsel %vm1831, %v1827, 1326507024
    %v1842 = vsel %vm1830, %v1824, %v1841
    %v1843 = vsel %vm1829, %v1840, %v1842
    %v1844 = vshll.u32 %v1804, 8
    %v1845 = vmul.u32.u64.compose %v1844, %v1843
    %v1846 = vextract.low.u32 %v1845
    %v1847 = vextract.high.u32 %v1845
    %v1848 = vmul.u32.u64.compose %v1844, %v1839
    %v1849 = vextract.low.u32 %v1848
    %v1850 = vextract.high.u32 %v1848
    %v1851 = vmul.u32 %v1844, %v1835
    %v1852 = vadd.s32 %v1847, %v1849
    %vm1853 = vc.u32 %v1847, %v1849
    %v1854 = vadd.s32 %v1850, 1
    %v1855 = vsel %vm1853, %v1854, %v1850
    %v1856 = vadd.s32 %v1851, %v1855
    %v1857 = vadd.s32 %v1856, 536870912
    %v1858 = vshrl.u32 %v1857, 30
    %v1859 = vshll.u32 %v1858, 30
    %v1860 = vsub.s32 %v1856, %v1859
    %vm1861 = vcmp.lt.s32.totalorder %v1860, 0
    %v1862 = vsub.s32 0, %v1860
    %v1863 = vsel %vm1861, %v1862, %v1860
    %v1864 = vclz %v1863
    %v1865 = vsub.s32 %v1864, 2
    %vm1866 = vcmp.gt.s32.totalorder 0, %v1865
    %v1867 = vsel %vm1866, 0, %v1865
    %v1868 = vsub.s32 32, %v1867
    %v1869 = vshll.u32 %v1860, %v1867
    %v1870 = vshrl.u32 %v1852, %v1868
    %v1871 = vor.u32 %v1869, %v1870
    %v1872 = vsub.s32 4294967266, %v1867
    %v1873 = vadd.s32 %v1872, 127
    %v1874 = vshll.u32 %v1873, 23
    %v1875 = vor.u32 4788187, %v1874
    %v1876 = vand.u32 2147483647, %v1875
    %v1878 = vcvt.s32.f32 %v1871
    %v1879 = vmul.f32 %v1878, %v1876
    %v1880 = vxor.u32 %v1879, 2147483648
    %v1881 = vsel %vm1798, %v1880, %v1879
    %v1882 = vsub.s32 4, %v1858
    %v1883 = vsel %vm1798, %v1882, %v1858
    %v1884 = vsel %vm1797, %v338, %v1881
    %v1885 = vsel %vm1797, 0, %v1883
    %v1886 = vcosq.f32.pop %v1884
    %v1887 = vsinq.f32.pop %v1884
    %vm1888 = vweird.f32 %v338
    %v1889 = vadd.s32 %v1885, 3
    %v1890 = vand.u32 %v1889, 3
    %vm1891 = vcmp.lt.s32.totalorder %v1890, 2
    %vm1892 = vcmp.eq.s32.totalorder %v1890, 0
    %v1893 = vxor.u32 %v1887, 2147483648
    %v1894 = vsel %vm1892, %v1886, %v1893
    %vm1895 = vcmp.eq.s32.totalorder %v1890, 2
    %v1896 = vxor.u32 %v1886, 2147483648
    %v1897 = vsel %vm1895, %v1896, %v1887
    %v1898 = vsel %vm1891, %v1894, %v1897
    %v1899 = vsel %vm1888, nan, %v1898
    %v1900 = vand.u32 2147483647, %v339
    %vm1901 = vcmp.le.f32.partialorder %v1900, 0.7853982
    %vm1902 = vcmp.lt.s32.totalorder %v339, 0
    %v1903 = vand.u32 %v339, 2139095040
    %v1904 = vshrl.u32 %v1903, 23
    %v1905 = vsub.s32 %v1904, 127
    %v1906 = vand.u32 2147483647, %v339
    %v1907 = vand.u32 %v1906, 8388607
    %v1908 = vor.u32 %v1907, 8388608
    %v1909 = vsub.s32 0, %v1908
    %v1910 = vadd.s32 %v1905, 1
    %vm1911 = vcmp.gt.s32.totalorder %v1910, 0
    %v1912 = vsel %vm1911, %v1910, 0
    %v1913 = vshrl.u32 %v1912, 5
    %v1914 = vand.u32 %v1912, 31
    %v1915 = vsub.s32 32, %v1914
    %v1916 = vshrl.u32 683565275, %v1915
    %v1917 = vshll.u32 683565275, %v1914
    %v1918 = vshrl.u32 2475754826, %v1915
    %v1919 = vor.u32 %v1917, %v1918
    %v1920 = vshll.u32 2475754826, %v1914
    %v1921 = vshrl.u32 2131351028, %v1915
    %v1922 = vor.u32 %v1920, %v1921
    %v1923 = vshll.u32 2131351028, %v1914
    %v1924 = vshrl.u32 2102212464, %v1915
    %v1925 = vor.u32 %v1923, %v1924
    %v1926 = vshll.u32 2102212464, %v1914
    %v1927 = vshrl.u32 920167782, %v1915
    %v1928 = vor.u32 %v1926, %v1927
    %v1929 = vshll.u32 920167782, %v1914
    %v1930 = vshrl.u32 1326507024, %v1915
    %v1931 = vor.u32 %v1929, %v1930
    %vm1932 = vcmp.lt.s32.totalorder %v1913, 1
    %vm1933 = vcmp.lt.s32.totalorder %v1913, 2
    %vm1934 = vcmp.lt.s32.totalorder %v1913, 3
    %vm1935 = vcmp.lt.s32.totalorder %v1913, 4
    %v1936 = vsel %vm1932, %v1916, %v1919
    %v1937 = vsel %vm1935, %v1925, 2102212464
    %v1938 = vsel %vm1934, %v1922, %v1937
    %v1939 = vsel %vm1933, %v1936, %v1938
    %v1940 = vsel %vm1932, %v1919, %v1922
    %v1941 = vsel %vm1935, %v1928, 920167782
    %v1942 = vsel %vm1934, %v1925, %v1941
    %v1943 = vsel %vm1933, %v1940, %v1942
    %v1944 = vsel %vm1932, %v1922, %v1925
    %v1945 = vsel %vm1935, %v1931, 1326507024
    %v1946 = vsel %vm1934, %v1928, %v1945
    %v1947 = vsel %vm1933, %v1944, %v1946
    %v1948 = vshll.u32 %v1908, 8
    %v1949 = vmul.u32.u64.compose %v1948, %v1947
    %v1950 = vextract.low.u32 %v1949
    %v1951 = vextract.high.u32 %v1949
    %v1952 = vmul.u32.u64.compose %v1948, %v1943
    %v1953 = vextract.low.u32 %v1952
    %v1954 = vextract.high.u32 %v1952
    %v1955 = vmul.u32 %v1948, %v1939
    %v1956 = vadd.s32 %v1951, %v1953
    %vm1957 = vc.u32 %v1951, %v1953
    %v1958 = vadd.s32 %v1954, 1
    %v1959 = vsel %vm1957, %v1958, %v1954
    %v1960 = vadd.s32 %v1955, %v1959
    %v1961 = vadd.s32 %v1960, 536870912
    %v1962 = vshrl.u32 %v1961, 30
    %v1963 = vshll.u32 %v1962, 30
    %v1964 = vsub.s32 %v1960, %v1963
    %vm1965 = vcmp.lt.s32.totalorder %v1964, 0
    %v1966 = vsub.s32 0, %v1964
    %v1967 = vsel %vm1965, %v1966, %v1964
    %v1968 = vclz %v1967
    %v1969 = vsub.s32 %v1968, 2
    %vm1970 = vcmp.gt.s32.totalorder 0, %v1969
    %v1971 = vsel %vm1970, 0, %v1969
    %v1972 = vsub.s32 32, %v1971
    %v1973 = vshll.u32 %v1964, %v1971
    %v1974 = vshrl.u32 %v1956, %v1972
    %v1975 = vor.u32 %v1973, %v1974
    %v1976 = vsub.s32 4294967266, %v1971
    %v1977 = vadd.s32 %v1976, 127
    %v1978 = vshll.u32 %v1977, 23
    %v1979 = vor.u32 4788187, %v1978
    %v1980 = vand.u32 2147483647, %v1979
    %v1982 = vcvt.s32.f32 %v1975
    %v1983 = vmul.f32 %v1982, %v1980
    %v1984 = vxor.u32 %v1983, 2147483648
    %v1985 = vsel %vm1902, %v1984, %v1983
    %v1986 = vsub.s32 4, %v1962
    %v1987 = vsel %vm1902, %v1986, %v1962
    %v1988 = vsel %vm1901, %v339, %v1985
    %v1989 = vsel %vm1901, 0, %v1987
    %v1990 = vcosq.f32.pop %v1988
    %v1991 = vsinq.f32.pop %v1988
    %vm1992 = vweird.f32 %v339
    %v1993 = vadd.s32 %v1989, 3
    %v1994 = vand.u32 %v1993, 3
    %vm1995 = vcmp.lt.s32.totalorder %v1994, 2
    %vm1996 = vcmp.eq.s32.totalorder %v1994, 0
    %v1997 = vxor.u32 %v1991, 2147483648
    %v1998 = vsel %vm1996, %v1990, %v1997
    %vm1999 = vcmp.eq.s32.totalorder %v1994, 2
    %v2000 = vxor.u32 %v1990, 2147483648
    %v2001 = vsel %vm1999, %v2000, %v1991
    %v2002 = vsel %vm1995, %v1998, %v2001
    %v2003 = vsel %vm1992, nan, %v2002
    %v2004 = vand.u32 2147483647, %v324
    %vm2005 = vcmp.le.f32.partialorder %v2004, 0.7853982
    %vm2006 = vcmp.lt.s32.totalorder %v324, 0
    %v2007 = vand.u32 %v324, 2139095040
    %v2008 = vshrl.u32 %v2007, 23
    %v2009 = vsub.s32 %v2008, 127
    %v2010 = vand.u32 2147483647, %v324
    %v2011 = vand.u32 %v2010, 8388607
    %v2012 = vor.u32 %v2011, 8388608
    %v2013 = vsub.s32 0, %v2012
    %v2014 = vadd.s32 %v2009, 1
    %vm2015 = vcmp.gt.s32.totalorder %v2014, 0
    %v2016 = vsel %vm2015, %v2014, 0
    %v2017 = vshrl.u32 %v2016, 5
    %v2018 = vand.u32 %v2016, 31
    %v2019 = vsub.s32 32, %v2018
    %v2020 = vshrl.u32 683565275, %v2019
    %v2021 = vshll.u32 683565275, %v2018
    %v2022 = vshrl.u32 2475754826, %v2019
    %v2023 = vor.u32 %v2021, %v2022
    %v2024 = vshll.u32 2475754826, %v2018
    %v2025 = vshrl.u32 2131351028, %v2019
    %v2026 = vor.u32 %v2024, %v2025
    %v2027 = vshll.u32 2131351028, %v2018
    %v2028 = vshrl.u32 2102212464, %v2019
    %v2029 = vor.u32 %v2027, %v2028
    %v2030 = vshll.u32 2102212464, %v2018
    %v2031 = vshrl.u32 920167782, %v2019
    %v2032 = vor.u32 %v2030, %v2031
    %v2033 = vshll.u32 920167782, %v2018
    %v2034 = vshrl.u32 1326507024, %v2019
    %v2035 = vor.u32 %v2033, %v2034
    %vm2036 = vcmp.lt.s32.totalorder %v2017, 1
    %vm2037 = vcmp.lt.s32.totalorder %v2017, 2
    %vm2038 = vcmp.lt.s32.totalorder %v2017, 3
    %vm2039 = vcmp.lt.s32.totalorder %v2017, 4
    %v2040 = vsel %vm2036, %v2020, %v2023
    %v2041 = vsel %vm2039, %v2029, 2102212464
    %v2042 = vsel %vm2038, %v2026, %v2041
    %v2043 = vsel %vm2037, %v2040, %v2042
    %v2044 = vsel %vm2036, %v2023, %v2026
    %v2045 = vsel %vm2039, %v2032, 920167782
    %v2046 = vsel %vm2038, %v2029, %v2045
    %v2047 = vsel %vm2037, %v2044, %v2046
    %v2048 = vsel %vm2036, %v2026, %v2029
    %v2049 = vsel %vm2039, %v2035, 1326507024
    %v2050 = vsel %vm2038, %v2032, %v2049
    %v2051 = vsel %vm2037, %v2048, %v2050
    %v2052 = vshll.u32 %v2012, 8
    %v2053 = vmul.u32.u64.compose %v2052, %v2051
    %v2054 = vextract.low.u32 %v2053
    %v2055 = vextract.high.u32 %v2053
    %v2056 = vmul.u32.u64.compose %v2052, %v2047
    %v2057 = vextract.low.u32 %v2056
    %v2058 = vextract.high.u32 %v2056
    %v2059 = vmul.u32 %v2052, %v2043
    %v2060 = vadd.s32 %v2055, %v2057
    %vm2061 = vc.u32 %v2055, %v2057
    %v2062 = vadd.s32 %v2058, 1
    %v2063 = vsel %vm2061, %v2062, %v2058
    %v2064 = vadd.s32 %v2059, %v2063
    %v2065 = vadd.s32 %v2064, 536870912
    %v2066 = vshrl.u32 %v2065, 30
    %v2067 = vshll.u32 %v2066, 30
    %v2068 = vsub.s32 %v2064, %v2067
    %vm2069 = vcmp.lt.s32.totalorder %v2068, 0
    %v2070 = vsub.s32 0, %v2068
    %v2071 = vsel %vm2069, %v2070, %v2068
    %v2072 = vclz %v2071
    %v2073 = vsub.s32 %v2072, 2
    %vm2074 = vcmp.gt.s32.totalorder 0, %v2073
    %v2075 = vsel %vm2074, 0, %v2073
    %v2076 = vsub.s32 32, %v2075
    %v2077 = vshll.u32 %v2068, %v2075
    %v2078 = vshrl.u32 %v2060, %v2076
    %v2079 = vor.u32 %v2077, %v2078
    %v2080 = vsub.s32 4294967266, %v2075
    %v2081 = vadd.s32 %v2080, 127
    %v2082 = vshll.u32 %v2081, 23
    %v2083 = vor.u32 4788187, %v2082
    %v2084 = vand.u32 2147483647, %v2083
    %v2086 = vcvt.s32.f32 %v2079
    %v2087 = vmul.f32 %v2086, %v2084
    %v2088 = vxor.u32 %v2087, 2147483648
    %v2089 = vsel %vm2006, %v2088, %v2087
    %v2090 = vsub.s32 4, %v2066
    %v2091 = vsel %vm2006, %v2090, %v2066
    %v2092 = vsel %vm2005, %v324, %v2089
    %v2093 = vsel %vm2005, 0, %v2091
    %v2094 = vcosq.f32.pop %v2092
    %v2095 = vsinq.f32.pop %v2092
    %vm2096 = vweird.f32 %v324
    %v2097 = vand.u32 %v2093, 3
    %vm2098 = vcmp.lt.s32.totalorder %v2097, 2
    %vm2099 = vcmp.eq.s32.totalorder %v2097, 0
    %v2100 = vxor.u32 %v2095, 2147483648
    %v2101 = vsel %vm2099, %v2094, %v2100
    %vm2102 = vcmp.eq.s32.totalorder %v2097, 2
    %v2103 = vxor.u32 %v2094, 2147483648
    %v2104 = vsel %vm2102, %v2103, %v2095
    %v2105 = vsel %vm2098, %v2101, %v2104
    %v2106 = vsel %vm2096, nan, %v2105
    %v2107 = vand.u32 2147483647, %v325
    %vm2108 = vcmp.le.f32.partialorder %v2107, 0.7853982
    %vm2109 = vcmp.lt.s32.totalorder %v325, 0
    %v2110 = vand.u32 %v325, 2139095040
    %v2111 = vshrl.u32 %v2110, 23
    %v2112 = vsub.s32 %v2111, 127
    %v2113 = vand.u32 2147483647, %v325
    %v2114 = vand.u32 %v2113, 8388607
    %v2115 = vor.u32 %v2114, 8388608
    %v2116 = vsub.s32 0, %v2115
    %v2117 = vadd.s32 %v2112, 1
    %vm2118 = vcmp.gt.s32.totalorder %v2117, 0
    %v2119 = vsel %vm2118, %v2117, 0
    %v2120 = vshrl.u32 %v2119, 5
    %v2121 = vand.u32 %v2119, 31
    %v2122 = vsub.s32 32, %v2121
    %v2123 = vshrl.u32 683565275, %v2122
    %v2124 = vshll.u32 683565275, %v2121
    %v2125 = vshrl.u32 2475754826, %v2122
    %v2126 = vor.u32 %v2124, %v2125
    %v2127 = vshll.u32 2475754826, %v2121
    %v2128 = vshrl.u32 2131351028, %v2122
    %v2129 = vor.u32 %v2127, %v2128
    %v2130 = vshll.u32 2131351028, %v2121
    %v2131 = vshrl.u32 2102212464, %v2122
    %v2132 = vor.u32 %v2130, %v2131
    %v2133 = vshll.u32 2102212464, %v2121
    %v2134 = vshrl.u32 920167782, %v2122
    %v2135 = vor.u32 %v2133, %v2134
    %v2136 = vshll.u32 920167782, %v2121
    %v2137 = vshrl.u32 1326507024, %v2122
    %v2138 = vor.u32 %v2136, %v2137
    %vm2139 = vcmp.lt.s32.totalorder %v2120, 1
    %vm2140 = vcmp.lt.s32.totalorder %v2120, 2
    %vm2141 = vcmp.lt.s32.totalorder %v2120, 3
    %vm2142 = vcmp.lt.s32.totalorder %v2120, 4
    %v2143 = vsel %vm2139, %v2123, %v2126
    %v2144 = vsel %vm2142, %v2132, 2102212464
    %v2145 = vsel %vm2141, %v2129, %v2144
    %v2146 = vsel %vm2140, %v2143, %v2145
    %v2147 = vsel %vm2139, %v2126, %v2129
    %v2148 = vsel %vm2142, %v2135, 920167782
    %v2149 = vsel %vm2141, %v2132, %v2148
    %v2150 = vsel %vm2140, %v2147, %v2149
    %v2151 = vsel %vm2139, %v2129, %v2132
    %v2152 = vsel %vm2142, %v2138, 1326507024
    %v2153 = vsel %vm2141, %v2135, %v2152
    %v2154 = vsel %vm2140, %v2151, %v2153
    %v2155 = vshll.u32 %v2115, 8
    %v2156 = vmul.u32.u64.compose %v2155, %v2154
    %v2157 = vextract.low.u32 %v2156
    %v2158 = vextract.high.u32 %v2156
    %v2159 = vmul.u32.u64.compose %v2155, %v2150
    %v2160 = vextract.low.u32 %v2159
    %v2161 = vextract.high.u32 %v2159
    %v2162 = vmul.u32 %v2155, %v2146
    %v2163 = vadd.s32 %v2158, %v2160
    %vm2164 = vc.u32 %v2158, %v2160
    %v2165 = vadd.s32 %v2161, 1
    %v2166 = vsel %vm2164, %v2165, %v2161
    %v2167 = vadd.s32 %v2162, %v2166
    %v2168 = vadd.s32 %v2167, 536870912
    %v2169 = vshrl.u32 %v2168, 30
    %v2170 = vshll.u32 %v2169, 30
    %v2171 = vsub.s32 %v2167, %v2170
    %vm2172 = vcmp.lt.s32.totalorder %v2171, 0
    %v2173 = vsub.s32 0, %v2171
    %v2174 = vsel %vm2172, %v2173, %v2171
    %v2175 = vclz %v2174
    %v2176 = vsub.s32 %v2175, 2
    %vm2177 = vcmp.gt.s32.totalorder 0, %v2176
    %v2178 = vsel %vm2177, 0, %v2176
    %v2179 = vsub.s32 32, %v2178
    %v2180 = vshll.u32 %v2171, %v2178
    %v2181 = vshrl.u32 %v2163, %v2179
    %v2182 = vor.u32 %v2180, %v2181
    %v2183 = vsub.s32 4294967266, %v2178
    %v2184 = vadd.s32 %v2183, 127
    %v2185 = vshll.u32 %v2184, 23
    %v2186 = vor.u32 4788187, %v2185
    %v2187 = vand.u32 2147483647, %v2186
    %v2189 = vcvt.s32.f32 %v2182
    %v2190 = vmul.f32 %v2189, %v2187
    %v2191 = vxor.u32 %v2190, 2147483648
    %v2192 = vsel %vm2109, %v2191, %v2190
    %v2193 = vsub.s32 4, %v2169
    %v2194 = vsel %vm2109, %v2193, %v2169
    %v2195 = vsel %vm2108, %v325, %v2192
    %v2196 = vsel %vm2108, 0, %v2194
    %v2197 = vcosq.f32.pop %v2195
    %v2198 = vsinq.f32.pop %v2195
    %vm2199 = vweird.f32 %v325
    %v2200 = vand.u32 %v2196, 3
    %vm2201 = vcmp.lt.s32.totalorder %v2200, 2
    %vm2202 = vcmp.eq.s32.totalorder %v2200, 0
    %v2203 = vxor.u32 %v2198, 2147483648
    %v2204 = vsel %vm2202, %v2197, %v2203
    %vm2205 = vcmp.eq.s32.totalorder %v2200, 2
    %v2206 = vxor.u32 %v2197, 2147483648
    %v2207 = vsel %vm2205, %v2206, %v2198
    %v2208 = vsel %vm2201, %v2204, %v2207
    %v2209 = vsel %vm2199, nan, %v2208
    %v2210 = vand.u32 2147483647, %v326
    %vm2211 = vcmp.le.f32.partialorder %v2210, 0.7853982
    %vm2212 = vcmp.lt.s32.totalorder %v326, 0
    %v2213 = vand.u32 %v326, 2139095040
    %v2214 = vshrl.u32 %v2213, 23
    %v2215 = vsub.s32 %v2214, 127
    %v2216 = vand.u32 2147483647, %v326
    %v2217 = vand.u32 %v2216, 8388607
    %v2218 = vor.u32 %v2217, 8388608
    %v2219 = vsub.s32 0, %v2218
    %v2220 = vadd.s32 %v2215, 1
    %vm2221 = vcmp.gt.s32.totalorder %v2220, 0
    %v2222 = vsel %vm2221, %v2220, 0
    %v2223 = vshrl.u32 %v2222, 5
    %v2224 = vand.u32 %v2222, 31
    %v2225 = vsub.s32 32, %v2224
    %v2226 = vshrl.u32 683565275, %v2225
    %v2227 = vshll.u32 683565275, %v2224
    %v2228 = vshrl.u32 2475754826, %v2225
    %v2229 = vor.u32 %v2227, %v2228
    %v2230 = vshll.u32 2475754826, %v2224
    %v2231 = vshrl.u32 2131351028, %v2225
    %v2232 = vor.u32 %v2230, %v2231
    %v2233 = vshll.u32 2131351028, %v2224
    %v2234 = vshrl.u32 2102212464, %v2225
    %v2235 = vor.u32 %v2233, %v2234
    %v2236 = vshll.u32 2102212464, %v2224
    %v2237 = vshrl.u32 920167782, %v2225
    %v2238 = vor.u32 %v2236, %v2237
    %v2239 = vshll.u32 920167782, %v2224
    %v2240 = vshrl.u32 1326507024, %v2225
    %v2241 = vor.u32 %v2239, %v2240
    %vm2242 = vcmp.lt.s32.totalorder %v2223, 1
    %vm2243 = vcmp.lt.s32.totalorder %v2223, 2
    %vm2244 = vcmp.lt.s32.totalorder %v2223, 3
    %vm2245 = vcmp.lt.s32.totalorder %v2223, 4
    %v2246 = vsel %vm2242, %v2226, %v2229
    %v2247 = vsel %vm2245, %v2235, 2102212464
    %v2248 = vsel %vm2244, %v2232, %v2247
    %v2249 = vsel %vm2243, %v2246, %v2248
    %v2250 = vsel %vm2242, %v2229, %v2232
    %v2251 = vsel %vm2245, %v2238, 920167782
    %v2252 = vsel %vm2244, %v2235, %v2251
    %v2253 = vsel %vm2243, %v2250, %v2252
    %v2254 = vsel %vm2242, %v2232, %v2235
    %v2255 = vsel %vm2245, %v2241, 1326507024
    %v2256 = vsel %vm2244, %v2238, %v2255
    %v2257 = vsel %vm2243, %v2254, %v2256
    %v2258 = vshll.u32 %v2218, 8
    %v2259 = vmul.u32.u64.compose %v2258, %v2257
    %v2260 = vextract.low.u32 %v2259
    %v2261 = vextract.high.u32 %v2259
    %v2262 = vmul.u32.u64.compose %v2258, %v2253
    %v2263 = vextract.low.u32 %v2262
    %v2264 = vextract.high.u32 %v2262
    %v2265 = vmul.u32 %v2258, %v2249
    %v2266 = vadd.s32 %v2261, %v2263
    %vm2267 = vc.u32 %v2261, %v2263
    %v2268 = vadd.s32 %v2264, 1
    %v2269 = vsel %vm2267, %v2268, %v2264
    %v2270 = vadd.s32 %v2265, %v2269
    %v2271 = vadd.s32 %v2270, 536870912
    %v2272 = vshrl.u32 %v2271, 30
    %v2273 = vshll.u32 %v2272, 30
    %v2274 = vsub.s32 %v2270, %v2273
    %vm2275 = vcmp.lt.s32.totalorder %v2274, 0
    %v2276 = vsub.s32 0, %v2274
    %v2277 = vsel %vm2275, %v2276, %v2274
    %v2278 = vclz %v2277
    %v2279 = vsub.s32 %v2278, 2
    %vm2280 = vcmp.gt.s32.totalorder 0, %v2279
    %v2281 = vsel %vm2280, 0, %v2279
    %v2282 = vsub.s32 32, %v2281
    %v2283 = vshll.u32 %v2274, %v2281
    %v2284 = vshrl.u32 %v2266, %v2282
    %v2285 = vor.u32 %v2283, %v2284
    %v2286 = vsub.s32 4294967266, %v2281
    %v2287 = vadd.s32 %v2286, 127
    %v2288 = vshll.u32 %v2287, 23
    %v2289 = vor.u32 4788187, %v2288
    %v2290 = vand.u32 2147483647, %v2289
    %v2292 = vcvt.s32.f32 %v2285
    %v2293 = vmul.f32 %v2292, %v2290
    %v2294 = vxor.u32 %v2293, 2147483648
    %v2295 = vsel %vm2212, %v2294, %v2293
    %v2296 = vsub.s32 4, %v2272
    %v2297 = vsel %vm2212, %v2296, %v2272
    %v2298 = vsel %vm2211, %v326, %v2295
    %v2299 = vsel %vm2211, 0, %v2297
    %v2300 = vcosq.f32.pop %v2298
    %v2301 = vsinq.f32.pop %v2298
    %vm2302 = vweird.f32 %v326
    %v2303 = vand.u32 %v2299, 3
    %vm2304 = vcmp.lt.s32.totalorder %v2303, 2
    %vm2305 = vcmp.eq.s32.totalorder %v2303, 0
    %v2306 = vxor.u32 %v2301, 2147483648
    %v2307 = vsel %vm2305, %v2300, %v2306
    %vm2308 = vcmp.eq.s32.totalorder %v2303, 2
    %v2309 = vxor.u32 %v2300, 2147483648
    %v2310 = vsel %vm2308, %v2309, %v2301
    %v2311 = vsel %vm2304, %v2307, %v2310
    %v2312 = vsel %vm2302, nan, %v2311
    %v2313 = vand.u32 2147483647, %v327
    %vm2314 = vcmp.le.f32.partialorder %v2313, 0.7853982
    %vm2315 = vcmp.lt.s32.totalorder %v327, 0
    %v2316 = vand.u32 %v327, 2139095040
    %v2317 = vshrl.u32 %v2316, 23
    %v2318 = vsub.s32 %v2317, 127
    %v2319 = vand.u32 2147483647, %v327
    %v2320 = vand.u32 %v2319, 8388607
    %v2321 = vor.u32 %v2320, 8388608
    %v2322 = vsub.s32 0, %v2321
    %v2323 = vadd.s32 %v2318, 1
    %vm2324 = vcmp.gt.s32.totalorder %v2323, 0
    %v2325 = vsel %vm2324, %v2323, 0
    %v2326 = vshrl.u32 %v2325, 5
    %v2327 = vand.u32 %v2325, 31
    %v2328 = vsub.s32 32, %v2327
    %v2329 = vshrl.u32 683565275, %v2328
    %v2330 = vshll.u32 683565275, %v2327
    %v2331 = vshrl.u32 2475754826, %v2328
    %v2332 = vor.u32 %v2330, %v2331
    %v2333 = vshll.u32 2475754826, %v2327
    %v2334 = vshrl.u32 2131351028, %v2328
    %v2335 = vor.u32 %v2333, %v2334
    %v2336 = vshll.u32 2131351028, %v2327
    %v2337 = vshrl.u32 2102212464, %v2328
    %v2338 = vor.u32 %v2336, %v2337
    %v2339 = vshll.u32 2102212464, %v2327
    %v2340 = vshrl.u32 920167782, %v2328
    %v2341 = vor.u32 %v2339, %v2340
    %v2342 = vshll.u32 920167782, %v2327
    %v2343 = vshrl.u32 1326507024, %v2328
    %v2344 = vor.u32 %v2342, %v2343
    %vm2345 = vcmp.lt.s32.totalorder %v2326, 1
    %vm2346 = vcmp.lt.s32.totalorder %v2326, 2
    %vm2347 = vcmp.lt.s32.totalorder %v2326, 3
    %vm2348 = vcmp.lt.s32.totalorder %v2326, 4
    %v2349 = vsel %vm2345, %v2329, %v2332
    %v2350 = vsel %vm2348, %v2338, 2102212464
    %v2351 = vsel %vm2347, %v2335, %v2350
    %v2352 = vsel %vm2346, %v2349, %v2351
    %v2353 = vsel %vm2345, %v2332, %v2335
    %v2354 = vsel %vm2348, %v2341, 920167782
    %v2355 = vsel %vm2347, %v2338, %v2354
    %v2356 = vsel %vm2346, %v2353, %v2355
    %v2357 = vsel %vm2345, %v2335, %v2338
    %v2358 = vsel %vm2348, %v2344, 1326507024
    %v2359 = vsel %vm2347, %v2341, %v2358
    %v2360 = vsel %vm2346, %v2357, %v2359
    %v2361 = vshll.u32 %v2321, 8
    %v2362 = vmul.u32.u64.compose %v2361, %v2360
    %v2363 = vextract.low.u32 %v2362
    %v2364 = vextract.high.u32 %v2362
    %v2365 = vmul.u32.u64.compose %v2361, %v2356
    %v2366 = vextract.low.u32 %v2365
    %v2367 = vextract.high.u32 %v2365
    %v2368 = vmul.u32 %v2361, %v2352
    %v2369 = vadd.s32 %v2364, %v2366
    %vm2370 = vc.u32 %v2364, %v2366
    %v2371 = vadd.s32 %v2367, 1
    %v2372 = vsel %vm2370, %v2371, %v2367
    %v2373 = vadd.s32 %v2368, %v2372
    %v2374 = vadd.s32 %v2373, 536870912
    %v2375 = vshrl.u32 %v2374, 30
    %v2376 = vshll.u32 %v2375, 30
    %v2377 = vsub.s32 %v2373, %v2376
    %vm2378 = vcmp.lt.s32.totalorder %v2377, 0
    %v2379 = vsub.s32 0, %v2377
    %v2380 = vsel %vm2378, %v2379, %v2377
    %v2381 = vclz %v2380
    %v2382 = vsub.s32 %v2381, 2
    %vm2383 = vcmp.gt.s32.totalorder 0, %v2382
    %v2384 = vsel %vm2383, 0, %v2382
    %v2385 = vsub.s32 32, %v2384
    %v2386 = vshll.u32 %v2377, %v2384
    %v2387 = vshrl.u32 %v2369, %v2385
    %v2388 = vor.u32 %v2386, %v2387
    %v2389 = vsub.s32 4294967266, %v2384
    %v2390 = vadd.s32 %v2389, 127
    %v2391 = vshll.u32 %v2390, 23
    %v2392 = vor.u32 4788187, %v2391
    %v2393 = vand.u32 2147483647, %v2392
    %v2395 = vcvt.s32.f32 %v2388
    %v2396 = vmul.f32 %v2395, %v2393
    %v2397 = vxor.u32 %v2396, 2147483648
    %v2398 = vsel %vm2315, %v2397, %v2396
    %v2399 = vsub.s32 4, %v2375
    %v2400 = vsel %vm2315, %v2399, %v2375
    %v2401 = vsel %vm2314, %v327, %v2398
    %v2402 = vsel %vm2314, 0, %v2400
    %v2403 = vcosq.f32.pop %v2401
    %v2404 = vsinq.f32.pop %v2401
    %vm2405 = vweird.f32 %v327
    %v2406 = vand.u32 %v2402, 3
    %vm2407 = vcmp.lt.s32.totalorder %v2406, 2
    %vm2408 = vcmp.eq.s32.totalorder %v2406, 0
    %v2409 = vxor.u32 %v2404, 2147483648
    %v2410 = vsel %vm2408, %v2403, %v2409
    %vm2411 = vcmp.eq.s32.totalorder %v2406, 2
    %v2412 = vxor.u32 %v2403, 2147483648
    %v2413 = vsel %vm2411, %v2412, %v2404
    %v2414 = vsel %vm2407, %v2410, %v2413
    %v2415 = vsel %vm2405, nan, %v2414
    %v2416 = vand.u32 2147483647, %v328
    %vm2417 = vcmp.le.f32.partialorder %v2416, 0.7853982
    %vm2418 = vcmp.lt.s32.totalorder %v328, 0
    %v2419 = vand.u32 %v328, 2139095040
    %v2420 = vshrl.u32 %v2419, 23
    %v2421 = vsub.s32 %v2420, 127
    %v2422 = vand.u32 2147483647, %v328
    %v2423 = vand.u32 %v2422, 8388607
    %v2424 = vor.u32 %v2423, 8388608
    %v2425 = vsub.s32 0, %v2424
    %v2426 = vadd.s32 %v2421, 1
    %vm2427 = vcmp.gt.s32.totalorder %v2426, 0
    %v2428 = vsel %vm2427, %v2426, 0
    %v2429 = vshrl.u32 %v2428, 5
    %v2430 = vand.u32 %v2428, 31
    %v2431 = vsub.s32 32, %v2430
    %v2432 = vshrl.u32 683565275, %v2431
    %v2433 = vshll.u32 683565275, %v2430
    %v2434 = vshrl.u32 2475754826, %v2431
    %v2435 = vor.u32 %v2433, %v2434
    %v2436 = vshll.u32 2475754826, %v2430
    %v2437 = vshrl.u32 2131351028, %v2431
    %v2438 = vor.u32 %v2436, %v2437
    %v2439 = vshll.u32 2131351028, %v2430
    %v2440 = vshrl.u32 2102212464, %v2431
    %v2441 = vor.u32 %v2439, %v2440
    %v2442 = vshll.u32 2102212464, %v2430
    %v2443 = vshrl.u32 920167782, %v2431
    %v2444 = vor.u32 %v2442, %v2443
    %v2445 = vshll.u32 920167782, %v2430
    %v2446 = vshrl.u32 1326507024, %v2431
    %v2447 = vor.u32 %v2445, %v2446
    %vm2448 = vcmp.lt.s32.totalorder %v2429, 1
    %vm2449 = vcmp.lt.s32.totalorder %v2429, 2
    %vm2450 = vcmp.lt.s32.totalorder %v2429, 3
    %vm2451 = vcmp.lt.s32.totalorder %v2429, 4
    %v2452 = vsel %vm2448, %v2432, %v2435
    %v2453 = vsel %vm2451, %v2441, 2102212464
    %v2454 = vsel %vm2450, %v2438, %v2453
    %v2455 = vsel %vm2449, %v2452, %v2454
    %v2456 = vsel %vm2448, %v2435, %v2438
    %v2457 = vsel %vm2451, %v2444, 920167782
    %v2458 = vsel %vm2450, %v2441, %v2457
    %v2459 = vsel %vm2449, %v2456, %v2458
    %v2460 = vsel %vm2448, %v2438, %v2441
    %v2461 = vsel %vm2451, %v2447, 1326507024
    %v2462 = vsel %vm2450, %v2444, %v2461
    %v2463 = vsel %vm2449, %v2460, %v2462
    %v2464 = vshll.u32 %v2424, 8
    %v2465 = vmul.u32.u64.compose %v2464, %v2463
    %v2466 = vextract.low.u32 %v2465
    %v2467 = vextract.high.u32 %v2465
    %v2468 = vmul.u32.u64.compose %v2464, %v2459
    %v2469 = vextract.low.u32 %v2468
    %v2470 = vextract.high.u32 %v2468
    %v2471 = vmul.u32 %v2464, %v2455
    %v2472 = vadd.s32 %v2467, %v2469
    %vm2473 = vc.u32 %v2467, %v2469
    %v2474 = vadd.s32 %v2470, 1
    %v2475 = vsel %vm2473, %v2474, %v2470
    %v2476 = vadd.s32 %v2471, %v2475
    %v2477 = vadd.s32 %v2476, 536870912
    %v2478 = vshrl.u32 %v2477, 30
    %v2479 = vshll.u32 %v2478, 30
    %v2480 = vsub.s32 %v2476, %v2479
    %vm2481 = vcmp.lt.s32.totalorder %v2480, 0
    %v2482 = vsub.s32 0, %v2480
    %v2483 = vsel %vm2481, %v2482, %v2480
    %v2484 = vclz %v2483
    %v2485 = vsub.s32 %v2484, 2
    %vm2486 = vcmp.gt.s32.totalorder 0, %v2485
    %v2487 = vsel %vm2486, 0, %v2485
    %v2488 = vsub.s32 32, %v2487
    %v2489 = vshll.u32 %v2480, %v2487
    %v2490 = vshrl.u32 %v2472, %v2488
    %v2491 = vor.u32 %v2489, %v2490
    %v2492 = vsub.s32 4294967266, %v2487
    %v2493 = vadd.s32 %v2492, 127
    %v2494 = vshll.u32 %v2493, 23
    %v2495 = vor.u32 4788187, %v2494
    %v2496 = vand.u32 2147483647, %v2495
    %v2498 = vcvt.s32.f32 %v2491
    %v2499 = vmul.f32 %v2498, %v2496
    %v2500 = vxor.u32 %v2499, 2147483648
    %v2501 = vsel %vm2418, %v2500, %v2499
    %v2502 = vsub.s32 4, %v2478
    %v2503 = vsel %vm2418, %v2502, %v2478
    %v2504 = vsel %vm2417, %v328, %v2501
    %v2505 = vsel %vm2417, 0, %v2503
    %v2506 = vcosq.f32.pop %v2504
    %v2507 = vsinq.f32.pop %v2504
    %vm2508 = vweird.f32 %v328
    %v2509 = vand.u32 %v2505, 3
    %vm2510 = vcmp.lt.s32.totalorder %v2509, 2
    %vm2511 = vcmp.eq.s32.totalorder %v2509, 0
    %v2512 = vxor.u32 %v2507, 2147483648
    %v2513 = vsel %vm2511, %v2506, %v2512
    %vm2514 = vcmp.eq.s32.totalorder %v2509, 2
    %v2515 = vxor.u32 %v2506, 2147483648
    %v2516 = vsel %vm2514, %v2515, %v2507
    %v2517 = vsel %vm2510, %v2513, %v2516
    %v2518 = vsel %vm2508, nan, %v2517
    %v2519 = vand.u32 2147483647, %v329
    %vm2520 = vcmp.le.f32.partialorder %v2519, 0.7853982
    %vm2521 = vcmp.lt.s32.totalorder %v329, 0
    %v2522 = vand.u32 %v329, 2139095040
    %v2523 = vshrl.u32 %v2522, 23
    %v2524 = vsub.s32 %v2523, 127
    %v2525 = vand.u32 2147483647, %v329
    %v2526 = vand.u32 %v2525, 8388607
    %v2527 = vor.u32 %v2526, 8388608
    %v2528 = vsub.s32 0, %v2527
    %v2529 = vadd.s32 %v2524, 1
    %vm2530 = vcmp.gt.s32.totalorder %v2529, 0
    %v2531 = vsel %vm2530, %v2529, 0
    %v2532 = vshrl.u32 %v2531, 5
    %v2533 = vand.u32 %v2531, 31
    %v2534 = vsub.s32 32, %v2533
    %v2535 = vshrl.u32 683565275, %v2534
    %v2536 = vshll.u32 683565275, %v2533
    %v2537 = vshrl.u32 2475754826, %v2534
    %v2538 = vor.u32 %v2536, %v2537
    %v2539 = vshll.u32 2475754826, %v2533
    %v2540 = vshrl.u32 2131351028, %v2534
    %v2541 = vor.u32 %v2539, %v2540
    %v2542 = vshll.u32 2131351028, %v2533
    %v2543 = vshrl.u32 2102212464, %v2534
    %v2544 = vor.u32 %v2542, %v2543
    %v2545 = vshll.u32 2102212464, %v2533
    %v2546 = vshrl.u32 920167782, %v2534
    %v2547 = vor.u32 %v2545, %v2546
    %v2548 = vshll.u32 920167782, %v2533
    %v2549 = vshrl.u32 1326507024, %v2534
    %v2550 = vor.u32 %v2548, %v2549
    %vm2551 = vcmp.lt.s32.totalorder %v2532, 1
    %vm2552 = vcmp.lt.s32.totalorder %v2532, 2
    %vm2553 = vcmp.lt.s32.totalorder %v2532, 3
    %vm2554 = vcmp.lt.s32.totalorder %v2532, 4
    %v2555 = vsel %vm2551, %v2535, %v2538
    %v2556 = vsel %vm2554, %v2544, 2102212464
    %v2557 = vsel %vm2553, %v2541, %v2556
    %v2558 = vsel %vm2552, %v2555, %v2557
    %v2559 = vsel %vm2551, %v2538, %v2541
    %v2560 = vsel %vm2554, %v2547, 920167782
    %v2561 = vsel %vm2553, %v2544, %v2560
    %v2562 = vsel %vm2552, %v2559, %v2561
    %v2563 = vsel %vm2551, %v2541, %v2544
    %v2564 = vsel %vm2554, %v2550, 1326507024
    %v2565 = vsel %vm2553, %v2547, %v2564
    %v2566 = vsel %vm2552, %v2563, %v2565
    %v2567 = vshll.u32 %v2527, 8
    %v2568 = vmul.u32.u64.compose %v2567, %v2566
    %v2569 = vextract.low.u32 %v2568
    %v2570 = vextract.high.u32 %v2568
    %v2571 = vmul.u32.u64.compose %v2567, %v2562
    %v2572 = vextract.low.u32 %v2571
    %v2573 = vextract.high.u32 %v2571
    %v2574 = vmul.u32 %v2567, %v2558
    %v2575 = vadd.s32 %v2570, %v2572
    %vm2576 = vc.u32 %v2570, %v2572
    %v2577 = vadd.s32 %v2573, 1
    %v2578 = vsel %vm2576, %v2577, %v2573
    %v2579 = vadd.s32 %v2574, %v2578
    %v2580 = vadd.s32 %v2579, 536870912
    %v2581 = vshrl.u32 %v2580, 30
    %v2582 = vshll.u32 %v2581, 30
    %v2583 = vsub.s32 %v2579, %v2582
    %vm2584 = vcmp.lt.s32.totalorder %v2583, 0
    %v2585 = vsub.s32 0, %v2583
    %v2586 = vsel %vm2584, %v2585, %v2583
    %v2587 = vclz %v2586
    %v2588 = vsub.s32 %v2587, 2
    %vm2589 = vcmp.gt.s32.totalorder 0, %v2588
    %v2590 = vsel %vm2589, 0, %v2588
    %v2591 = vsub.s32 32, %v2590
    %v2592 = vshll.u32 %v2583, %v2590
    %v2593 = vshrl.u32 %v2575, %v2591
    %v2594 = vor.u32 %v2592, %v2593
    %v2595 = vsub.s32 4294967266, %v2590
    %v2596 = vadd.s32 %v2595, 127
    %v2597 = vshll.u32 %v2596, 23
    %v2598 = vor.u32 4788187, %v2597
    %v2599 = vand.u32 2147483647, %v2598
    %v2601 = vcvt.s32.f32 %v2594
    %v2602 = vmul.f32 %v2601, %v2599
    %v2603 = vxor.u32 %v2602, 2147483648
    %v2604 = vsel %vm2521, %v2603, %v2602
    %v2605 = vsub.s32 4, %v2581
    %v2606 = vsel %vm2521, %v2605, %v2581
    %v2607 = vsel %vm2520, %v329, %v2604
    %v2608 = vsel %vm2520, 0, %v2606
    %v2609 = vcosq.f32.pop %v2607
    %v2610 = vsinq.f32.pop %v2607
    %vm2611 = vweird.f32 %v329
    %v2612 = vand.u32 %v2608, 3
    %vm2613 = vcmp.lt.s32.totalorder %v2612, 2
    %vm2614 = vcmp.eq.s32.totalorder %v2612, 0
    %v2615 = vxor.u32 %v2610, 2147483648
    %v2616 = vsel %vm2614, %v2609, %v2615
    %vm2617 = vcmp.eq.s32.totalorder %v2612, 2
    %v2618 = vxor.u32 %v2609, 2147483648
    %v2619 = vsel %vm2617, %v2618, %v2610
    %v2620 = vsel %vm2613, %v2616, %v2619
    %v2621 = vsel %vm2611, nan, %v2620
    %v2622 = vand.u32 2147483647, %v330
    %vm2623 = vcmp.le.f32.partialorder %v2622, 0.7853982
    %vm2624 = vcmp.lt.s32.totalorder %v330, 0
    %v2625 = vand.u32 %v330, 2139095040
    %v2626 = vshrl.u32 %v2625, 23
    %v2627 = vsub.s32 %v2626, 127
    %v2628 = vand.u32 2147483647, %v330
    %v2629 = vand.u32 %v2628, 8388607
    %v2630 = vor.u32 %v2629, 8388608
    %v2631 = vsub.s32 0, %v2630
    %v2632 = vadd.s32 %v2627, 1
    %vm2633 = vcmp.gt.s32.totalorder %v2632, 0
    %v2634 = vsel %vm2633, %v2632, 0
    %v2635 = vshrl.u32 %v2634, 5
    %v2636 = vand.u32 %v2634, 31
    %v2637 = vsub.s32 32, %v2636
    %v2638 = vshrl.u32 683565275, %v2637
    %v2639 = vshll.u32 683565275, %v2636
    %v2640 = vshrl.u32 2475754826, %v2637
    %v2641 = vor.u32 %v2639, %v2640
    %v2642 = vshll.u32 2475754826, %v2636
    %v2643 = vshrl.u32 2131351028, %v2637
    %v2644 = vor.u32 %v2642, %v2643
    %v2645 = vshll.u32 2131351028, %v2636
    %v2646 = vshrl.u32 2102212464, %v2637
    %v2647 = vor.u32 %v2645, %v2646
    %v2648 = vshll.u32 2102212464, %v2636
    %v2649 = vshrl.u32 920167782, %v2637
    %v2650 = vor.u32 %v2648, %v2649
    %v2651 = vshll.u32 920167782, %v2636
    %v2652 = vshrl.u32 1326507024, %v2637
    %v2653 = vor.u32 %v2651, %v2652
    %vm2654 = vcmp.lt.s32.totalorder %v2635, 1
    %vm2655 = vcmp.lt.s32.totalorder %v2635, 2
    %vm2656 = vcmp.lt.s32.totalorder %v2635, 3
    %vm2657 = vcmp.lt.s32.totalorder %v2635, 4
    %v2658 = vsel %vm2654, %v2638, %v2641
    %v2659 = vsel %vm2657, %v2647, 2102212464
    %v2660 = vsel %vm2656, %v2644, %v2659
    %v2661 = vsel %vm2655, %v2658, %v2660
    %v2662 = vsel %vm2654, %v2641, %v2644
    %v2663 = vsel %vm2657, %v2650, 920167782
    %v2664 = vsel %vm2656, %v2647, %v2663
    %v2665 = vsel %vm2655, %v2662, %v2664
    %v2666 = vsel %vm2654, %v2644, %v2647
    %v2667 = vsel %vm2657, %v2653, 1326507024
    %v2668 = vsel %vm2656, %v2650, %v2667
    %v2669 = vsel %vm2655, %v2666, %v2668
    %v2670 = vshll.u32 %v2630, 8
    %v2671 = vmul.u32.u64.compose %v2670, %v2669
    %v2672 = vextract.low.u32 %v2671
    %v2673 = vextract.high.u32 %v2671
    %v2674 = vmul.u32.u64.compose %v2670, %v2665
    %v2675 = vextract.low.u32 %v2674
    %v2676 = vextract.high.u32 %v2674
    %v2677 = vmul.u32 %v2670, %v2661
    %v2678 = vadd.s32 %v2673, %v2675
    %vm2679 = vc.u32 %v2673, %v2675
    %v2680 = vadd.s32 %v2676, 1
    %v2681 = vsel %vm2679, %v2680, %v2676
    %v2682 = vadd.s32 %v2677, %v2681
    %v2683 = vadd.s32 %v2682, 536870912
    %v2684 = vshrl.u32 %v2683, 30
    %v2685 = vshll.u32 %v2684, 30
    %v2686 = vsub.s32 %v2682, %v2685
    %vm2687 = vcmp.lt.s32.totalorder %v2686, 0
    %v2688 = vsub.s32 0, %v2686
    %v2689 = vsel %vm2687, %v2688, %v2686
    %v2690 = vclz %v2689
    %v2691 = vsub.s32 %v2690, 2
    %vm2692 = vcmp.gt.s32.totalorder 0, %v2691
    %v2693 = vsel %vm2692, 0, %v2691
    %v2694 = vsub.s32 32, %v2693
    %v2695 = vshll.u32 %v2686, %v2693
    %v2696 = vshrl.u32 %v2678, %v2694
    %v2697 = vor.u32 %v2695, %v2696
    %v2698 = vsub.s32 4294967266, %v2693
    %v2699 = vadd.s32 %v2698, 127
    %v2700 = vshll.u32 %v2699, 23
    %v2701 = vor.u32 4788187, %v2700
    %v2702 = vand.u32 2147483647, %v2701
    %v2704 = vcvt.s32.f32 %v2697
    %v2705 = vmul.f32 %v2704, %v2702
    %v2706 = vxor.u32 %v2705, 2147483648
    %v2707 = vsel %vm2624, %v2706, %v2705
    %v2708 = vsub.s32 4, %v2684
    %v2709 = vsel %vm2624, %v2708, %v2684
    %v2710 = vsel %vm2623, %v330, %v2707
    %v2711 = vsel %vm2623, 0, %v2709
    %v2712 = vcosq.f32.pop %v2710
    %v2713 = vsinq.f32.pop %v2710
    %vm2714 = vweird.f32 %v330
    %v2715 = vand.u32 %v2711, 3
    %vm2716 = vcmp.lt.s32.totalorder %v2715, 2
    %vm2717 = vcmp.eq.s32.totalorder %v2715, 0
    %v2718 = vxor.u32 %v2713, 2147483648
    %v2719 = vsel %vm2717, %v2712, %v2718
    %vm2720 = vcmp.eq.s32.totalorder %v2715, 2
    %v2721 = vxor.u32 %v2712, 2147483648
    %v2722 = vsel %vm2720, %v2721, %v2713
    %v2723 = vsel %vm2716, %v2719, %v2722
    %v2724 = vsel %vm2714, nan, %v2723
    %v2725 = vand.u32 2147483647, %v331
    %vm2726 = vcmp.le.f32.partialorder %v2725, 0.7853982
    %vm2727 = vcmp.lt.s32.totalorder %v331, 0
    %v2728 = vand.u32 %v331, 2139095040
    %v2729 = vshrl.u32 %v2728, 23
    %v2730 = vsub.s32 %v2729, 127
    %v2731 = vand.u32 2147483647, %v331
    %v2732 = vand.u32 %v2731, 8388607
    %v2733 = vor.u32 %v2732, 8388608
    %v2734 = vsub.s32 0, %v2733
    %v2735 = vadd.s32 %v2730, 1
    %vm2736 = vcmp.gt.s32.totalorder %v2735, 0
    %v2737 = vsel %vm2736, %v2735, 0
    %v2738 = vshrl.u32 %v2737, 5
    %v2739 = vand.u32 %v2737, 31
    %v2740 = vsub.s32 32, %v2739
    %v2741 = vshrl.u32 683565275, %v2740
    %v2742 = vshll.u32 683565275, %v2739
    %v2743 = vshrl.u32 2475754826, %v2740
    %v2744 = vor.u32 %v2742, %v2743
    %v2745 = vshll.u32 2475754826, %v2739
    %v2746 = vshrl.u32 2131351028, %v2740
    %v2747 = vor.u32 %v2745, %v2746
    %v2748 = vshll.u32 2131351028, %v2739
    %v2749 = vshrl.u32 2102212464, %v2740
    %v2750 = vor.u32 %v2748, %v2749
    %v2751 = vshll.u32 2102212464, %v2739
    %v2752 = vshrl.u32 920167782, %v2740
    %v2753 = vor.u32 %v2751, %v2752
    %v2754 = vshll.u32 920167782, %v2739
    %v2755 = vshrl.u32 1326507024, %v2740
    %v2756 = vor.u32 %v2754, %v2755
    %vm2757 = vcmp.lt.s32.totalorder %v2738, 1
    %vm2758 = vcmp.lt.s32.totalorder %v2738, 2
    %vm2759 = vcmp.lt.s32.totalorder %v2738, 3
    %vm2760 = vcmp.lt.s32.totalorder %v2738, 4
    %v2761 = vsel %vm2757, %v2741, %v2744
    %v2762 = vsel %vm2760, %v2750, 2102212464
    %v2763 = vsel %vm2759, %v2747, %v2762
    %v2764 = vsel %vm2758, %v2761, %v2763
    %v2765 = vsel %vm2757, %v2744, %v2747
    %v2766 = vsel %vm2760, %v2753, 920167782
    %v2767 = vsel %vm2759, %v2750, %v2766
    %v2768 = vsel %vm2758, %v2765, %v2767
    %v2769 = vsel %vm2757, %v2747, %v2750
    %v2770 = vsel %vm2760, %v2756, 1326507024
    %v2771 = vsel %vm2759, %v2753, %v2770
    %v2772 = vsel %vm2758, %v2769, %v2771
    %v2773 = vshll.u32 %v2733, 8
    %v2774 = vmul.u32.u64.compose %v2773, %v2772
    %v2775 = vextract.low.u32 %v2774
    %v2776 = vextract.high.u32 %v2774
    %v2777 = vmul.u32.u64.compose %v2773, %v2768
    %v2778 = vextract.low.u32 %v2777
    %v2779 = vextract.high.u32 %v2777
    %v2780 = vmul.u32 %v2773, %v2764
    %v2781 = vadd.s32 %v2776, %v2778
    %vm2782 = vc.u32 %v2776, %v2778
    %v2783 = vadd.s32 %v2779, 1
    %v2784 = vsel %vm2782, %v2783, %v2779
    %v2785 = vadd.s32 %v2780, %v2784
    %v2786 = vadd.s32 %v2785, 536870912
    %v2787 = vshrl.u32 %v2786, 30
    %v2788 = vshll.u32 %v2787, 30
    %v2789 = vsub.s32 %v2785, %v2788
    %vm2790 = vcmp.lt.s32.totalorder %v2789, 0
    %v2791 = vsub.s32 0, %v2789
    %v2792 = vsel %vm2790, %v2791, %v2789
    %v2793 = vclz %v2792
    %v2794 = vsub.s32 %v2793, 2
    %vm2795 = vcmp.gt.s32.totalorder 0, %v2794
    %v2796 = vsel %vm2795, 0, %v2794
    %v2797 = vsub.s32 32, %v2796
    %v2798 = vshll.u32 %v2789, %v2796
    %v2799 = vshrl.u32 %v2781, %v2797
    %v2800 = vor.u32 %v2798, %v2799
    %v2801 = vsub.s32 4294967266, %v2796
    %v2802 = vadd.s32 %v2801, 127
    %v2803 = vshll.u32 %v2802, 23
    %v2804 = vor.u32 4788187, %v2803
    %v2805 = vand.u32 2147483647, %v2804
    %v2807 = vcvt.s32.f32 %v2800
    %v2808 = vmul.f32 %v2807, %v2805
    %v2809 = vxor.u32 %v2808, 2147483648
    %v2810 = vsel %vm2727, %v2809, %v2808
    %v2811 = vsub.s32 4, %v2787
    %v2812 = vsel %vm2727, %v2811, %v2787
    %v2813 = vsel %vm2726, %v331, %v2810
    %v2814 = vsel %vm2726, 0, %v2812
    %v2815 = vcosq.f32.pop %v2813
    %v2816 = vsinq.f32.pop %v2813
    %vm2817 = vweird.f32 %v331
    %v2818 = vand.u32 %v2814, 3
    %vm2819 = vcmp.lt.s32.totalorder %v2818, 2
    %vm2820 = vcmp.eq.s32.totalorder %v2818, 0
    %v2821 = vxor.u32 %v2816, 2147483648
    %v2822 = vsel %vm2820, %v2815, %v2821
    %vm2823 = vcmp.eq.s32.totalorder %v2818, 2
    %v2824 = vxor.u32 %v2815, 2147483648
    %v2825 = vsel %vm2823, %v2824, %v2816
    %v2826 = vsel %vm2819, %v2822, %v2825
    %v2827 = vsel %vm2817, nan, %v2826
    %v2828 = vand.u32 2147483647, %v332
    %vm2829 = vcmp.le.f32.partialorder %v2828, 0.7853982
    %vm2830 = vcmp.lt.s32.totalorder %v332, 0
    %v2831 = vand.u32 %v332, 2139095040
    %v2832 = vshrl.u32 %v2831, 23
    %v2833 = vsub.s32 %v2832, 127
    %v2834 = vand.u32 2147483647, %v332
    %v2835 = vand.u32 %v2834, 8388607
    %v2836 = vor.u32 %v2835, 8388608
    %v2837 = vsub.s32 0, %v2836
    %v2838 = vadd.s32 %v2833, 1
    %vm2839 = vcmp.gt.s32.totalorder %v2838, 0
    %v2840 = vsel %vm2839, %v2838, 0
    %v2841 = vshrl.u32 %v2840, 5
    %v2842 = vand.u32 %v2840, 31
    %v2843 = vsub.s32 32, %v2842
    %v2844 = vshrl.u32 683565275, %v2843
    %v2845 = vshll.u32 683565275, %v2842
    %v2846 = vshrl.u32 2475754826, %v2843
    %v2847 = vor.u32 %v2845, %v2846
    %v2848 = vshll.u32 2475754826, %v2842
    %v2849 = vshrl.u32 2131351028, %v2843
    %v2850 = vor.u32 %v2848, %v2849
    %v2851 = vshll.u32 2131351028, %v2842
    %v2852 = vshrl.u32 2102212464, %v2843
    %v2853 = vor.u32 %v2851, %v2852
    %v2854 = vshll.u32 2102212464, %v2842
    %v2855 = vshrl.u32 920167782, %v2843
    %v2856 = vor.u32 %v2854, %v2855
    %v2857 = vshll.u32 920167782, %v2842
    %v2858 = vshrl.u32 1326507024, %v2843
    %v2859 = vor.u32 %v2857, %v2858
    %vm2860 = vcmp.lt.s32.totalorder %v2841, 1
    %vm2861 = vcmp.lt.s32.totalorder %v2841, 2
    %vm2862 = vcmp.lt.s32.totalorder %v2841, 3
    %vm2863 = vcmp.lt.s32.totalorder %v2841, 4
    %v2864 = vsel %vm2860, %v2844, %v2847
    %v2865 = vsel %vm2863, %v2853, 2102212464
    %v2866 = vsel %vm2862, %v2850, %v2865
    %v2867 = vsel %vm2861, %v2864, %v2866
    %v2868 = vsel %vm2860, %v2847, %v2850
    %v2869 = vsel %vm2863, %v2856, 920167782
    %v2870 = vsel %vm2862, %v2853, %v2869
    %v2871 = vsel %vm2861, %v2868, %v2870
    %v2872 = vsel %vm2860, %v2850, %v2853
    %v2873 = vsel %vm2863, %v2859, 1326507024
    %v2874 = vsel %vm2862, %v2856, %v2873
    %v2875 = vsel %vm2861, %v2872, %v2874
    %v2876 = vshll.u32 %v2836, 8
    %v2877 = vmul.u32.u64.compose %v2876, %v2875
    %v2878 = vextract.low.u32 %v2877
    %v2879 = vextract.high.u32 %v2877
    %v2880 = vmul.u32.u64.compose %v2876, %v2871
    %v2881 = vextract.low.u32 %v2880
    %v2882 = vextract.high.u32 %v2880
    %v2883 = vmul.u32 %v2876, %v2867
    %v2884 = vadd.s32 %v2879, %v2881
    %vm2885 = vc.u32 %v2879, %v2881
    %v2886 = vadd.s32 %v2882, 1
    %v2887 = vsel %vm2885, %v2886, %v2882
    %v2888 = vadd.s32 %v2883, %v2887
    %v2889 = vadd.s32 %v2888, 536870912
    %v2890 = vshrl.u32 %v2889, 30
    %v2891 = vshll.u32 %v2890, 30
    %v2892 = vsub.s32 %v2888, %v2891
    %vm2893 = vcmp.lt.s32.totalorder %v2892, 0
    %v2894 = vsub.s32 0, %v2892
    %v2895 = vsel %vm2893, %v2894, %v2892
    %v2896 = vclz %v2895
    %v2897 = vsub.s32 %v2896, 2
    %vm2898 = vcmp.gt.s32.totalorder 0, %v2897
    %v2899 = vsel %vm2898, 0, %v2897
    %v2900 = vsub.s32 32, %v2899
    %v2901 = vshll.u32 %v2892, %v2899
    %v2902 = vshrl.u32 %v2884, %v2900
    %v2903 = vor.u32 %v2901, %v2902
    %v2904 = vsub.s32 4294967266, %v2899
    %v2905 = vadd.s32 %v2904, 127
    %v2906 = vshll.u32 %v2905, 23
    %v2907 = vor.u32 4788187, %v2906
    %v2908 = vand.u32 2147483647, %v2907
    %v2910 = vcvt.s32.f32 %v2903
    %v2911 = vmul.f32 %v2910, %v2908
    %v2912 = vxor.u32 %v2911, 2147483648
    %v2913 = vsel %vm2830, %v2912, %v2911
    %v2914 = vsub.s32 4, %v2890
    %v2915 = vsel %vm2830, %v2914, %v2890
    %v2916 = vsel %vm2829, %v332, %v2913
    %v2917 = vsel %vm2829, 0, %v2915
    %v2918 = vcosq.f32.pop %v2916
    %v2919 = vsinq.f32.pop %v2916
    %vm2920 = vweird.f32 %v332
    %v2921 = vand.u32 %v2917, 3
    %vm2922 = vcmp.lt.s32.totalorder %v2921, 2
    %vm2923 = vcmp.eq.s32.totalorder %v2921, 0
    %v2924 = vxor.u32 %v2919, 2147483648
    %v2925 = vsel %vm2923, %v2918, %v2924
    %vm2926 = vcmp.eq.s32.totalorder %v2921, 2
    %v2927 = vxor.u32 %v2918, 2147483648
    %v2928 = vsel %vm2926, %v2927, %v2919
    %v2929 = vsel %vm2922, %v2925, %v2928
    %v2930 = vsel %vm2920, nan, %v2929
    %v2931 = vand.u32 2147483647, %v333
    %vm2932 = vcmp.le.f32.partialorder %v2931, 0.7853982
    %vm2933 = vcmp.lt.s32.totalorder %v333, 0
    %v2934 = vand.u32 %v333, 2139095040
    %v2935 = vshrl.u32 %v2934, 23
    %v2936 = vsub.s32 %v2935, 127
    %v2937 = vand.u32 2147483647, %v333
    %v2938 = vand.u32 %v2937, 8388607
    %v2939 = vor.u32 %v2938, 8388608
    %v2940 = vsub.s32 0, %v2939
    %v2941 = vadd.s32 %v2936, 1
    %vm2942 = vcmp.gt.s32.totalorder %v2941, 0
    %v2943 = vsel %vm2942, %v2941, 0
    %v2944 = vshrl.u32 %v2943, 5
    %v2945 = vand.u32 %v2943, 31
    %v2946 = vsub.s32 32, %v2945
    %v2947 = vshrl.u32 683565275, %v2946
    %v2948 = vshll.u32 683565275, %v2945
    %v2949 = vshrl.u32 2475754826, %v2946
    %v2950 = vor.u32 %v2948, %v2949
    %v2951 = vshll.u32 2475754826, %v2945
    %v2952 = vshrl.u32 2131351028, %v2946
    %v2953 = vor.u32 %v2951, %v2952
    %v2954 = vshll.u32 2131351028, %v2945
    %v2955 = vshrl.u32 2102212464, %v2946
    %v2956 = vor.u32 %v2954, %v2955
    %v2957 = vshll.u32 2102212464, %v2945
    %v2958 = vshrl.u32 920167782, %v2946
    %v2959 = vor.u32 %v2957, %v2958
    %v2960 = vshll.u32 920167782, %v2945
    %v2961 = vshrl.u32 1326507024, %v2946
    %v2962 = vor.u32 %v2960, %v2961
    %vm2963 = vcmp.lt.s32.totalorder %v2944, 1
    %vm2964 = vcmp.lt.s32.totalorder %v2944, 2
    %vm2965 = vcmp.lt.s32.totalorder %v2944, 3
    %vm2966 = vcmp.lt.s32.totalorder %v2944, 4
    %v2967 = vsel %vm2963, %v2947, %v2950
    %v2968 = vsel %vm2966, %v2956, 2102212464
    %v2969 = vsel %vm2965, %v2953, %v2968
    %v2970 = vsel %vm2964, %v2967, %v2969
    %v2971 = vsel %vm2963, %v2950, %v2953
    %v2972 = vsel %vm2966, %v2959, 920167782
    %v2973 = vsel %vm2965, %v2956, %v2972
    %v2974 = vsel %vm2964, %v2971, %v2973
    %v2975 = vsel %vm2963, %v2953, %v2956
    %v2976 = vsel %vm2966, %v2962, 1326507024
    %v2977 = vsel %vm2965, %v2959, %v2976
    %v2978 = vsel %vm2964, %v2975, %v2977
    %v2979 = vshll.u32 %v2939, 8
    %v2980 = vmul.u32.u64.compose %v2979, %v2978
    %v2981 = vextract.low.u32 %v2980
    %v2982 = vextract.high.u32 %v2980
    %v2983 = vmul.u32.u64.compose %v2979, %v2974
    %v2984 = vextract.low.u32 %v2983
    %v2985 = vextract.high.u32 %v2983
    %v2986 = vmul.u32 %v2979, %v2970
    %v2987 = vadd.s32 %v2982, %v2984
    %vm2988 = vc.u32 %v2982, %v2984
    %v2989 = vadd.s32 %v2985, 1
    %v2990 = vsel %vm2988, %v2989, %v2985
    %v2991 = vadd.s32 %v2986, %v2990
    %v2992 = vadd.s32 %v2991, 536870912
    %v2993 = vshrl.u32 %v2992, 30
    %v2994 = vshll.u32 %v2993, 30
    %v2995 = vsub.s32 %v2991, %v2994
    %vm2996 = vcmp.lt.s32.totalorder %v2995, 0
    %v2997 = vsub.s32 0, %v2995
    %v2998 = vsel %vm2996, %v2997, %v2995
    %v2999 = vclz %v2998
    %v3000 = vsub.s32 %v2999, 2
    %vm3001 = vcmp.gt.s32.totalorder 0, %v3000
    %v3002 = vsel %vm3001, 0, %v3000
    %v3003 = vsub.s32 32, %v3002
    %v3004 = vshll.u32 %v2995, %v3002
    %v3005 = vshrl.u32 %v2987, %v3003
    %v3006 = vor.u32 %v3004, %v3005
    %v3007 = vsub.s32 4294967266, %v3002
    %v3008 = vadd.s32 %v3007, 127
    %v3009 = vshll.u32 %v3008, 23
    %v3010 = vor.u32 4788187, %v3009
    %v3011 = vand.u32 2147483647, %v3010
    %v3013 = vcvt.s32.f32 %v3006
    %v3014 = vmul.f32 %v3013, %v3011
    %v3015 = vxor.u32 %v3014, 2147483648
    %v3016 = vsel %vm2933, %v3015, %v3014
    %v3017 = vsub.s32 4, %v2993
    %v3018 = vsel %vm2933, %v3017, %v2993
    %v3019 = vsel %vm2932, %v333, %v3016
    %v3020 = vsel %vm2932, 0, %v3018
    %v3021 = vcosq.f32.pop %v3019
    %v3022 = vsinq.f32.pop %v3019
    %vm3023 = vweird.f32 %v333
    %v3024 = vand.u32 %v3020, 3
    %vm3025 = vcmp.lt.s32.totalorder %v3024, 2
    %vm3026 = vcmp.eq.s32.totalorder %v3024, 0
    %v3027 = vxor.u32 %v3022, 2147483648
    %v3028 = vsel %vm3026, %v3021, %v3027
    %vm3029 = vcmp.eq.s32.totalorder %v3024, 2
    %v3030 = vxor.u32 %v3021, 2147483648
    %v3031 = vsel %vm3029, %v3030, %v3022
    %v3032 = vsel %vm3025, %v3028, %v3031
    %v3033 = vsel %vm3023, nan, %v3032
    %v3034 = vand.u32 2147483647, %v334
    %vm3035 = vcmp.le.f32.partialorder %v3034, 0.7853982
    %vm3036 = vcmp.lt.s32.totalorder %v334, 0
    %v3037 = vand.u32 %v334, 2139095040
    %v3038 = vshrl.u32 %v3037, 23
    %v3039 = vsub.s32 %v3038, 127
    %v3040 = vand.u32 2147483647, %v334
    %v3041 = vand.u32 %v3040, 8388607
    %v3042 = vor.u32 %v3041, 8388608
    %v3043 = vsub.s32 0, %v3042
    %v3044 = vadd.s32 %v3039, 1
    %vm3045 = vcmp.gt.s32.totalorder %v3044, 0
    %v3046 = vsel %vm3045, %v3044, 0
    %v3047 = vshrl.u32 %v3046, 5
    %v3048 = vand.u32 %v3046, 31
    %v3049 = vsub.s32 32, %v3048
    %v3050 = vshrl.u32 683565275, %v3049
    %v3051 = vshll.u32 683565275, %v3048
    %v3052 = vshrl.u32 2475754826, %v3049
    %v3053 = vor.u32 %v3051, %v3052
    %v3054 = vshll.u32 2475754826, %v3048
    %v3055 = vshrl.u32 2131351028, %v3049
    %v3056 = vor.u32 %v3054, %v3055
    %v3057 = vshll.u32 2131351028, %v3048
    %v3058 = vshrl.u32 2102212464, %v3049
    %v3059 = vor.u32 %v3057, %v3058
    %v3060 = vshll.u32 2102212464, %v3048
    %v3061 = vshrl.u32 920167782, %v3049
    %v3062 = vor.u32 %v3060, %v3061
    %v3063 = vshll.u32 920167782, %v3048
    %v3064 = vshrl.u32 1326507024, %v3049
    %v3065 = vor.u32 %v3063, %v3064
    %vm3066 = vcmp.lt.s32.totalorder %v3047, 1
    %vm3067 = vcmp.lt.s32.totalorder %v3047, 2
    %vm3068 = vcmp.lt.s32.totalorder %v3047, 3
    %vm3069 = vcmp.lt.s32.totalorder %v3047, 4
    %v3070 = vsel %vm3066, %v3050, %v3053
    %v3071 = vsel %vm3069, %v3059, 2102212464
    %v3072 = vsel %vm3068, %v3056, %v3071
    %v3073 = vsel %vm3067, %v3070, %v3072
    %v3074 = vsel %vm3066, %v3053, %v3056
    %v3075 = vsel %vm3069, %v3062, 920167782
    %v3076 = vsel %vm3068, %v3059, %v3075
    %v3077 = vsel %vm3067, %v3074, %v3076
    %v3078 = vsel %vm3066, %v3056, %v3059
    %v3079 = vsel %vm3069, %v3065, 1326507024
    %v3080 = vsel %vm3068, %v3062, %v3079
    %v3081 = vsel %vm3067, %v3078, %v3080
    %v3082 = vshll.u32 %v3042, 8
    %v3083 = vmul.u32.u64.compose %v3082, %v3081
    %v3084 = vextract.low.u32 %v3083
    %v3085 = vextract.high.u32 %v3083
    %v3086 = vmul.u32.u64.compose %v3082, %v3077
    %v3087 = vextract.low.u32 %v3086
    %v3088 = vextract.high.u32 %v3086
    %v3089 = vmul.u32 %v3082, %v3073
    %v3090 = vadd.s32 %v3085, %v3087
    %vm3091 = vc.u32 %v3085, %v3087
    %v3092 = vadd.s32 %v3088, 1
    %v3093 = vsel %vm3091, %v3092, %v3088
    %v3094 = vadd.s32 %v3089, %v3093
    %v3095 = vadd.s32 %v3094, 536870912
    %v3096 = vshrl.u32 %v3095, 30
    %v3097 = vshll.u32 %v3096, 30
    %v3098 = vsub.s32 %v3094, %v3097
    %vm3099 = vcmp.lt.s32.totalorder %v3098, 0
    %v3100 = vsub.s32 0, %v3098
    %v3101 = vsel %vm3099, %v3100, %v3098
    %v3102 = vclz %v3101
    %v3103 = vsub.s32 %v3102, 2
    %vm3104 = vcmp.gt.s32.totalorder 0, %v3103
    %v3105 = vsel %vm3104, 0, %v3103
    %v3106 = vsub.s32 32, %v3105
    %v3107 = vshll.u32 %v3098, %v3105
    %v3108 = vshrl.u32 %v3090, %v3106
    %v3109 = vor.u32 %v3107, %v3108
    %v3110 = vsub.s32 4294967266, %v3105
    %v3111 = vadd.s32 %v3110, 127
    %v3112 = vshll.u32 %v3111, 23
    %v3113 = vor.u32 4788187, %v3112
    %v3114 = vand.u32 2147483647, %v3113
    %v3116 = vcvt.s32.f32 %v3109
    %v3117 = vmul.f32 %v3116, %v3114
    %v3118 = vxor.u32 %v3117, 2147483648
    %v3119 = vsel %vm3036, %v3118, %v3117
    %v3120 = vsub.s32 4, %v3096
    %v3121 = vsel %vm3036, %v3120, %v3096
    %v3122 = vsel %vm3035, %v334, %v3119
    %v3123 = vsel %vm3035, 0, %v3121
    %v3124 = vcosq.f32.pop %v3122
    %v3125 = vsinq.f32.pop %v3122
    %vm3126 = vweird.f32 %v334
    %v3127 = vand.u32 %v3123, 3
    %vm3128 = vcmp.lt.s32.totalorder %v3127, 2
    %vm3129 = vcmp.eq.s32.totalorder %v3127, 0
    %v3130 = vxor.u32 %v3125, 2147483648
    %v3131 = vsel %vm3129, %v3124, %v3130
    %vm3132 = vcmp.eq.s32.totalorder %v3127, 2
    %v3133 = vxor.u32 %v3124, 2147483648
    %v3134 = vsel %vm3132, %v3133, %v3125
    %v3135 = vsel %vm3128, %v3131, %v3134
    %v3136 = vsel %vm3126, nan, %v3135
    %v3137 = vand.u32 2147483647, %v335
    %vm3138 = vcmp.le.f32.partialorder %v3137, 0.7853982
    %vm3139 = vcmp.lt.s32.totalorder %v335, 0
    %v3140 = vand.u32 %v335, 2139095040
    %v3141 = vshrl.u32 %v3140, 23
    %v3142 = vsub.s32 %v3141, 127
    %v3143 = vand.u32 2147483647, %v335
    %v3144 = vand.u32 %v3143, 8388607
    %v3145 = vor.u32 %v3144, 8388608
    %v3146 = vsub.s32 0, %v3145
    %v3147 = vadd.s32 %v3142, 1
    %vm3148 = vcmp.gt.s32.totalorder %v3147, 0
    %v3149 = vsel %vm3148, %v3147, 0
    %v3150 = vshrl.u32 %v3149, 5
    %v3151 = vand.u32 %v3149, 31
    %v3152 = vsub.s32 32, %v3151
    %v3153 = vshrl.u32 683565275, %v3152
    %v3154 = vshll.u32 683565275, %v3151
    %v3155 = vshrl.u32 2475754826, %v3152
    %v3156 = vor.u32 %v3154, %v3155
    %v3157 = vshll.u32 2475754826, %v3151
    %v3158 = vshrl.u32 2131351028, %v3152
    %v3159 = vor.u32 %v3157, %v3158
    %v3160 = vshll.u32 2131351028, %v3151
    %v3161 = vshrl.u32 2102212464, %v3152
    %v3162 = vor.u32 %v3160, %v3161
    %v3163 = vshll.u32 2102212464, %v3151
    %v3164 = vshrl.u32 920167782, %v3152
    %v3165 = vor.u32 %v3163, %v3164
    %v3166 = vshll.u32 920167782, %v3151
    %v3167 = vshrl.u32 1326507024, %v3152
    %v3168 = vor.u32 %v3166, %v3167
    %vm3169 = vcmp.lt.s32.totalorder %v3150, 1
    %vm3170 = vcmp.lt.s32.totalorder %v3150, 2
    %vm3171 = vcmp.lt.s32.totalorder %v3150, 3
    %vm3172 = vcmp.lt.s32.totalorder %v3150, 4
    %v3173 = vsel %vm3169, %v3153, %v3156
    %v3174 = vsel %vm3172, %v3162, 2102212464
    %v3175 = vsel %vm3171, %v3159, %v3174
    %v3176 = vsel %vm3170, %v3173, %v3175
    %v3177 = vsel %vm3169, %v3156, %v3159
    %v3178 = vsel %vm3172, %v3165, 920167782
    %v3179 = vsel %vm3171, %v3162, %v3178
    %v3180 = vsel %vm3170, %v3177, %v3179
    %v3181 = vsel %vm3169, %v3159, %v3162
    %v3182 = vsel %vm3172, %v3168, 1326507024
    %v3183 = vsel %vm3171, %v3165, %v3182
    %v3184 = vsel %vm3170, %v3181, %v3183
    %v3185 = vshll.u32 %v3145, 8
    %v3186 = vmul.u32.u64.compose %v3185, %v3184
    %v3187 = vextract.low.u32 %v3186
    %v3188 = vextract.high.u32 %v3186
    %v3189 = vmul.u32.u64.compose %v3185, %v3180
    %v3190 = vextract.low.u32 %v3189
    %v3191 = vextract.high.u32 %v3189
    %v3192 = vmul.u32 %v3185, %v3176
    %v3193 = vadd.s32 %v3188, %v3190
    %vm3194 = vc.u32 %v3188, %v3190
    %v3195 = vadd.s32 %v3191, 1
    %v3196 = vsel %vm3194, %v3195, %v3191
    %v3197 = vadd.s32 %v3192, %v3196
    %v3198 = vadd.s32 %v3197, 536870912
    %v3199 = vshrl.u32 %v3198, 30
    %v3200 = vshll.u32 %v3199, 30
    %v3201 = vsub.s32 %v3197, %v3200
    %vm3202 = vcmp.lt.s32.totalorder %v3201, 0
    %v3203 = vsub.s32 0, %v3201
    %v3204 = vsel %vm3202, %v3203, %v3201
    %v3205 = vclz %v3204
    %v3206 = vsub.s32 %v3205, 2
    %vm3207 = vcmp.gt.s32.totalorder 0, %v3206
    %v3208 = vsel %vm3207, 0, %v3206
    %v3209 = vsub.s32 32, %v3208
    %v3210 = vshll.u32 %v3201, %v3208
    %v3211 = vshrl.u32 %v3193, %v3209
    %v3212 = vor.u32 %v3210, %v3211
    %v3213 = vsub.s32 4294967266, %v3208
    %v3214 = vadd.s32 %v3213, 127
    %v3215 = vshll.u32 %v3214, 23
    %v3216 = vor.u32 4788187, %v3215
    %v3217 = vand.u32 2147483647, %v3216
    %v3219 = vcvt.s32.f32 %v3212
    %v3220 = vmul.f32 %v3219, %v3217
    %v3221 = vxor.u32 %v3220, 2147483648
    %v3222 = vsel %vm3139, %v3221, %v3220
    %v3223 = vsub.s32 4, %v3199
    %v3224 = vsel %vm3139, %v3223, %v3199
    %v3225 = vsel %vm3138, %v335, %v3222
    %v3226 = vsel %vm3138, 0, %v3224
    %v3227 = vcosq.f32.pop %v3225
    %v3228 = vsinq.f32.pop %v3225
    %vm3229 = vweird.f32 %v335
    %v3230 = vand.u32 %v3226, 3
    %vm3231 = vcmp.lt.s32.totalorder %v3230, 2
    %vm3232 = vcmp.eq.s32.totalorder %v3230, 0
    %v3233 = vxor.u32 %v3228, 2147483648
    %v3234 = vsel %vm3232, %v3227, %v3233
    %vm3235 = vcmp.eq.s32.totalorder %v3230, 2
    %v3236 = vxor.u32 %v3227, 2147483648
    %v3237 = vsel %vm3235, %v3236, %v3228
    %v3238 = vsel %vm3231, %v3234, %v3237
    %v3239 = vsel %vm3229, nan, %v3238
    %v3240 = vand.u32 2147483647, %v336
    %vm3241 = vcmp.le.f32.partialorder %v3240, 0.7853982
    %vm3242 = vcmp.lt.s32.totalorder %v336, 0
    %v3243 = vand.u32 %v336, 2139095040
    %v3244 = vshrl.u32 %v3243, 23
    %v3245 = vsub.s32 %v3244, 127
    %v3246 = vand.u32 2147483647, %v336
    %v3247 = vand.u32 %v3246, 8388607
    %v3248 = vor.u32 %v3247, 8388608
    %v3249 = vsub.s32 0, %v3248
    %v3250 = vadd.s32 %v3245, 1
    %vm3251 = vcmp.gt.s32.totalorder %v3250, 0
    %v3252 = vsel %vm3251, %v3250, 0
    %v3253 = vshrl.u32 %v3252, 5
    %v3254 = vand.u32 %v3252, 31
    %v3255 = vsub.s32 32, %v3254
    %v3256 = vshrl.u32 683565275, %v3255
    %v3257 = vshll.u32 683565275, %v3254
    %v3258 = vshrl.u32 2475754826, %v3255
    %v3259 = vor.u32 %v3257, %v3258
    %v3260 = vshll.u32 2475754826, %v3254
    %v3261 = vshrl.u32 2131351028, %v3255
    %v3262 = vor.u32 %v3260, %v3261
    %v3263 = vshll.u32 2131351028, %v3254
    %v3264 = vshrl.u32 2102212464, %v3255
    %v3265 = vor.u32 %v3263, %v3264
    %v3266 = vshll.u32 2102212464, %v3254
    %v3267 = vshrl.u32 920167782, %v3255
    %v3268 = vor.u32 %v3266, %v3267
    %v3269 = vshll.u32 920167782, %v3254
    %v3270 = vshrl.u32 1326507024, %v3255
    %v3271 = vor.u32 %v3269, %v3270
    %vm3272 = vcmp.lt.s32.totalorder %v3253, 1
    %vm3273 = vcmp.lt.s32.totalorder %v3253, 2
    %vm3274 = vcmp.lt.s32.totalorder %v3253, 3
    %vm3275 = vcmp.lt.s32.totalorder %v3253, 4
    %v3276 = vsel %vm3272, %v3256, %v3259
    %v3277 = vsel %vm3275, %v3265, 2102212464
    %v3278 = vsel %vm3274, %v3262, %v3277
    %v3279 = vsel %vm3273, %v3276, %v3278
    %v3280 = vsel %vm3272, %v3259, %v3262
    %v3281 = vsel %vm3275, %v3268, 920167782
    %v3282 = vsel %vm3274, %v3265, %v3281
    %v3283 = vsel %vm3273, %v3280, %v3282
    %v3284 = vsel %vm3272, %v3262, %v3265
    %v3285 = vsel %vm3275, %v3271, 1326507024
    %v3286 = vsel %vm3274, %v3268, %v3285
    %v3287 = vsel %vm3273, %v3284, %v3286
    %v3288 = vshll.u32 %v3248, 8
    %v3289 = vmul.u32.u64.compose %v3288, %v3287
    %v3290 = vextract.low.u32 %v3289
    %v3291 = vextract.high.u32 %v3289
    %v3292 = vmul.u32.u64.compose %v3288, %v3283
    %v3293 = vextract.low.u32 %v3292
    %v3294 = vextract.high.u32 %v3292
    %v3295 = vmul.u32 %v3288, %v3279
    %v3296 = vadd.s32 %v3291, %v3293
    %vm3297 = vc.u32 %v3291, %v3293
    %v3298 = vadd.s32 %v3294, 1
    %v3299 = vsel %vm3297, %v3298, %v3294
    %v3300 = vadd.s32 %v3295, %v3299
    %v3301 = vadd.s32 %v3300, 536870912
    %v3302 = vshrl.u32 %v3301, 30
    %v3303 = vshll.u32 %v3302, 30
    %v3304 = vsub.s32 %v3300, %v3303
    %vm3305 = vcmp.lt.s32.totalorder %v3304, 0
    %v3306 = vsub.s32 0, %v3304
    %v3307 = vsel %vm3305, %v3306, %v3304
    %v3308 = vclz %v3307
    %v3309 = vsub.s32 %v3308, 2
    %vm3310 = vcmp.gt.s32.totalorder 0, %v3309
    %v3311 = vsel %vm3310, 0, %v3309
    %v3312 = vsub.s32 32, %v3311
    %v3313 = vshll.u32 %v3304, %v3311
    %v3314 = vshrl.u32 %v3296, %v3312
    %v3315 = vor.u32 %v3313, %v3314
    %v3316 = vsub.s32 4294967266, %v3311
    %v3317 = vadd.s32 %v3316, 127
    %v3318 = vshll.u32 %v3317, 23
    %v3319 = vor.u32 4788187, %v3318
    %v3320 = vand.u32 2147483647, %v3319
    %v3322 = vcvt.s32.f32 %v3315
    %v3323 = vmul.f32 %v3322, %v3320
    %v3324 = vxor.u32 %v3323, 2147483648
    %v3325 = vsel %vm3242, %v3324, %v3323
    %v3326 = vsub.s32 4, %v3302
    %v3327 = vsel %vm3242, %v3326, %v3302
    %v3328 = vsel %vm3241, %v336, %v3325
    %v3329 = vsel %vm3241, 0, %v3327
    %v3330 = vcosq.f32.pop %v3328
    %v3331 = vsinq.f32.pop %v3328
    %vm3332 = vweird.f32 %v336
    %v3333 = vand.u32 %v3329, 3
    %vm3334 = vcmp.lt.s32.totalorder %v3333, 2
    %vm3335 = vcmp.eq.s32.totalorder %v3333, 0
    %v3336 = vxor.u32 %v3331, 2147483648
    %v3337 = vsel %vm3335, %v3330, %v3336
    %vm3338 = vcmp.eq.s32.totalorder %v3333, 2
    %v3339 = vxor.u32 %v3330, 2147483648
    %v3340 = vsel %vm3338, %v3339, %v3331
    %v3341 = vsel %vm3334, %v3337, %v3340
    %v3342 = vsel %vm3332, nan, %v3341
    %v3343 = vand.u32 2147483647, %v337
    %vm3344 = vcmp.le.f32.partialorder %v3343, 0.7853982
    %vm3345 = vcmp.lt.s32.totalorder %v337, 0
    %v3346 = vand.u32 %v337, 2139095040
    %v3347 = vshrl.u32 %v3346, 23
    %v3348 = vsub.s32 %v3347, 127
    %v3349 = vand.u32 2147483647, %v337
    %v3350 = vand.u32 %v3349, 8388607
    %v3351 = vor.u32 %v3350, 8388608
    %v3352 = vsub.s32 0, %v3351
    %v3353 = vadd.s32 %v3348, 1
    %vm3354 = vcmp.gt.s32.totalorder %v3353, 0
    %v3355 = vsel %vm3354, %v3353, 0
    %v3356 = vshrl.u32 %v3355, 5
    %v3357 = vand.u32 %v3355, 31
    %v3358 = vsub.s32 32, %v3357
    %v3359 = vshrl.u32 683565275, %v3358
    %v3360 = vshll.u32 683565275, %v3357
    %v3361 = vshrl.u32 2475754826, %v3358
    %v3362 = vor.u32 %v3360, %v3361
    %v3363 = vshll.u32 2475754826, %v3357
    %v3364 = vshrl.u32 2131351028, %v3358
    %v3365 = vor.u32 %v3363, %v3364
    %v3366 = vshll.u32 2131351028, %v3357
    %v3367 = vshrl.u32 2102212464, %v3358
    %v3368 = vor.u32 %v3366, %v3367
    %v3369 = vshll.u32 2102212464, %v3357
    %v3370 = vshrl.u32 920167782, %v3358
    %v3371 = vor.u32 %v3369, %v3370
    %v3372 = vshll.u32 920167782, %v3357
    %v3373 = vshrl.u32 1326507024, %v3358
    %v3374 = vor.u32 %v3372, %v3373
    %vm3375 = vcmp.lt.s32.totalorder %v3356, 1
    %vm3376 = vcmp.lt.s32.totalorder %v3356, 2
    %vm3377 = vcmp.lt.s32.totalorder %v3356, 3
    %vm3378 = vcmp.lt.s32.totalorder %v3356, 4
    %v3379 = vsel %vm3375, %v3359, %v3362
    %v3380 = vsel %vm3378, %v3368, 2102212464
    %v3381 = vsel %vm3377, %v3365, %v3380
    %v3382 = vsel %vm3376, %v3379, %v3381
    %v3383 = vsel %vm3375, %v3362, %v3365
    %v3384 = vsel %vm3378, %v3371, 920167782
    %v3385 = vsel %vm3377, %v3368, %v3384
    %v3386 = vsel %vm3376, %v3383, %v3385
    %v3387 = vsel %vm3375, %v3365, %v3368
    %v3388 = vsel %vm3378, %v3374, 1326507024
    %v3389 = vsel %vm3377, %v3371, %v3388
    %v3390 = vsel %vm3376, %v3387, %v3389
    %v3391 = vshll.u32 %v3351, 8
    %v3392 = vmul.u32.u64.compose %v3391, %v3390
    %v3393 = vextract.low.u32 %v3392
    %v3394 = vextract.high.u32 %v3392
    %v3395 = vmul.u32.u64.compose %v3391, %v3386
    %v3396 = vextract.low.u32 %v3395
    %v3397 = vextract.high.u32 %v3395
    %v3398 = vmul.u32 %v3391, %v3382
    %v3399 = vadd.s32 %v3394, %v3396
    %vm3400 = vc.u32 %v3394, %v3396
    %v3401 = vadd.s32 %v3397, 1
    %v3402 = vsel %vm3400, %v3401, %v3397
    %v3403 = vadd.s32 %v3398, %v3402
    %v3404 = vadd.s32 %v3403, 536870912
    %v3405 = vshrl.u32 %v3404, 30
    %v3406 = vshll.u32 %v3405, 30
    %v3407 = vsub.s32 %v3403, %v3406
    %vm3408 = vcmp.lt.s32.totalorder %v3407, 0
    %v3409 = vsub.s32 0, %v3407
    %v3410 = vsel %vm3408, %v3409, %v3407
    %v3411 = vclz %v3410
    %v3412 = vsub.s32 %v3411, 2
    %vm3413 = vcmp.gt.s32.totalorder 0, %v3412
    %v3414 = vsel %vm3413, 0, %v3412
    %v3415 = vsub.s32 32, %v3414
    %v3416 = vshll.u32 %v3407, %v3414
    %v3417 = vshrl.u32 %v3399, %v3415
    %v3418 = vor.u32 %v3416, %v3417
    %v3419 = vsub.s32 4294967266, %v3414
    %v3420 = vadd.s32 %v3419, 127
    %v3421 = vshll.u32 %v3420, 23
    %v3422 = vor.u32 4788187, %v3421
    %v3423 = vand.u32 2147483647, %v3422
    %v3425 = vcvt.s32.f32 %v3418
    %v3426 = vmul.f32 %v3425, %v3423
    %v3427 = vxor.u32 %v3426, 2147483648
    %v3428 = vsel %vm3345, %v3427, %v3426
    %v3429 = vsub.s32 4, %v3405
    %v3430 = vsel %vm3345, %v3429, %v3405
    %v3431 = vsel %vm3344, %v337, %v3428
    %v3432 = vsel %vm3344, 0, %v3430
    %v3433 = vcosq.f32.pop %v3431
    %v3434 = vsinq.f32.pop %v3431
    %vm3435 = vweird.f32 %v337
    %v3436 = vand.u32 %v3432, 3
    %vm3437 = vcmp.lt.s32.totalorder %v3436, 2
    %vm3438 = vcmp.eq.s32.totalorder %v3436, 0
    %v3439 = vxor.u32 %v3434, 2147483648
    %v3440 = vsel %vm3438, %v3433, %v3439
    %vm3441 = vcmp.eq.s32.totalorder %v3436, 2
    %v3442 = vxor.u32 %v3433, 2147483648
    %v3443 = vsel %vm3441, %v3442, %v3434
    %v3444 = vsel %vm3437, %v3440, %v3443
    %v3445 = vsel %vm3435, nan, %v3444
    %v3446 = vand.u32 2147483647, %v338
    %vm3447 = vcmp.le.f32.partialorder %v3446, 0.7853982
    %vm3448 = vcmp.lt.s32.totalorder %v338, 0
    %v3449 = vand.u32 %v338, 2139095040
    %v3450 = vshrl.u32 %v3449, 23
    %v3451 = vsub.s32 %v3450, 127
    %v3452 = vand.u32 2147483647, %v338
    %v3453 = vand.u32 %v3452, 8388607
    %v3454 = vor.u32 %v3453, 8388608
    %v3455 = vsub.s32 0, %v3454
    %v3456 = vadd.s32 %v3451, 1
    %vm3457 = vcmp.gt.s32.totalorder %v3456, 0
    %v3458 = vsel %vm3457, %v3456, 0
    %v3459 = vshrl.u32 %v3458, 5
    %v3460 = vand.u32 %v3458, 31
    %v3461 = vsub.s32 32, %v3460
    %v3462 = vshrl.u32 683565275, %v3461
    %v3463 = vshll.u32 683565275, %v3460
    %v3464 = vshrl.u32 2475754826, %v3461
    %v3465 = vor.u32 %v3463, %v3464
    %v3466 = vshll.u32 2475754826, %v3460
    %v3467 = vshrl.u32 2131351028, %v3461
    %v3468 = vor.u32 %v3466, %v3467
    %v3469 = vshll.u32 2131351028, %v3460
    %v3470 = vshrl.u32 2102212464, %v3461
    %v3471 = vor.u32 %v3469, %v3470
    %v3472 = vshll.u32 2102212464, %v3460
    %v3473 = vshrl.u32 920167782, %v3461
    %v3474 = vor.u32 %v3472, %v3473
    %v3475 = vshll.u32 920167782, %v3460
    %v3476 = vshrl.u32 1326507024, %v3461
    %v3477 = vor.u32 %v3475, %v3476
    %vm3478 = vcmp.lt.s32.totalorder %v3459, 1
    %vm3479 = vcmp.lt.s32.totalorder %v3459, 2
    %vm3480 = vcmp.lt.s32.totalorder %v3459, 3
    %vm3481 = vcmp.lt.s32.totalorder %v3459, 4
    %v3482 = vsel %vm3478, %v3462, %v3465
    %v3483 = vsel %vm3481, %v3471, 2102212464
    %v3484 = vsel %vm3480, %v3468, %v3483
    %v3485 = vsel %vm3479, %v3482, %v3484
    %v3486 = vsel %vm3478, %v3465, %v3468
    %v3487 = vsel %vm3481, %v3474, 920167782
    %v3488 = vsel %vm3480, %v3471, %v3487
    %v3489 = vsel %vm3479, %v3486, %v3488
    %v3490 = vsel %vm3478, %v3468, %v3471
    %v3491 = vsel %vm3481, %v3477, 1326507024
    %v3492 = vsel %vm3480, %v3474, %v3491
    %v3493 = vsel %vm3479, %v3490, %v3492
    %v3494 = vshll.u32 %v3454, 8
    %v3495 = vmul.u32.u64.compose %v3494, %v3493
    %v3496 = vextract.low.u32 %v3495
    %v3497 = vextract.high.u32 %v3495
    %v3498 = vmul.u32.u64.compose %v3494, %v3489
    %v3499 = vextract.low.u32 %v3498
    %v3500 = vextract.high.u32 %v3498
    %v3501 = vmul.u32 %v3494, %v3485
    %v3502 = vadd.s32 %v3497, %v3499
    %vm3503 = vc.u32 %v3497, %v3499
    %v3504 = vadd.s32 %v3500, 1
    %v3505 = vsel %vm3503, %v3504, %v3500
    %v3506 = vadd.s32 %v3501, %v3505
    %v3507 = vadd.s32 %v3506, 536870912
    %v3508 = vshrl.u32 %v3507, 30
    %v3509 = vshll.u32 %v3508, 30
    %v3510 = vsub.s32 %v3506, %v3509
    %vm3511 = vcmp.lt.s32.totalorder %v3510, 0
    %v3512 = vsub.s32 0, %v3510
    %v3513 = vsel %vm3511, %v3512, %v3510
    %v3514 = vclz %v3513
    %v3515 = vsub.s32 %v3514, 2
    %vm3516 = vcmp.gt.s32.totalorder 0, %v3515
    %v3517 = vsel %vm3516, 0, %v3515
    %v3518 = vsub.s32 32, %v3517
    %v3519 = vshll.u32 %v3510, %v3517
    %v3520 = vshrl.u32 %v3502, %v3518
    %v3521 = vor.u32 %v3519, %v3520
    %v3522 = vsub.s32 4294967266, %v3517
    %v3523 = vadd.s32 %v3522, 127
    %v3524 = vshll.u32 %v3523, 23
    %v3525 = vor.u32 4788187, %v3524
    %v3526 = vand.u32 2147483647, %v3525
    %v3528 = vcvt.s32.f32 %v3521
    %v3529 = vmul.f32 %v3528, %v3526
    %v3530 = vxor.u32 %v3529, 2147483648
    %v3531 = vsel %vm3448, %v3530, %v3529
    %v3532 = vsub.s32 4, %v3508
    %v3533 = vsel %vm3448, %v3532, %v3508
    %v3534 = vsel %vm3447, %v338, %v3531
    %v3535 = vsel %vm3447, 0, %v3533
    %v3536 = vcosq.f32.pop %v3534
    %v3537 = vsinq.f32.pop %v3534
    %vm3538 = vweird.f32 %v338
    %v3539 = vand.u32 %v3535, 3
    %vm3540 = vcmp.lt.s32.totalorder %v3539, 2
    %vm3541 = vcmp.eq.s32.totalorder %v3539, 0
    %v3542 = vxor.u32 %v3537, 2147483648
    %v3543 = vsel %vm3541, %v3536, %v3542
    %vm3544 = vcmp.eq.s32.totalorder %v3539, 2
    %v3545 = vxor.u32 %v3536, 2147483648
    %v3546 = vsel %vm3544, %v3545, %v3537
    %v3547 = vsel %vm3540, %v3543, %v3546
    %v3548 = vsel %vm3538, nan, %v3547
    %v3549 = vand.u32 2147483647, %v339
    %vm3550 = vcmp.le.f32.partialorder %v3549, 0.7853982
    %vm3551 = vcmp.lt.s32.totalorder %v339, 0
    %v3552 = vand.u32 %v339, 2139095040
    %v3553 = vshrl.u32 %v3552, 23
    %v3554 = vsub.s32 %v3553, 127
    %v3555 = vand.u32 2147483647, %v339
    %v3556 = vand.u32 %v3555, 8388607
    %v3557 = vor.u32 %v3556, 8388608
    %v3558 = vsub.s32 0, %v3557
    %v3559 = vadd.s32 %v3554, 1
    %vm3560 = vcmp.gt.s32.totalorder %v3559, 0
    %v3561 = vsel %vm3560, %v3559, 0
    %v3562 = vshrl.u32 %v3561, 5
    %v3563 = vand.u32 %v3561, 31
    %v3564 = vsub.s32 32, %v3563
    %v3565 = vshrl.u32 683565275, %v3564
    %v3566 = vshll.u32 683565275, %v3563
    %v3567 = vshrl.u32 2475754826, %v3564
    %v3568 = vor.u32 %v3566, %v3567
    %v3569 = vshll.u32 2475754826, %v3563
    %v3570 = vshrl.u32 2131351028, %v3564
    %v3571 = vor.u32 %v3569, %v3570
    %v3572 = vshll.u32 2131351028, %v3563
    %v3573 = vshrl.u32 2102212464, %v3564
    %v3574 = vor.u32 %v3572, %v3573
    %v3575 = vshll.u32 2102212464, %v3563
    %v3576 = vshrl.u32 920167782, %v3564
    %v3577 = vor.u32 %v3575, %v3576
    %v3578 = vshll.u32 920167782, %v3563
    %v3579 = vshrl.u32 1326507024, %v3564
    %v3580 = vor.u32 %v3578, %v3579
    %vm3581 = vcmp.lt.s32.totalorder %v3562, 1
    %vm3582 = vcmp.lt.s32.totalorder %v3562, 2
    %vm3583 = vcmp.lt.s32.totalorder %v3562, 3
    %vm3584 = vcmp.lt.s32.totalorder %v3562, 4
    %v3585 = vsel %vm3581, %v3565, %v3568
    %v3586 = vsel %vm3584, %v3574, 2102212464
    %v3587 = vsel %vm3583, %v3571, %v3586
    %v3588 = vsel %vm3582, %v3585, %v3587
    %v3589 = vsel %vm3581, %v3568, %v3571
    %v3590 = vsel %vm3584, %v3577, 920167782
    %v3591 = vsel %vm3583, %v3574, %v3590
    %v3592 = vsel %vm3582, %v3589, %v3591
    %v3593 = vsel %vm3581, %v3571, %v3574
    %v3594 = vsel %vm3584, %v3580, 1326507024
    %v3595 = vsel %vm3583, %v3577, %v3594
    %v3596 = vsel %vm3582, %v3593, %v3595
    %v3597 = vshll.u32 %v3557, 8
    %v3598 = vmul.u32.u64.compose %v3597, %v3596
    %v3599 = vextract.low.u32 %v3598
    %v3600 = vextract.high.u32 %v3598
    %v3601 = vmul.u32.u64.compose %v3597, %v3592
    %v3602 = vextract.low.u32 %v3601
    %v3603 = vextract.high.u32 %v3601
    %v3604 = vmul.u32 %v3597, %v3588
    %v3605 = vadd.s32 %v3600, %v3602
    %vm3606 = vc.u32 %v3600, %v3602
    %v3607 = vadd.s32 %v3603, 1
    %v3608 = vsel %vm3606, %v3607, %v3603
    %v3609 = vadd.s32 %v3604, %v3608
    %v3610 = vadd.s32 %v3609, 536870912
    %v3611 = vshrl.u32 %v3610, 30
    %v3612 = vshll.u32 %v3611, 30
    %v3613 = vsub.s32 %v3609, %v3612
    %vm3614 = vcmp.lt.s32.totalorder %v3613, 0
    %v3615 = vsub.s32 0, %v3613
    %v3616 = vsel %vm3614, %v3615, %v3613
    %v3617 = vclz %v3616
    %v3618 = vsub.s32 %v3617, 2
    %vm3619 = vcmp.gt.s32.totalorder 0, %v3618
    %v3620 = vsel %vm3619, 0, %v3618
    %v3621 = vsub.s32 32, %v3620
    %v3622 = vshll.u32 %v3613, %v3620
    %v3623 = vshrl.u32 %v3605, %v3621
    %v3624 = vor.u32 %v3622, %v3623
    %v3625 = vsub.s32 4294967266, %v3620
    %v3626 = vadd.s32 %v3625, 127
    %v3627 = vshll.u32 %v3626, 23
    %v3628 = vor.u32 4788187, %v3627
    %v3629 = vand.u32 2147483647, %v3628
    %v3631 = vcvt.s32.f32 %v3624
    %v3632 = vmul.f32 %v3631, %v3629
    %v3633 = vxor.u32 %v3632, 2147483648
    %v3634 = vsel %vm3551, %v3633, %v3632
    %v3635 = vsub.s32 4, %v3611
    %v3636 = vsel %vm3551, %v3635, %v3611
    %v3637 = vsel %vm3550, %v339, %v3634
    %v3638 = vsel %vm3550, 0, %v3636
    %v3639 = vcosq.f32.pop %v3637
    %v3640 = vsinq.f32.pop %v3637
    %vm3641 = vweird.f32 %v339
    %v3642 = vand.u32 %v3638, 3
    %vm3643 = vcmp.lt.s32.totalorder %v3642, 2
    %vm3644 = vcmp.eq.s32.totalorder %v3642, 0
    %v3645 = vxor.u32 %v3640, 2147483648
    %v3646 = vsel %vm3644, %v3639, %v3645
    %vm3647 = vcmp.eq.s32.totalorder %v3642, 2
    %v3648 = vxor.u32 %v3639, 2147483648
    %v3649 = vsel %vm3647, %v3648, %v3640
    %v3650 = vsel %vm3643, %v3646, %v3649
    %v3651 = vsel %vm3641, nan, %v3650
    %v3652 = vld [vmem:[%s2] sm:$0xff]
    %v3653 = vld [vmem:[%s2 + $0x8] sm:$0xff]
    %v3654 = vld [vmem:[%s2 + $0x10] sm:$0xff]
    %v3655 = vld [vmem:[%s3] sm:$0xff]
    %v3656 = vld [vmem:[%s3 + $0x8] sm:$0xff]
    %v3657 = vld [vmem:[%s3 + $0x10] sm:$0xff]
    %vm3658 = vcmask 195584
    %v3660 = vsel %vm3658, %v2106, 0
    %v3663 = vsel %vm3658, %v2209, 0
    %v3666 = vsel %vm3658, %v2312, 0
    %v3669 = vsel %vm3658, %v2415, 0
    %v3672 = vsel %vm3658, %v2518, 0
    %v3675 = vsel %vm3658, %v2621, 0
    %v3678 = vsel %vm3658, %v2724, 0
    %v3681 = vsel %vm3658, %v2827, 0
    %v3684 = vsel %vm3658, %v2930, 0
    %v3687 = vsel %vm3658, %v3033, 0
    %v3690 = vsel %vm3658, %v3136, 0
    %v3693 = vsel %vm3658, %v3239, 0
    %v3696 = vsel %vm3658, %v3342, 0
    %v3699 = vsel %vm3658, %v3445, 0
    %v3702 = vsel %vm3658, %v3548, 0
    %v3705 = vsel %vm3658, %v3651, 0
    %3707 = vmatprep.subr.mxu0 0.0
    %3708 = vmatpush1.msra.mxu0 %v3655
    %3709 = vmatprep.subr.mxu0 0.0
    %3710 = vmatpush1.msra.mxu0 %v3656
    %3711 = vmatprep.subr.mxu0 0.0
    %3712 = vmatpush1.msra.mxu0 %v3657
    %3713 = vmatprep.subr.mxu0 0.0
    %3714 = vmatpush1.msra.mxu0 0.0
    %3715 = vmatprep.subr.mxu0 0.0
    %3716 = vmatpush1.msra.mxu0 0.0
    %3717 = vmatprep.subr.mxu0 0.0
    %3718 = vmatpush1.msra.mxu0 0.0
    %3719 = vmatprep.subr.mxu0 0.0
    %3720 = vmatpush1.msra.mxu0 0.0
    %3721 = vmatprep.subr.mxu0 0.0
    %3722 = vmatpush1.msra.mxu0 0.0
    %3723 = vmatprep.subr.mxu0 0.0
    %3724 = vmatpush1.msra.mxu0 0.0
    %3725 = vmatprep.subr.mxu0 0.0
    %3726 = vmatpush1.msra.mxu0 0.0
    %3727 = vmatprep.subr.mxu0 0.0
    %3728 = vmatpush1.msra.mxu0 0.0
    %3729 = vmatprep.subr.mxu0 0.0
    %3730 = vmatpush1.msra.mxu0 0.0
    %3731 = vmatprep.subr.mxu0 0.0
    %3732 = vmatpush1.msra.mxu0 0.0
    %3733 = vmatprep.subr.mxu0 0.0
    %3734 = vmatpush1.msra.mxu0 0.0
    %3735 = vmatprep.subr.mxu0 0.0
    %3736 = vmatpush1.msra.mxu0 0.0
    %3737 = vmatprep.subr.mxu0 0.0
    %3738 = vmatpush1.msra.mxu0 0.0
    %3739 = vmatprep.subr.mxu0 0.0
    %3740 = vmatpush1.msra.mxu0 0.0
    %3741 = vmatprep.subr.mxu0 0.0
    %3742 = vmatpush1.msra.mxu0 0.0
    %3743 = vmatprep.subr.mxu0 0.0
    %3744 = vmatpush1.msra.mxu0 0.0
    %3745 = vmatprep.subr.mxu0 0.0
    %3746 = vmatpush1.msra.mxu0 0.0
    %3747 = vmatprep.subr.mxu0 0.0
    %3748 = vmatpush1.msra.mxu0 0.0
    %3749 = vmatprep.subr.mxu0 0.0
    %3750 = vmatpush1.msra.mxu0 0.0
    %3751 = vmatprep.subr.mxu0 0.0
    %3752 = vmatpush1.msra.mxu0 0.0
    %3753 = vmatprep.subr.mxu0 0.0
    %3754 = vmatpush1.msra.mxu0 0.0
    %3755 = vmatprep.subr.mxu0 0.0
    %3756 = vmatpush1.msra.mxu0 0.0
    %3757 = vmatprep.subr.mxu0 0.0
    %3758 = vmatpush1.msra.mxu0 0.0
    %3759 = vmatprep.subr.mxu0 0.0
    %3760 = vmatpush1.msra.mxu0 0.0
    %3761 = vmatprep.subr.mxu0 0.0
    %3762 = vmatpush1.msra.mxu0 0.0
    %3763 = vmatprep.subr.mxu0 0.0
    %3764 = vmatpush1.msra.mxu0 0.0
    %3765 = vmatprep.subr.mxu0 0.0
    %3766 = vmatpush1.msra.mxu0 0.0
    %3767 = vmatprep.subr.mxu0 0.0
    %3768 = vmatpush1.msra.mxu0 0.0
    %3769 = vmatprep.subr.mxu0 0.0
    %3770 = vmatpush1.msra.mxu0 0.0
    %3771 = vmatprep.mubr.f32.mxu0 0.0
    %3772 = vmatmul.mubr.f32.gmra.mrb[0].mxu0 %v3660
    %v3773 = vpop.f32.mrb[0].mxu0
    %v3774 = vadd.f32 0.0, %v3773
    %v3775 = vpop.f32.mrb[0].mxu0
    %3776 = vmatprep.mubr.f32.mxu0 0.0
    %3777 = vmatmul.mubr.f32.gmra.mrb[0].mxu0 %v3663
    %v3778 = vpop.f32.mrb[0].mxu0
    %v3779 = vadd.f32 0.0, %v3778
    %v3780 = vpop.f32.mrb[0].mxu0
    %3781 = vmatprep.mubr.f32.mxu0 0.0
    %3782 = vmatmul.mubr.f32.gmra.mrb[0].mxu0 %v3666
    %v3783 = vpop.f32.mrb[0].mxu0
    %v3784 = vadd.f32 0.0, %v3783
    %v3785 = vpop.f32.mrb[0].mxu0
    %3786 = vmatprep.mubr.f32.mxu0 0.0
    %3787 = vmatmul.mubr.f32.gmra.mrb[0].mxu0 %v3669
    %v3788 = vpop.f32.mrb[0].mxu0
    %v3789 = vadd.f32 0.0, %v3788
    %v3790 = vpop.f32.mrb[0].mxu0
    %3791 = vmatprep.mubr.f32.mxu0 0.0
    %3792 = vmatmul.mubr.f32.gmra.mrb[0].mxu0 %v3672
    %v3793 = vpop.f32.mrb[0].mxu0
    %v3794 = vadd.f32 0.0, %v3793
    %v3795 = vpop.f32.mrb[0].mxu0
    %3796 = vmatprep.mubr.f32.mxu0 0.0
    %3797 = vmatmul.mubr.f32.gmra.mrb[0].mxu0 %v3675
    %v3798 = vpop.f32.mrb[0].mxu0
    %v3799 = vadd.f32 0.0, %v3798
    %v3800 = vpop.f32.mrb[0].mxu0
    %3801 = vmatprep.mubr.f32.mxu0 0.0
    %3802 = vmatmul.mubr.f32.gmra.mrb[0].mxu0 %v3678
    %v3803 = vpop.f32.mrb[0].mxu0
    %v3804 = vadd.f32 0.0, %v3803
    %v3805 = vpop.f32.mrb[0].mxu0
    %3806 = vmatprep.mubr.f32.mxu0 0.0
    %3807 = vmatmul.mubr.f32.gmra.mrb[0].mxu0 %v3681
    %v3808 = vpop.f32.mrb[0].mxu0
    %v3809 = vadd.f32 0.0, %v3808
    %v3810 = vpop.f32.mrb[0].mxu0
    %3811 = vmatprep.mubr.f32.mxu0 0.0
    %3812 = vmatmul.mubr.f32.gmra.mrb[0].mxu0 %v3684
    %v3813 = vpop.f32.mrb[0].mxu0
    %v3814 = vadd.f32 0.0, %v3813
    %v3815 = vpop.f32.mrb[0].mxu0
    %3816 = vmatprep.mubr.f32.mxu0 0.0
    %3817 = vmatmul.mubr.f32.gmra.mrb[0].mxu0 %v3687
    %v3818 = vpop.f32.mrb[0].mxu0
    %v3819 = vadd.f32 0.0, %v3818
    %v3820 = vpop.f32.mrb[0].mxu0
    %3821 = vmatprep.mubr.f32.mxu0 0.0
    %3822 = vmatmul.mubr.f32.gmra.mrb[0].mxu0 %v3690
    %v3823 = vpop.f32.mrb[0].mxu0
    %v3824 = vadd.f32 0.0, %v3823
    %v3825 = vpop.f32.mrb[0].mxu0
    %3826 = vmatprep.mubr.f32.mxu0 0.0
    %3827 = vmatmul.mubr.f32.gmra.mrb[0].mxu0 %v3693
    %v3828 = vpop.f32.mrb[0].mxu0
    %v3829 = vadd.f32 0.0, %v3828
    %v3830 = vpop.f32.mrb[0].mxu0
    %3831 = vmatprep.mubr.f32.mxu0 0.0
    %3832 = vmatmul.mubr.f32.gmra.mrb[0].mxu0 %v3696
    %v3833 = vpop.f32.mrb[0].mxu0
    %v3834 = vadd.f32 0.0, %v3833
    %v3835 = vpop.f32.mrb[0].mxu0
    %3836 = vmatprep.mubr.f32.mxu0 0.0
    %3837 = vmatmul.mubr.f32.gmra.mrb[0].mxu0 %v3699
    %v3838 = vpop.f32.mrb[0].mxu0
    %v3839 = vadd.f32 0.0, %v3838
    %v3840 = vpop.f32.mrb[0].mxu0
    %3841 = vmatprep.mubr.f32.mxu0 0.0
    %3842 = vmatmul.mubr.f32.gmra.mrb[0].mxu0 %v3702
    %v3843 = vpop.f32.mrb[0].mxu0
    %v3844 = vadd.f32 0.0, %v3843
    %v3845 = vpop.f32.mrb[0].mxu0
    %3846 = vmatprep.mubr.f32.mxu0 0.0
    %3847 = vmatmul.mubr.f32.gmra.mrb[0].mxu0 %v3705
    %v3848 = vpop.f32.mrb[0].mxu0
    %v3849 = vadd.f32 0.0, %v3848
    %v3850 = vpop.f32.mrb[0].mxu0
    %3851 = vdwg.mxu0
    %v3853 = vsel %vm3658, %v443, 0
    %v3856 = vsel %vm3658, %v547, 0
    %v3859 = vsel %vm3658, %v651, 0
    %v3862 = vsel %vm3658, %v755, 0
    %v3865 = vsel %vm3658, %v859, 0
    %v3868 = vsel %vm3658, %v963, 0
    %v3871 = vsel %vm3658, %v1067, 0
    %v3874 = vsel %vm3658, %v1171, 0
    %v3877 = vsel %vm3658, %v1275, 0
    %v3880 = vsel %vm3658, %v1379, 0
    %v3883 = vsel %vm3658, %v1483, 0
    %v3886 = vsel %vm3658, %v1587, 0
    %v3889 = vsel %vm3658, %v1691, 0
    %v3892 = vsel %vm3658, %v1795, 0
    %v3895 = vsel %vm3658, %v1899, 0
    %v3898 = vsel %vm3658, %v2003, 0
    %3900 = vmatprep.subr.mxu0 0.0
    %3901 = vmatpush1.msra.mxu0 %v3652
    %3902 = vmatprep.subr.mxu0 0.0
    %3903 = vmatpush1.msra.mxu0 %v3653
    %3904 = vmatprep.subr.mxu0 0.0
    %3905 = vmatpush1.msra.mxu0 %v3654
    %3906 = vmatprep.subr.mxu0 0.0
    %3907 = vmatpush1.msra.mxu0 0.0
    %3908 = vmatprep.subr.mxu0 0.0
    %3909 = vmatpush1.msra.mxu0 0.0
    %3910 = vmatprep.subr.mxu0 0.0
    %3911 = vmatpush1.msra.mxu0 0.0
    %3912 = vmatprep.subr.mxu0 0.0
    %3913 = vmatpush1.msra.mxu0 0.0
    %3914 = vmatprep.subr.mxu0 0.0
    %3915 = vmatpush1.msra.mxu0 0.0
    %3916 = vmatprep.subr.mxu0 0.0
    %3917 = vmatpush1.msra.mxu0 0.0
    %3918 = vmatprep.subr.mxu0 0.0
    %3919 = vmatpush1.msra.mxu0 0.0
    %3920 = vmatprep.subr.mxu0 0.0
    %3921 = vmatpush1.msra.mxu0 0.0
    %3922 = vmatprep.subr.mxu0 0.0
    %3923 = vmatpush1.msra.mxu0 0.0
    %3924 = vmatprep.subr.mxu0 0.0
    %3925 = vmatpush1.msra.mxu0 0.0
    %3926 = vmatprep.subr.mxu0 0.0
    %3927 = vmatpush1.msra.mxu0 0.0
    %3928 = vmatprep.subr.mxu0 0.0
    %3929 = vmatpush1.msra.mxu0 0.0
    %3930 = vmatprep.subr.mxu0 0.0
    %3931 = vmatpush1.msra.mxu0 0.0
    %3932 = vmatprep.subr.mxu0 0.0
    %3933 = vmatpush1.msra.mxu0 0.0
    %3934 = vmatprep.subr.mxu0 0.0
    %3935 = vmatpush1.msra.mxu0 0.0
    %3936 = vmatprep.subr.mxu0 0.0
    %3937 = vmatpush1.msra.mxu0 0.0
    %3938 = vmatprep.subr.mxu0 0.0
    %3939 = vmatpush1.msra.mxu0 0.0
    %3940 = vmatprep.subr.mxu0 0.0
    %3941 = vmatpush1.msra.mxu0 0.0
    %3942 = vmatprep.subr.mxu0 0.0
    %3943 = vmatpush1.msra.mxu0 0.0
    %3944 = vmatprep.subr.mxu0 0.0
    %3945 = vmatpush1.msra.mxu0 0.0
    %3946 = vmatprep.subr.mxu0 0.0
    %3947 = vmatpush1.msra.mxu0 0.0
    %3948 = vmatprep.subr.mxu0 0.0
    %3949 = vmatpush1.msra.mxu0 0.0
    %3950 = vmatprep.subr.mxu0 0.0
    %3951 = vmatpush1.msra.mxu0 0.0
    %3952 = vmatprep.subr.mxu0 0.0
    %3953 = vmatpush1.msra.mxu0 0.0
    %3954 = vmatprep.subr.mxu0 0.0
    %3955 = vmatpush1.msra.mxu0 0.0
    %3956 = vmatprep.subr.mxu0 0.0
    %3957 = vmatpush1.msra.mxu0 0.0
    %3958 = vmatprep.subr.mxu0 0.0
    %3959 = vmatpush1.msra.mxu0 0.0
    %3960 = vmatprep.subr.mxu0 0.0
    %3961 = vmatpush1.msra.mxu0 0.0
    %3962 = vmatprep.subr.mxu0 0.0
    %3963 = vmatpush1.msra.mxu0 0.0
    %3964 = vmatprep.mubr.f32.mxu0 0.0
    %3965 = vmatmul.mubr.f32.gmra.mrb[0].mxu0 %v3853
    %v3966 = vpop.f32.mrb[0].mxu0
    %v3967 = vadd.f32 %v3774, %v3966
    %v3968 = vpop.f32.mrb[0].mxu0
    %3969 = vmatprep.mubr.f32.mxu0 0.0
    %3970 = vmatmul.mubr.f32.gmra.mrb[0].mxu0 %v3856
    %v3971 = vpop.f32.mrb[0].mxu0
    %v3972 = vadd.f32 %v3779, %v3971
    %v3973 = vpop.f32.mrb[0].mxu0
    %3974 = vmatprep.mubr.f32.mxu0 0.0
    %3975 = vmatmul.mubr.f32.gmra.mrb[0].mxu0 %v3859
    %v3976 = vpop.f32.mrb[0].mxu0
    %v3977 = vadd.f32 %v3784, %v3976
    %v3978 = vpop.f32.mrb[0].mxu0
    %3979 = vmatprep.mubr.f32.mxu0 0.0
    %3980 = vmatmul.mubr.f32.gmra.mrb[0].mxu0 %v3862
    %v3981 = vpop.f32.mrb[0].mxu0
    %v3982 = vadd.f32 %v3789, %v3981
    %v3983 = vpop.f32.mrb[0].mxu0
    %3984 = vmatprep.mubr.f32.mxu0 0.0
    %3985 = vmatmul.mubr.f32.gmra.mrb[0].mxu0 %v3865
    %v3986 = vpop.f32.mrb[0].mxu0
    %v3987 = vadd.f32 %v3794, %v3986
    %v3988 = vpop.f32.mrb[0].mxu0
    %3989 = vmatprep.mubr.f32.mxu0 0.0
    %3990 = vmatmul.mubr.f32.gmra.mrb[0].mxu0 %v3868
    %v3991 = vpop.f32.mrb[0].mxu0
    %v3992 = vadd.f32 %v3799, %v3991
    %v3993 = vpop.f32.mrb[0].mxu0
    %3994 = vmatprep.mubr.f32.mxu0 0.0
    %3995 = vmatmul.mubr.f32.gmra.mrb[0].mxu0 %v3871
    %v3996 = vpop.f32.mrb[0].mxu0
    %v3997 = vadd.f32 %v3804, %v3996
    %v3998 = vpop.f32.mrb[0].mxu0
    %3999 = vmatprep.mubr.f32.mxu0 0.0
    %4000 = vmatmul.mubr.f32.gmra.mrb[0].mxu0 %v3874
    %v4001 = vpop.f32.mrb[0].mxu0
    %v4002 = vadd.f32 %v3809, %v4001
    %v4003 = vpop.f32.mrb[0].mxu0
    %4004 = vmatprep.mubr.f32.mxu0 0.0
    %4005 = vmatmul.mubr.f32.gmra.mrb[0].mxu0 %v3877
    %v4006 = vpop.f32.mrb[0].mxu0
    %v4007 = vadd.f32 %v3814, %v4006
    %v4008 = vpop.f32.mrb[0].mxu0
    %4009 = vmatprep.mubr.f32.mxu0 0.0
    %4010 = vmatmul.mubr.f32.gmra.mrb[0].mxu0 %v3880
    %v4011 = vpop.f32.mrb[0].mxu0
    %v4012 = vadd.f32 %v3819, %v4011
    %v4013 = vpop.f32.mrb[0].mxu0
    %4014 = vmatprep.mubr.f32.mxu0 0.0
    %4015 = vmatmul.mubr.f32.gmra.mrb[0].mxu0 %v3883
    %v4016 = vpop.f32.mrb[0].mxu0
    %v4017 = vadd.f32 %v3824, %v4016
    %v4018 = vpop.f32.mrb[0].mxu0
    %4019 = vmatprep.mubr.f32.mxu0 0.0
    %4020 = vmatmul.mubr.f32.gmra.mrb[0].mxu0 %v3886
    %v4021 = vpop.f32.mrb[0].mxu0
    %v4022 = vadd.f32 %v3829, %v4021
    %v4023 = vpop.f32.mrb[0].mxu0
    %4024 = vmatprep.mubr.f32.mxu0 0.0
    %4025 = vmatmul.mubr.f32.gmra.mrb[0].mxu0 %v3889
    %v4026 = vpop.f32.mrb[0].mxu0
    %v4027 = vadd.f32 %v3834, %v4026
    %v4028 = vpop.f32.mrb[0].mxu0
    %4029 = vmatprep.mubr.f32.mxu0 0.0
    %4030 = vmatmul.mubr.f32.gmra.mrb[0].mxu0 %v3892
    %v4031 = vpop.f32.mrb[0].mxu0
    %v4032 = vadd.f32 %v3839, %v4031
    %v4033 = vpop.f32.mrb[0].mxu0
    %4034 = vmatprep.mubr.f32.mxu0 0.0
    %4035 = vmatmul.mubr.f32.gmra.mrb[0].mxu0 %v3895
    %v4036 = vpop.f32.mrb[0].mxu0
    %v4037 = vadd.f32 %v3844, %v4036
    %v4038 = vpop.f32.mrb[0].mxu0
    %4039 = vmatprep.mubr.f32.mxu0 0.0
    %4040 = vmatmul.mubr.f32.gmra.mrb[0].mxu0 %v3898
    %v4041 = vpop.f32.mrb[0].mxu0
    %v4042 = vadd.f32 %v3849, %v4041
    %v4043 = vpop.f32.mrb[0].mxu0
    %4044 = vdwg.mxu0
    %v4045 = vld [vmem:[%s4] sm:$0x1]
    %v4046 = vlaneseq
    %v4047 = vshrl.u32 %v4046, 7
    %v4048 = vsub.s32 0, %v4047
    %v4049 = vrot.slane %v4045, %v4048
    %v4050 = vmul.f32 %v41, %v4049
    %v4051 = vmul.f32 %v46, %v4049
    %v4052 = vmul.f32 %v51, %v4049
    %v4053 = vmul.f32 %v56, %v4049
    %v4054 = vmul.f32 %v61, %v4049
    %v4055 = vmul.f32 %v66, %v4049
    %v4056 = vmul.f32 %v71, %v4049
    %v4057 = vmul.f32 %v76, %v4049
    %v4058 = vmul.f32 %v81, %v4049
    %v4059 = vmul.f32 %v86, %v4049
    %v4060 = vmul.f32 %v91, %v4049
    %v4061 = vmul.f32 %v96, %v4049
    %v4062 = vmul.f32 %v101, %v4049
    %v4063 = vmul.f32 %v106, %v4049
    %v4064 = vmul.f32 %v111, %v4049
    %v4065 = vmul.f32 %v116, %v4049
    %v4066 = vadd.f32 %v3967, %v4050
    %v4067 = vadd.f32 %v3972, %v4051
    %v4068 = vadd.f32 %v3977, %v4052
    %v4069 = vadd.f32 %v3982, %v4053
    %v4070 = vadd.f32 %v3987, %v4054
    %v4071 = vadd.f32 %v3992, %v4055
    %v4072 = vadd.f32 %v3997, %v4056
    %v4073 = vadd.f32 %v4002, %v4057
    %v4074 = vadd.f32 %v4007, %v4058
    %v4075 = vadd.f32 %v4012, %v4059
    %v4076 = vadd.f32 %v4017, %v4060
    %v4077 = vadd.f32 %v4022, %v4061
    %v4078 = vadd.f32 %v4027, %v4062
    %v4079 = vadd.f32 %v4032, %v4063
    %v4080 = vadd.f32 %v4037, %v4064
    %v4081 = vadd.f32 %v4042, %v4065
    %v4082 = vld [vmem:[%s4 + $0x1] sm:$0x1]
    %v4083 = vlaneseq
    %v4084 = vshrl.u32 %v4083, 7
    %v4085 = vsub.s32 0, %v4084
    %v4086 = vrot.slane %v4082, %v4085
    %v4087 = vmul.f32 %v141, %v4086
    %v4088 = vmul.f32 %v145, %v4086
    %v4089 = vmul.f32 %v149, %v4086
    %v4090 = vmul.f32 %v153, %v4086
    %v4091 = vmul.f32 %v157, %v4086
    %v4092 = vmul.f32 %v161, %v4086
    %v4093 = vmul.f32 %v165, %v4086
    %v4094 = vmul.f32 %v169, %v4086
    %v4095 = vmul.f32 %v173, %v4086
    %v4096 = vmul.f32 %v177, %v4086
    %v4097 = vmul.f32 %v181, %v4086
    %v4098 = vmul.f32 %v185, %v4086
    %v4099 = vmul.f32 %v189, %v4086
    %v4100 = vmul.f32 %v193, %v4086
    %v4101 = vmul.f32 %v197, %v4086
    %v4102 = vmul.f32 %v201, %v4086
    %v4103 = vadd.f32 %v4066, %v4087
    %v4104 = vadd.f32 %v4067, %v4088
    %v4105 = vadd.f32 %v4068, %v4089
    %v4106 = vadd.f32 %v4069, %v4090
    %v4107 = vadd.f32 %v4070, %v4091
    %v4108 = vadd.f32 %v4071, %v4092
    %v4109 = vadd.f32 %v4072, %v4093
    %v4110 = vadd.f32 %v4073, %v4094
    %v4111 = vadd.f32 %v4074, %v4095
    %v4112 = vadd.f32 %v4075, %v4096
    %v4113 = vadd.f32 %v4076, %v4097
    %v4114 = vadd.f32 %v4077, %v4098
    %v4115 = vadd.f32 %v4078, %v4099
    %v4116 = vadd.f32 %v4079, %v4100
    %v4117 = vadd.f32 %v4080, %v4101
    %v4118 = vadd.f32 %v4081, %v4102
    %v4119 = vld [vmem:[%s4 + $0x2] sm:$0x1]
    %v4120 = vlaneseq
    %v4121 = vshrl.u32 %v4120, 7
    %v4122 = vsub.s32 0, %v4121
    %v4123 = vrot.slane %v4119, %v4122
    %v4124 = vmul.f32 %v242, %v4123
    %v4125 = vmul.f32 %v246, %v4123
    %v4126 = vmul.f32 %v250, %v4123
    %v4127 = vmul.f32 %v254, %v4123
    %v4128 = vmul.f32 %v258, %v4123
    %v4129 = vmul.f32 %v262, %v4123
    %v4130 = vmul.f32 %v266, %v4123
    %v4131 = vmul.f32 %v270, %v4123
    %v4132 = vmul.f32 %v274, %v4123
    %v4133 = vmul.f32 %v278, %v4123
    %v4134 = vmul.f32 %v282, %v4123
    %v4135 = vmul.f32 %v286, %v4123
    %v4136 = vmul.f32 %v290, %v4123
    %v4137 = vmul.f32 %v294, %v4123
    %v4138 = vmul.f32 %v298, %v4123
    %v4139 = vmul.f32 %v302, %v4123
    %v4140 = vadd.f32 %v4103, %v4124
    %v4141 = vadd.f32 %v4104, %v4125
    %v4142 = vadd.f32 %v4105, %v4126
    %v4143 = vadd.f32 %v4106, %v4127
    %v4144 = vadd.f32 %v4107, %v4128
    %v4145 = vadd.f32 %v4108, %v4129
    %v4146 = vadd.f32 %v4109, %v4130
    %v4147 = vadd.f32 %v4110, %v4131
    %v4148 = vadd.f32 %v4111, %v4132
    %v4149 = vadd.f32 %v4112, %v4133
    %v4150 = vadd.f32 %v4113, %v4134
    %v4151 = vadd.f32 %v4114, %v4135
    %v4152 = vadd.f32 %v4115, %v4136
    %v4153 = vadd.f32 %v4116, %v4137
    %v4154 = vadd.f32 %v4117, %v4138
    %v4155 = vadd.f32 %v4118, %v4139
    %v4156 = vld [vmem:[%s4 + $0x3] sm:$0x1]
    %v4157 = vlaneseq
    %v4158 = vshrl.u32 %v4157, 7
    %v4159 = vsub.s32 0, %v4158
    %v4160 = vrot.slane %v4156, %v4159
    %v4161 = vadd.f32 %v4140, %v4160
    %v4162 = vadd.f32 %v4141, %v4160
    %v4163 = vadd.f32 %v4142, %v4160
    %v4164 = vadd.f32 %v4143, %v4160
    %v4165 = vadd.f32 %v4144, %v4160
    %v4166 = vadd.f32 %v4145, %v4160
    %v4167 = vadd.f32 %v4146, %v4160
    %v4168 = vadd.f32 %v4147, %v4160
    %v4169 = vadd.f32 %v4148, %v4160
    %v4170 = vadd.f32 %v4149, %v4160
    %v4171 = vadd.f32 %v4150, %v4160
    %v4172 = vadd.f32 %v4151, %v4160
    %v4173 = vadd.f32 %v4152, %v4160
    %v4174 = vadd.f32 %v4153, %v4160
    %v4175 = vadd.f32 %v4154, %v4160
    %v4176 = vadd.f32 %v4155, %v4160
    %4177 = vst [vmem:[#allocation2] sm:$0xff] %v4161
    %4178 = vst [vmem:[#allocation2 + $0x8] sm:$0xff] %v4162
    %4179 = vst [vmem:[#allocation2 + $0x10] sm:$0xff] %v4163
    %4180 = vst [vmem:[#allocation2 + $0x18] sm:$0xff] %v4164
    %4181 = vst [vmem:[#allocation2 + $0x20] sm:$0xff] %v4165
    %4182 = vst [vmem:[#allocation2 + $0x28] sm:$0xff] %v4166
    %4183 = vst [vmem:[#allocation2 + $0x30] sm:$0xff] %v4167
    %4184 = vst [vmem:[#allocation2 + $0x38] sm:$0xff] %v4168
    %4185 = vst [vmem:[#allocation2 + $0x40] sm:$0xff] %v4169
    %4186 = vst [vmem:[#allocation2 + $0x48] sm:$0xff] %v4170
    %4187 = vst [vmem:[#allocation2 + $0x50] sm:$0xff] %v4171
    %4188 = vst [vmem:[#allocation2 + $0x58] sm:$0xff] %v4172
    %4189 = vst [vmem:[#allocation2 + $0x60] sm:$0xff] %v4173
    %4190 = vst [vmem:[#allocation2 + $0x68] sm:$0xff] %v4174
    %4191 = vst [vmem:[#allocation2 + $0x70] sm:$0xff] %v4175
    %4192 = vst [vmem:[#allocation2 + $0x78] sm:$0xff] %v4176
    // Predicated region
    $region22: #{point_embed_forward.1} parent=1 // pred_check
      _
    $region23: #{point_embed_forward.1} parent=1 // pred_check_branch
      %4194 = sbr.rel (0) target = $region25
    $region24: #{point_embed_forward.1} parent=1 // pred_region
      %s4196 = ssub.s32 2048, 2048
      %4197 = vsyncadd [#allocation3], %s4196
      %s4198 = sshll.u32 [#allocation2], 4
      %s4199 = int_to_ptr.vmem [resolvable:$true] %s4198
      %4204 = dma.vmem_to_hbm [thread:$0]  %s4199, 2048, %s5, [#allocation3], 128, 128, 8
    $region25: #{point_embed_forward.1} parent=1 // pred_fallthru
      _
    // Predicated region
    $region26: #{point_embed_forward.1} parent=1 // pred_check
      _
    $region27: #{point_embed_forward.1} parent=1 // pred_check_branch
      %4206 = sbr.rel (0) target = $region29
    $region28: #{point_embed_forward.1} parent=1 // pred_region
      %4207 = dma.done [#allocation3], 2048
    $region29: #{point_embed_forward.1} parent=1 // pred_fallthru
      _
    %4208 = vsyncpa [#allocation3], 1

</llo_original>
